<compile_context>
chip_gen: v6e
topology: v6e:2x2x1
jax: 0.10.0
libtpu: 0.0.40
codegen_flags: <defaults>
</compile_context>

<pallas_src>
import functools

import jax
import jax.numpy as jnp
from jax.experimental import pallas as pl
from jax.experimental.pallas import tpu as pltpu

BN_EPS = 1e-5
LANE = 128
MAX_TILE_ROWS = 1024          # target rows of the flat layout per grid step


def _round_up(x, m):
    return (x + m - 1) // m * m


def _vmem_limit_bytes():
    try:
        cap = getattr(pltpu.get_tpu_info(), "vmem_capacity_bytes", None)
        if cap:
            return int(cap * 0.8)          # ~51 MiB on v7x, ~102 MiB on v5e/v6e
    except Exception:
        pass
    return 48 * 1024 * 1024                # safe on every generation


def _pick_bs(b, slice_rows):
    """Largest divisor of b such that bs*slice_rows stays near MAX_TILE_ROWS."""
    target = max(1, MAX_TILE_ROWS // slice_rows)
    for cand in range(min(b, target), 0, -1):
        if b % cand == 0:
            return cand
    return 1


# ---------------------------------------------------------------------------
# Kernels
# ---------------------------------------------------------------------------
def _conv_kernel(x_ref, w_ref, b_ref, sc_ref, sh_ref, mask_ref, *rest,
                 shifts, halo, trc, inv_cnt, pre_affine, post_relu, emit_stats):
    """One conv layer over one row tile of the flat (rows, channels) layout.

    x_ref    : (TR, Kin)  bf16   layer input (tap-packed im2col or channel layout)
    w_ref    : (T, Kin, C) bf16  per-tap weights (T == len(shifts))
    b_ref    : (1, C) f32        conv bias
    sc_ref   : (1, C) f32        folded BN scale of the *input* (pre_affine only)
    sh_ref   : (1, C) f32        folded BN shift of the *input* (pre_affine only)
    mask_ref : (TR, 1) f32       1.0 on valid output rows, 0.0 on halo / spatial padding
    rest     : y_ref (TR, C), [stats_ref (8, C) f32], [act scratch (TR, Kin) bf16]
    """
    idx = 0
    y_ref = rest[idx]; idx += 1
    stats_ref = None
    if emit_stats:
        stats_ref = rest[idx]; idx += 1
    a_ref = rest[idx] if pre_affine else x_ref

    cpad = y_ref.shape[1]
    mask_full = mask_ref[...]                                  # (TR, 1), hoisted once
    maskb_full = mask_full > 0.0
    maskb = maskb_full[halo:halo + trc, :]                     # valid-output-row mask

    if pre_affine:
        # BN(scale/shift) + ReLU + zero padding rows of the previous layer's raw output,
        # once for the whole tile; the tap slices below then read the bf16 scratch.
        xf = x_ref[...].astype(jnp.float32)
        af = jnp.maximum(xf * sc_ref[...] + sh_ref[...], 0.0)
        a_ref[...] = jnp.where(maskb_full, af, 0.0).astype(a_ref.dtype)

    # 3x3 conv as shifted matmuls; uninterrupted accumulation chain (MRB friendly).
    acc = jnp.zeros((trc, cpad), jnp.float32)
    for t, s in enumerate(shifts):
        xs = a_ref[pl.ds(halo + s, trc), :]
        acc += jnp.dot(xs, w_ref[t], preferred_element_type=jnp.float32)
    acc = acc + b_ref[...]

    if emit_stats:
        # Per-tile partials for batch-norm stats: sum, and sum of squared deviations
        # from the tile mean (Chan combination happens in the wrapper).
        am = jnp.where(maskb, acc, 0.0)
        s1 = jnp.sum(am, axis=0, keepdims=True)                # (1, C)
        mu = s1 * inv_cnt
        dev = jnp.where(maskb, acc - mu, 0.0)
        q = jnp.sum(dev * dev, axis=0, keepdims=True)          # (1, C)
        stats_ref[...] = jnp.concatenate(
            [s1, q, jnp.zeros((6, cpad), jnp.float32)], axis=0)

    if post_relu:
        acc = jnp.where(maskb, jnp.maximum(acc, 0.0), 0.0)

    # Only the tile-edge halo rows need explicit zeroing; everything else is written.
    y_ref[pl.ds(0, halo), :] = jnp.zeros((halo, cpad), y_ref.dtype)
    y_ref[pl.ds(halo + trc, halo), :] = jnp.zeros((halo, cpad), y_ref.dtype)
    y_ref[pl.ds(halo, trc), :] = acc.astype(y_ref.dtype)


def _affine_relu_kernel(y_ref, sc_ref, sh_ref, o_ref):
    o_ref[...] = jnp.maximum(
        y_ref[...].astype(jnp.float32) * sc_ref[...] + sh_ref[...], 0.0)


# ---------------------------------------------------------------------------
# pallas_call wrappers
# ---------------------------------------------------------------------------
def _conv_call(x_flat, w, bias, scale, shift, mask, *, shifts, halo, tr, trc,
               n_tiles, cpad, out_dtype, pre_affine, post_relu, emit_stats,
               inv_cnt, vmem_limit):
    rows, kin = x_flat.shape
    kernel = functools.partial(
        _conv_kernel, shifts=tuple(shifts), halo=halo, trc=trc, inv_cnt=inv_cnt,
        pre_affine=pre_affine, post_relu=post_relu, emit_stats=emit_stats)

    in_specs = [
        pl.BlockSpec((tr, kin), lambda i: (i, 0)),
        pl.BlockSpec(w.shape, lambda i: (0, 0, 0)),
        pl.BlockSpec((1, cpad), lambda i: (0, 0)),
        pl.BlockSpec((1, cpad), lambda i: (0, 0)),
        pl.BlockSpec((1, cpad), lambda i: (0, 0)),
        pl.BlockSpec((tr, 1), lambda i: (i, 0)),
    ]
    out_shape = [jax.ShapeDtypeStruct((rows, cpad), out_dtype)]
    out_specs = [pl.BlockSpec((tr, cpad), lambda i: (i, 0))]
    if emit_stats:
        out_shape.append(jax.ShapeDtypeStruct((n_tiles * 8, cpad), jnp.float32))
        out_specs.append(pl.BlockSpec((8, cpad), lambda i: (i, 0)))
    scratch = [pltpu.VMEM((tr, kin), jnp.bfloat16)] if pre_affine else []

    out_bytes = 2 if out_dtype == jnp.bfloat16 else 4
    flops = 2 * trc * kin * cpad * len(shifts) * n_tiles
    bytes_acc = int(x_flat.size * 2 + rows * cpad * out_bytes + w.size * 2)

    return pl.pallas_call(
        kernel,
        grid=(n_tiles,),
        in_specs=in_specs,
        out_specs=tuple(out_specs) if emit_stats else out_specs[0],
        out_shape=tuple(out_shape) if emit_stats else out_shape[0],
        scratch_shapes=scratch,
        compiler_params=pltpu.CompilerParams(
            dimension_semantics=("parallel",),
            vmem_limit_bytes=vmem_limit),
        cost_estimate=pl.CostEstimate(flops=flops, transcendentals=0,
                                      bytes_accessed=bytes_acc),
    )(x_flat, w, bias, scale, shift, mask)


def _affine_relu_call(y_flat, scale, shift, *, tr, n_tiles, cpad, vmem_limit):
    rows = y_flat.shape[0]
    return pl.pallas_call(
        _affine_relu_kernel,
        grid=(n_tiles,),
        in_specs=[pl.BlockSpec((tr, cpad), lambda i: (i, 0)),
                  pl.BlockSpec((1, cpad), lambda i: (0, 0)),
                  pl.BlockSpec((1, cpad), lambda i: (0, 0))],
        out_specs=pl.BlockSpec((tr, cpad), lambda i: (i, 0)),
        out_shape=jax.ShapeDtypeStruct((rows, cpad), jnp.float32),
        compiler_params=pltpu.CompilerParams(
            dimension_semantics=("parallel",),
            vmem_limit_bytes=vmem_limit),
    )(y_flat, scale, shift)


def _bn_fold(stats, gamma_p, beta_p, *, cnt_tile, n_total, cpad):
    """Chan combination of per-tile (sum, centered-SS) partials -> folded scale/shift."""
    st = stats.reshape(-1, 8, cpad)
    s_t = st[:, 0, :]
    q_t = st[:, 1, :]
    mu_t = s_t / cnt_tile
    mean = jnp.sum(s_t, axis=0) / n_total
    var = (jnp.sum(q_t, axis=0)
           + cnt_tile * jnp.sum((mu_t - mean) ** 2, axis=0)) / n_total
    scale = gamma_p * jax.lax.rsqrt(var + BN_EPS)
    shift = beta_p - mean * scale
    return (scale.reshape(1, cpad).astype(jnp.float32),
            shift.reshape(1, cpad).astype(jnp.float32))


# ---------------------------------------------------------------------------
# Forward pass: layout plumbing (NCDHW <-> flat padded rows) + 2-3 pallas_calls
# ---------------------------------------------------------------------------
def unetconv3_forward(x, params, *, is_batchnorm=True):
    """x: (N, Cin, D, H, W), PyTorch layout.  Returns (N, Cout, D, H, W) f32."""
    n, cin, d, h, w = x.shape
    cout = params["w1"].shape[0]
    cpad = _round_up(max(cout, LANE), LANE)      # lane-dense output channels

    b = n * w                                    # k_W == 1, pad_W == 0 -> fold W into batch
    dp = d + 2
    hp8 = _round_up(h + 2, 8)                    # H padded so dy row shifts are 8-aligned
    s_rows = dp * hp8                            # rows of one (batch, W) slice
    halo = _round_up(hp8 + 1, 8)                 # in-slice halo covering the max tap shift
    slice_rows = s_rows + 2 * halo
    bs = _pick_bs(b, slice_rows)
    n_tiles = b // bs
    tr = bs * slice_rows
    trc = tr - 2 * halo
    rows = b * slice_rows
    cnt_tile = float(bs * d * h)
    vmem_limit = _vmem_limit_bytes()

    shifts9 = tuple((dy - 1) * hp8 + (dx - 1) for dy in range(3) for dx in range(3))

    def embed(a):                                # (b, s_rows, K) -> (rows, K)
        a = jnp.pad(a, ((0, 0), (halo, slice_rows - halo - s_rows), (0, 0)))
        return a.reshape(rows, a.shape[-1])

    xb = jnp.transpose(x, (0, 4, 2, 3, 1)).reshape(b, d, h, cin)         # (B, D, H, Cin)

    # validity mask: 1 only on real (non-padding, non-halo) output rows
    mask = jnp.pad(jnp.ones((b, d, h), jnp.float32),
                   ((0, 0), (1, 1), (1, hp8 - 1 - h)))
    mask = embed(mask.reshape(b, s_rows, 1))

    # ---- layer-1 input & weights ------------------------------------------------
    use_packed = 9 * cin <= 2 * LANE
    if use_packed:
        # Tap-packed im2col: K = 9*Cin -> layer 1 is ONE matmul per tile.
        k1 = _round_up(9 * cin, 16)
        xpp = jnp.pad(xb, ((0, 0), (2, 2), (2, hp8 - h), (0, 0)))
        cols = [xpp[:, dy:dy + dp, dx:dx + hp8, :]
                for dy in range(3) for dx in range(3)]
        im = jnp.concatenate(cols, axis=-1)                              # (B, dp, hp8, 9*Cin)
        im = jnp.pad(im, ((0, 0), (0, 0), (0, 0), (0, k1 - 9 * cin)))
        x1_flat = embed(im.reshape(b, s_rows, k1)).astype(jnp.bfloat16)
        w1m = jnp.transpose(params["w1"][..., 0], (2, 3, 1, 0)).reshape(9 * cin, cout)
        w1 = jnp.pad(w1m, ((0, k1 - 9 * cin), (0, cpad - cout)))
        w1 = w1.reshape(1, k1, cpad).astype(jnp.bfloat16)
        shifts1 = (0,)
    else:
        k1 = _round_up(cin, LANE)
        xg = jnp.pad(xb, ((0, 0), (1, 1), (1, hp8 - 1 - h), (0, k1 - cin)))
        x1_flat = embed(xg.reshape(b, s_rows, k1)).astype(jnp.bfloat16)
        w1m = jnp.transpose(params["w1"][..., 0], (2, 3, 1, 0)).reshape(9, cin, cout)
        w1 = jnp.pad(w1m, ((0, 0), (0, k1 - cin), (0, cpad - cout))).astype(jnp.bfloat16)
        shifts1 = shifts9

    w2m = jnp.transpose(params["w2"][..., 0], (2, 3, 1, 0)).reshape(9, cout, cout)
    w2 = jnp.pad(w2m, ((0, 0), (0, cpad - cout), (0, cpad - cout))).astype(jnp.bfloat16)

    def vec(v):
        return jnp.pad(v, (0, cpad - v.shape[0])).reshape(1, cpad).astype(jnp.float32)

    b1, b2 = vec(params["b1"]), vec(params["b2"])
    zeros_c = jnp.zeros((1, cpad), jnp.float32)
    ones_c = jnp.ones((1, cpad), jnp.float32)

    common = dict(halo=halo, tr=tr, trc=trc, n_tiles=n_tiles, cpad=cpad,
                  inv_cnt=1.0 / cnt_tile, vmem_limit=vmem_limit)

    if is_batchnorm:
        g1, g2 = vec(params["g1"]), vec(params["g2"])
        be1, be2 = vec(params["be1"]), vec(params["be2"])
        # pass 1: conv1 (+bias) -> raw y1 (bf16) + per-tile partial stats
        y1, st1 = _conv_call(x1_flat, w1, b1, ones_c, zeros_c, mask,
                             shifts=shifts1, out_dtype=jnp.bfloat16,
                             pre_affine=False, post_relu=False, emit_stats=True,
                             **common)
        sc1, sh1 = _bn_fold(st1, g1, be1, cnt_tile=cnt_tile,
                            n_total=float(b * d * h), cpad=cpad)
        # pass 2: BN1 + ReLU applied on the fly, conv2 (+bias) -> raw y2 + stats
        y2, st2 = _conv_call(y1, w2, b2, sc1, sh1, mask,
                             shifts=shifts9, out_dtype=jnp.bfloat16,
                             pre_affine=True, post_relu=False, emit_stats=True,
                             **common)
        sc2, sh2 = _bn_fold(st2, g2, be2, cnt_tile=cnt_tile,
                            n_total=float(b * d * h), cpad=cpad)
        # pass 3: BN2 + ReLU
        out_flat = _affine_relu_call(y2, sc2, sh2, tr=tr, n_tiles=n_tiles,
                                     cpad=cpad, vmem_limit=vmem_limit)
    else:
        a1 = _conv_call(x1_flat, w1, b1, ones_c, zeros_c, mask,
                        shifts=shifts1, out_dtype=jnp.bfloat16,
                        pre_affine=False, post_relu=True, emit_stats=False,
                        **common)
        out_flat = _conv_call(a1, w2, b2, ones_c, zeros_c, mask,
                              shifts=shifts9, out_dtype=jnp.float32,
                              pre_affine=False, post_relu=True, emit_stats=False,
                              **common)

    out = out_flat.reshape(b, slice_rows, cpad)[:, halo:halo + s_rows, :cout]
    out = out.reshape(b, dp, hp8, cout)[:, 1:1 + d, 1:1 + h, :]
    out = out.reshape(n, w, d, h, cout)
    return jnp.transpose(out, (0, 4, 2, 3, 1))                          # (N, Cout, D, H, W)


# ---------------------------------------------------------------------------
# Parameters (kaiming-style conv init, BN weight ~ N(1, 0.02), bias 0 — like init_weights)
# ---------------------------------------------------------------------------
def init_params(key, in_size, out_size):
    ks = jax.random.split(key, 6)
    w1 = jax.random.normal(ks[0], (out_size, in_size, 3, 3, 1), jnp.float32) \
        * (2.0 / (in_size * 9)) ** 0.5
    w2 = jax.random.normal(ks[1], (out_size, out_size, 3, 3, 1), jnp.float32) \
        * (2.0 / (out_size * 9)) ** 0.5
    b1 = jax.random.normal(ks[2], (out_size,), jnp.float32) * 0.05
    b2 = jax.random.normal(ks[3], (out_size,), jnp.float32) * 0.05
    g1 = 1.0 + 0.02 * jax.random.normal(ks[4], (out_size,), jnp.float32)
    g2 = 1.0 + 0.02 * jax.random.normal(ks[5], (out_size,), jnp.float32)
    be1 = jnp.zeros((out_size,), jnp.float32)
    be2 = jnp.zeros((out_size,), jnp.float32)
    return dict(w1=w1, b1=b1, g1=g1, be1=be1, w2=w2, b2=b2, g2=g2, be2=be2)


# ---------------------------------------------------------------------------
# Independent pure-JAX reference (f32) for verification
# ---------------------------------------------------------------------------
def _reference_forward(x, params, *, is_batchnorm=True):
    def conv(x5, wt, bias):
        y = jax.lax.conv_general_dilated(
            x5, wt, window_strides=(1, 1, 1),
            padding=((1, 1), (1, 1), (0, 0)),
            dimension_numbers=("NCDHW", "OIDHW", "NCDHW"))
        return y + bias.reshape(1, -1, 1, 1, 1)

    def bn_relu(y, g, be):
        if is_batchnorm:
            mean = jnp.mean(y, axis=(0, 2, 3, 4), keepdims=True)
            var = jnp.mean((y - mean) ** 2, axis=(0, 2, 3, 4), keepdims=True)
            y = (y - mean) * jax.lax.rsqrt(var + BN_EPS) * g.reshape(1, -1, 1, 1, 1) \
                + be.reshape(1, -1, 1, 1, 1)
        return jnp.maximum(y, 0.0)

    y = bn_relu(conv(x, params["w1"], params["b1"]), params["g1"], params["be1"])
    y = bn_relu(conv(y, params["w2"], params["b2"]), params["g2"], params["be2"])
    return y


if __name__ == "__main__":
    key = jax.random.PRNGKey(0)
    k_x, k_p = jax.random.split(key)

    in_size, out_size = 4, 32
    n, d, h, w = 2, 8, 8, 4                                  # small NCDHW volume
    x = jax.random.normal(k_x, (n, in_size, d, h, w), jnp.float32)
    params = init_params(k_p, in_size, out_size)

    out = jax.block_until_ready(unetconv3_forward(x, params, is_batchnorm=True))
    assert out.shape == (n, out_size, d, h, w), out.shape
    assert bool(jnp.all(jnp.isfinite(out)))

    ref = _reference_forward(x, params, is_batchnorm=True)
    assert bool(jnp.allclose(out, ref, atol=0.1, rtol=0.1)), \
        float(jnp.max(jnp.abs(out - ref)))

    out_nb = jax.block_until_ready(unetconv3_forward(x, params, is_batchnorm=False))
    ref_nb = _reference_forward(x, params, is_batchnorm=False)
    assert bool(jnp.allclose(out_nb, ref_nb, atol=0.1, rtol=0.1)), \
        float(jnp.max(jnp.abs(out_nb - ref_nb)))

    print("KERNEL_OK")
</pallas_src>

<mosaic_0001>
module attributes {stable_mosaic.version = 11 : i64} {
  func.func @_conv_kernel(%arg0: i32, %arg1: memref<832x48xbf16, #tpu.memory_space<vmem>>, %arg2: memref<1x48x128xbf16, #tpu.memory_space<vmem>>, %arg3: memref<1x128xf32, #tpu.memory_space<vmem>>, %arg4: memref<1x128xf32, #tpu.memory_space<vmem>>, %arg5: memref<1x128xf32, #tpu.memory_space<vmem>>, %arg6: memref<832x1xf32, #tpu.memory_space<vmem>>, %arg7: memref<832x128xbf16, #tpu.memory_space<vmem>>, %arg8: memref<8x128xf32, #tpu.memory_space<vmem>>) attributes {dimension_semantics = [#tpu.dimension_semantics<parallel>], iteration_bounds = array<i64: 2>, scalar_prefetch = 0 : i64, scratch_operands = 0 : i64, tpu.core_type = #tpu.core_type<tc>, window_params = [{transform_indices = @transform_0, window_bounds = array<i64: 832, 48>}, {pipeline_mode = #tpu.pipeline_mode<synchronous>, transform_indices = @transform_1, window_bounds = array<i64: 1, 48, 128>}, {pipeline_mode = #tpu.pipeline_mode<synchronous>, transform_indices = @transform_2, window_bounds = array<i64: 1, 128>}, {pipeline_mode = #tpu.pipeline_mode<synchronous>, transform_indices = @transform_3, window_bounds = array<i64: 1, 128>}, {pipeline_mode = #tpu.pipeline_mode<synchronous>, transform_indices = @transform_4, window_bounds = array<i64: 1, 128>}, {transform_indices = @transform_5, window_bounds = array<i64: 832, 1>}, {transform_indices = @transform_6, window_bounds = array<i64: 832, 128>}, {transform_indices = @transform_7, window_bounds = array<i64: 8, 128>}]} {
    %c0 = arith.constant 0 : index
    %c0_0 = arith.constant 0 : index
    %0 = vector.load %arg6[%c0, %c0_0] : memref<832x1xf32, #tpu.memory_space<vmem>>, vector<832x1xf32>
    %cst = arith.constant 0.000000e+00 : f32
    %1 = vector.broadcast %cst : f32 to vector<832x1xf32>
    %2 = arith.cmpf ogt, %0, %1 : vector<832x1xf32>
    %3 = vector.extract_strided_slice %2 {offsets = [24, 0], sizes = [784, 1], strides = [1, 1]} : vector<832x1xi1> to vector<784x1xi1>
    %cst_1 = arith.constant 0.000000e+00 : f32
    %4 = vector.broadcast %cst_1 : f32 to vector<784x128xf32>
    %c24 = arith.constant 24 : index
    %c0_2 = arith.constant 0 : index
    %5 = vector.load %arg1[%c24, %c0_2] : memref<832x48xbf16, #tpu.memory_space<vmem>>, vector<784x48xbf16>
    %c0_3 = arith.constant 0 : index
    %c0_4 = arith.constant 0 : index
    %c0_5 = arith.constant 0 : index
    %6 = vector.load %arg2[%c0_3, %c0_4, %c0_5] : memref<1x48x128xbf16, #tpu.memory_space<vmem>>, vector<1x48x128xbf16>
    %7 = vector.shape_cast %6 : vector<1x48x128xbf16> to vector<48x128xbf16>
    %cst_6 = arith.constant dense<0.000000e+00> : vector<784x128xf32>
    %8 = tpu.matmul %5, %7, %cst_6 {dimension_numbers = #tpu.dot_dimension_numbers<[1], [0], [0], [1], [0, 0, 1, 1], [], []>} : vector<784x48xbf16>, vector<48x128xbf16>, vector<784x128xf32> -> vector<784x128xf32>
    %9 = arith.addf %4, %8 : vector<784x128xf32>
    %c0_7 = arith.constant 0 : index
    %c0_8 = arith.constant 0 : index
    %10 = vector.load %arg3[%c0_7, %c0_8] : memref<1x128xf32, #tpu.memory_space<vmem>>, vector<1x128xf32>
    %11 = vector.broadcast %10 : vector<1x128xf32> to vector<784x128xf32>
    %12 = arith.addf %9, %11 : vector<784x128xf32>
    %cst_9 = arith.constant 0.000000e+00 : f32
    %13 = vector.shape_cast %3 : vector<784x1xi1> to vector<784x1xi1>
    %14 = vector.broadcast %13 : vector<784x1xi1> to vector<784x128xi1>
    %15 = vector.broadcast %cst_9 : f32 to vector<784x128xf32>
    %16 = arith.select %14, %12, %15 : vector<784x128xi1>, vector<784x128xf32>
    %cst_10 = arith.constant dense<0.000000e+00> : vector<128xf32>
    %17 = vector.multi_reduction <add>, %16, %cst_10 [0] : vector<784x128xf32> to vector<128xf32>
    %18 = vector.shape_cast %17 : vector<128xf32> to vector<1x128xf32>
    %cst_11 = arith.constant 3.906250e-03 : f32
    %19 = vector.broadcast %cst_11 : f32 to vector<1x128xf32>
    %20 = arith.mulf %18, %19 : vector<1x128xf32>
    %21 = vector.broadcast %20 : vector<1x128xf32> to vector<784x128xf32>
    %22 = arith.subf %12, %21 : vector<784x128xf32>
    %cst_12 = arith.constant 0.000000e+00 : f32
    %23 = vector.shape_cast %3 : vector<784x1xi1> to vector<784x1xi1>
    %24 = vector.broadcast %23 : vector<784x1xi1> to vector<784x128xi1>
    %25 = vector.broadcast %cst_12 : f32 to vector<784x128xf32>
    %26 = arith.select %24, %22, %25 : vector<784x128xi1>, vector<784x128xf32>
    %27 = arith.mulf %26, %26 : vector<784x128xf32>
    %cst_13 = arith.constant dense<0.000000e+00> : vector<128xf32>
    %28 = vector.multi_reduction <add>, %27, %cst_13 [0] : vector<784x128xf32> to vector<128xf32>
    %29 = vector.shape_cast %28 : vector<128xf32> to vector<1x128xf32>
    %cst_14 = arith.constant 0.000000e+00 : f32
    %30 = vector.broadcast %cst_14 : f32 to vector<6x128xf32>
    %31 = tpu.concatenate %18, %29, %30 in 0 : vector<1x128xf32>, vector<1x128xf32>, vector<6x128xf32> -> vector<8x128xf32>
    %c0_15 = arith.constant 0 : index
    %c0_16 = arith.constant 0 : index
    %32 = vector.load %arg8[%c0_15, %c0_16] : memref<8x128xf32, #tpu.memory_space<vmem>>, vector<8x128xf32>
    tpu.vector_store %arg8[%c0_15, %c0_16], %31 {strides = array<i32>} : memref<8x128xf32, #tpu.memory_space<vmem>>, vector<8x128xf32>,
    %cst_17 = arith.constant 0.000000e+00 : bf16
    %33 = vector.broadcast %cst_17 : bf16 to vector<24x128xbf16>
    %c0_18 = arith.constant 0 : index
    %c0_19 = arith.constant 0 : index
    %34 = vector.load %arg7[%c0_18, %c0_19] : memref<832x128xbf16, #tpu.memory_space<vmem>>, vector<24x128xbf16>
    tpu.vector_store %arg7[%c0_18, %c0_19], %33 {strides = array<i32>} : memref<832x128xbf16, #tpu.memory_space<vmem>>, vector<24x128xbf16>,
    %cst_20 = arith.constant 0.000000e+00 : bf16
    %35 = vector.broadcast %cst_20 : bf16 to vector<24x128xbf16>
    %c808 = arith.constant 808 : index
    %c0_21 = arith.constant 0 : index
    %36 = vector.load %arg7[%c808, %c0_21] : memref<832x128xbf16, #tpu.memory_space<vmem>>, vector<24x128xbf16>
    tpu.vector_store %arg7[%c808, %c0_21], %35 {strides = array<i32>} : memref<832x128xbf16, #tpu.memory_space<vmem>>, vector<24x128xbf16>,
    %37 = arith.truncf %12 : vector<784x128xf32> to vector<784x128xbf16>
    %c24_22 = arith.constant 24 : index
    %c0_23 = arith.constant 0 : index
    %38 = vector.load %arg7[%c24_22, %c0_23] : memref<832x128xbf16, #tpu.memory_space<vmem>>, vector<784x128xbf16>
    tpu.vector_store %arg7[%c24_22, %c0_23], %37 {strides = array<i32>} : memref<832x128xbf16, #tpu.memory_space<vmem>>, vector<784x128xbf16>,
    return
  }
  func.func @transform_0(%arg0: i32) -> (i32, i32) {
    %c0_i32 = arith.constant 0 : i32
    %c0_i32_0 = arith.constant 0 : i32
    return %arg0, %c0_i32 : i32, i32
  }
  func.func @transform_1(%arg0: i32) -> (i32, i32, i32) {
    %c0_i32 = arith.constant 0 : i32
    %c0_i32_0 = arith.constant 0 : i32
    %c0_i32_1 = arith.constant 0 : i32
    %c0_i32_2 = arith.constant 0 : i32
    return %c0_i32, %c0_i32_0, %c0_i32_1 : i32, i32, i32
  }
  func.func @transform_2(%arg0: i32) -> (i32, i32) {
    %c0_i32 = arith.constant 0 : i32
    %c0_i32_0 = arith.constant 0 : i32
    %c0_i32_1 = arith.constant 0 : i32
    return %c0_i32, %c0_i32_0 : i32, i32
  }
  func.func @transform_3(%arg0: i32) -> (i32, i32) {
    %c0_i32 = arith.constant 0 : i32
    %c0_i32_0 = arith.constant 0 : i32
    %c0_i32_1 = arith.constant 0 : i32
    return %c0_i32, %c0_i32_0 : i32, i32
  }
  func.func @transform_4(%arg0: i32) -> (i32, i32) {
    %c0_i32 = arith.constant 0 : i32
    %c0_i32_0 = arith.constant 0 : i32
    %c0_i32_1 = arith.constant 0 : i32
    return %c0_i32, %c0_i32_0 : i32, i32
  }
  func.func @transform_5(%arg0: i32) -> (i32, i32) {
    %c0_i32 = arith.constant 0 : i32
    %c0_i32_0 = arith.constant 0 : i32
    return %arg0, %c0_i32 : i32, i32
  }
  func.func @transform_6(%arg0: i32) -> (i32, i32) {
    %c0_i32 = arith.constant 0 : i32
    %c0_i32_0 = arith.constant 0 : i32
    return %arg0, %c0_i32 : i32, i32
  }
  func.func @transform_7(%arg0: i32) -> (i32, i32) {
    %c0_i32 = arith.constant 0 : i32
    %c0_i32_0 = arith.constant 0 : i32
    return %arg0, %c0_i32 : i32, i32
  }
}

</mosaic_0001>

<llo_original>
// kernel: tpu_custom_call.1
$region0: #{tpu_custom_call.1}
  #allocation0 [shape = 'u32[]', space=smem, size = 0x4, offset = 0x4, fixed_abs, tag = 'smem constant byte address 0x4 - core index']
  #allocation1 [shape = 'u32[144,128]{1,0:T(1,128)}', space=vmem, size = 0x12000, scoped, tag = 'internal scratch']
  %s0 = inlined_call_operand.vmem [shape: bf16[1664,48], index: 0, kind: input, shape index: {}]
  %s1 = inlined_call_operand.vmem [shape: bf16[1,48,128], index: 1, kind: input, shape index: {}]
  %s2 = inlined_call_operand.vmem [shape: f32[1,128], index: 2, kind: input, shape index: {}]
  %s3 = inlined_call_operand.vmem [shape: f32[1,128], index: 3, kind: input, shape index: {}]
  %s4 = inlined_call_operand.vmem [shape: f32[1,128], index: 4, kind: input, shape index: {}]
  %s5 = inlined_call_operand.vmem [shape: f32[1664,1], index: 5, kind: input, shape index: {}]
  %s6 = inlined_call_operand.hbm [shape: bf16[1664,128], index: 6, kind: output, shape index: {0}]
  %s7 = inlined_call_operand.hbm [shape: f32[16,128], index: 7, kind: output, shape index: {1}]
  %8 = xla_tuple %s6, %s7
  %s9 = sld [smem:[#allocation0]]
  $region65: #{tpu_custom_call.1} parent=0
    _
  %s11 = ssub.s32 1, %s9
  %s12 = scalar_select 0, %s11, %s9
  $region1: #{tpu_custom_call.1} parent=0
    #allocation2 [shape = 'u8[425984]{0}', space=vmem, size = 0x68000, scoped, tag = 'output window, operand 0']
    #allocation3 [shape = 's32[2]{0}', space=sflag, size = 0x8, scoped, tag = 'scoped memory for tpu_custom_call.1']
    #allocation4 [shape = 'u8[8192]{0}', space=vmem, size = 0x2000, scoped, tag = 'output window, operand 1']
    #allocation5 [shape = 's32[2]{0}', space=sflag, size = 0x8, scoped, tag = 'scoped memory for tpu_custom_call.1']
    %13 = vsyncpa [#allocation3], 0
    %s14 = scalar_lea.sflag [#allocation3], 1
    %15 = vsyncpa %s14, 0
    %16 = vsyncpa [#allocation5], 0
    %s17 = scalar_lea.sflag [#allocation5], 1
    %18 = vsyncpa %s17, 0
    loop: start=0, step=1, limit=4
    $region2: #{tpu_custom_call.1} parent=1 // loop_pre_header
      _
    $region3: #{tpu_custom_call.1} parent=1 // loop_header
      %s20 = sphi 0, %s24
      %p21 = scmp.ge.s32.totalorder %s20, 4
      %s30 = sphi 0, %s32
      %s33 = sphi 0, %s30
      %s34 = sphi 0, %s33
      %s50 = sphi 0, %s34
      %s54 = sphi 0, %s54
      %s56 = sphi 0, %s54
      %s57 = sphi 0, %s56
      %s71 = sphi 0, %s57
      %s75 = sphi 0, %s75
      %s77 = sphi 0, %s75
      %s78 = sphi 0, %s77
      %s92 = sphi 0, %s78
      %s96 = sphi 0, %s96
      %s98 = sphi 0, %s96
      %s99 = sphi 0, %s98
      %s113 = sphi 0, %s99
      %s117 = sphi 0, %s117
      %s119 = sphi 0, %s117
      %s120 = sphi 0, %s119
      %s134 = sphi 0, %s120
      %s140 = sphi 0, %s142
      %s143 = sphi 0, %s140
      %s144 = sphi 0, %s143
      %s160 = sphi 0, %s144
      %s166 = sphi 0, %s168
      %s169 = sphi 0, %s166
      %s170 = sphi 0, %s169
      %s186 = sphi 0, %s170
      %s192 = sphi 0, %s194
      %s195 = sphi 0, %s192
      %s196 = sphi 0, %s195
      %s212 = sphi 0, %s196
    $region4: #{tpu_custom_call.1} parent=1 // loop_header_branch
      %23 = sbr.rel (%p21) target = $region8
    $region5: #{tpu_custom_call.1} parent=1 // loop_body
      %s25 = ssub.s32 %s20, 1
      %s26 = ssub.s32 %s20, 2
      %s27 = sadd.s32 %s20, 1
      %s28 = ssub.s32 %s20, %s27
      %p29 = scmp.eq.s32.totalorder %s28, 0
      %s31 = sadd.s32 %s30, 1
      %s32 = scalar_select %p29, %s30, %s31
      %p35 = pneg %p29
      %p36 = scmp.eq.s32.totalorder %s20, 1
      %p37 = por %p35, %p36
      %p38 = scmp.ne.s32.totalorder %s30, %s33
      %p39 = scmp.eq.s32.totalorder %s20, 0
      %p40 = por %p38, %p39
      %p41 = scmp.ne.s32.totalorder %s30, %s33
      %p42 = scmp.eq.s32.totalorder %s25, 1
      %p43 = por %p41, %p42
      %p44 = scmp.ne.s32.totalorder %s33, %s34
      %p45 = scmp.eq.s32.totalorder %s25, 0
      %p46 = por %p44, %p45
      %p47 = scmp.ne.s32.totalorder %s33, %s34
      %p48 = scmp.eq.s32.totalorder %s26, 1
      %p49 = por %p47, %p48
      %p51 = scmp.ne.s32.totalorder %s34, %s50
      %p52 = scmp.eq.s32.totalorder %s26, 0
      %p53 = por %p51, %p52
      %s55 = sadd.s32 %s54, 1
      %p58 = scmp.eq.s32.totalorder %s20, 1
      %p59 = scmp.ne.s32.totalorder %s54, %s56
      %p60 = scmp.eq.s32.totalorder %s20, 0
      %p61 = por %p59, %p60
      %p62 = scmp.ne.s32.totalorder %s54, %s56
      %p63 = scmp.eq.s32.totalorder %s25, 1
      %p64 = por %p62, %p63
      %p65 = scmp.ne.s32.totalorder %s56, %s57
      %p66 = scmp.eq.s32.totalorder %s25, 0
      %p67 = por %p65, %p66
      %p68 = scmp.ne.s32.totalorder %s56, %s57
      %p69 = scmp.eq.s32.totalorder %s26, 1
      %p70 = por %p68, %p69
      %p72 = scmp.ne.s32.totalorder %s57, %s71
      %p73 = scmp.eq.s32.totalorder %s26, 0
      %p74 = por %p72, %p73
      %s76 = sadd.s32 %s75, 1
      %p79 = scmp.eq.s32.totalorder %s20, 1
      %p80 = scmp.ne.s32.totalorder %s75, %s77
      %p81 = scmp.eq.s32.totalorder %s20, 0
      %p82 = por %p80, %p81
      %p83 = scmp.ne.s32.totalorder %s75, %s77
      %p84 = scmp.eq.s32.totalorder %s25, 1
      %p85 = por %p83, %p84
      %p86 = scmp.ne.s32.totalorder %s77, %s78
      %p87 = scmp.eq.s32.totalorder %s25, 0
      %p88 = por %p86, %p87
      %p89 = scmp.ne.s32.totalorder %s77, %s78
      %p90 = scmp.eq.s32.totalorder %s26, 1
      %p91 = por %p89, %p90
      %p93 = scmp.ne.s32.totalorder %s78, %s92
      %p94 = scmp.eq.s32.totalorder %s26, 0
      %p95 = por %p93, %p94
      %s97 = sadd.s32 %s96, 1
      %p100 = scmp.eq.s32.totalorder %s20, 1
      %p101 = scmp.ne.s32.totalorder %s96, %s98
      %p102 = scmp.eq.s32.totalorder %s20, 0
      %p103 = por %p101, %p102
      %p104 = scmp.ne.s32.totalorder %s96, %s98
      %p105 = scmp.eq.s32.totalorder %s25, 1
      %p106 = por %p104, %p105
      %p107 = scmp.ne.s32.totalorder %s98, %s99
      %p108 = scmp.eq.s32.totalorder %s25, 0
      %p109 = por %p107, %p108
      %p110 = scmp.ne.s32.totalorder %s98, %s99
      %p111 = scmp.eq.s32.totalorder %s26, 1
      %p112 = por %p110, %p111
      %p114 = scmp.ne.s32.totalorder %s99, %s113
      %p115 = scmp.eq.s32.totalorder %s26, 0
      %p116 = por %p114, %p115
      %s118 = sadd.s32 %s117, 1
      %p121 = scmp.eq.s32.totalorder %s20, 1
      %p122 = scmp.ne.s32.totalorder %s117, %s119
      %p123 = scmp.eq.s32.totalorder %s20, 0
      %p124 = por %p122, %p123
      %p125 = scmp.ne.s32.totalorder %s117, %s119
      %p126 = scmp.eq.s32.totalorder %s25, 1
      %p127 = por %p125, %p126
      %p128 = scmp.ne.s32.totalorder %s119, %s120
      %p129 = scmp.eq.s32.totalorder %s25, 0
      %p130 = por %p128, %p129
      %p131 = scmp.ne.s32.totalorder %s119, %s120
      %p132 = scmp.eq.s32.totalorder %s26, 1
      %p133 = por %p131, %p132
      %p135 = scmp.ne.s32.totalorder %s120, %s134
      %p136 = scmp.eq.s32.totalorder %s26, 0
      %p137 = por %p135, %p136
      %s138 = ssub.s32 %s20, %s27
      %p139 = scmp.eq.s32.totalorder %s138, 0
      %s141 = sadd.s32 %s140, 1
      %s142 = scalar_select %p139, %s140, %s141
      %p145 = pneg %p139
      %p146 = scmp.eq.s32.totalorder %s20, 1
      %p147 = por %p145, %p146
      %p148 = scmp.ne.s32.totalorder %s140, %s143
      %p149 = scmp.eq.s32.totalorder %s20, 0
      %p150 = por %p148, %p149
      %p151 = scmp.ne.s32.totalorder %s140, %s143
      %p152 = scmp.eq.s32.totalorder %s25, 1
      %p153 = por %p151, %p152
      %p154 = scmp.ne.s32.totalorder %s143, %s144
      %p155 = scmp.eq.s32.totalorder %s25, 0
      %p156 = por %p154, %p155
      %p157 = scmp.ne.s32.totalorder %s143, %s144
      %p158 = scmp.eq.s32.totalorder %s26, 1
      %p159 = por %p157, %p158
      %p161 = scmp.ne.s32.totalorder %s144, %s160
      %p162 = scmp.eq.s32.totalorder %s26, 0
      %p163 = por %p161, %p162
      %s164 = ssub.s32 %s20, %s27
      %p165 = scmp.eq.s32.totalorder %s164, 0
      %s167 = sadd.s32 %s166, 1
      %s168 = scalar_select %p165, %s166, %s167
      %p171 = pneg %p165
      %p172 = scmp.eq.s32.totalorder %s20, 1
      %p173 = por %p171, %p172
      %p174 = scmp.ne.s32.totalorder %s166, %s169
      %p175 = scmp.eq.s32.totalorder %s20, 0
      %p176 = por %p174, %p175
      %p177 = scmp.ne.s32.totalorder %s166, %s169
      %p178 = scmp.eq.s32.totalorder %s25, 1
      %p179 = por %p177, %p178
      %p180 = scmp.ne.s32.totalorder %s169, %s170
      %p181 = scmp.eq.s32.totalorder %s25, 0
      %p182 = por %p180, %p181
      %p183 = scmp.ne.s32.totalorder %s169, %s170
      %p184 = scmp.eq.s32.totalorder %s26, 1
      %p185 = por %p183, %p184
      %p187 = scmp.ne.s32.totalorder %s170, %s186
      %p188 = scmp.eq.s32.totalorder %s26, 0
      %p189 = por %p187, %p188
      %s190 = ssub.s32 %s20, %s27
      %p191 = scmp.eq.s32.totalorder %s190, 0
      %s193 = sadd.s32 %s192, 1
      %s194 = scalar_select %p191, %s192, %s193
      %p197 = pneg %p191
      %p198 = scmp.eq.s32.totalorder %s20, 1
      %p199 = por %p197, %p198
      %p200 = scmp.ne.s32.totalorder %s192, %s195
      %p201 = scmp.eq.s32.totalorder %s20, 0
      %p202 = por %p200, %p201
      %p203 = scmp.ne.s32.totalorder %s192, %s195
      %p204 = scmp.eq.s32.totalorder %s25, 1
      %p205 = por %p203, %p204
      %p206 = scmp.ne.s32.totalorder %s195, %s196
      %p207 = scmp.eq.s32.totalorder %s25, 0
      %p208 = por %p206, %p207
      %p209 = scmp.ne.s32.totalorder %s195, %s196
      %p210 = scmp.eq.s32.totalorder %s26, 1
      %p211 = por %p209, %p210
      %p213 = scmp.ne.s32.totalorder %s196, %s212
      %p214 = scmp.eq.s32.totalorder %s26, 0
      %p215 = por %p213, %p214
      %p216 = scmp.le.s32.totalorder 1, %s20
      %p217 = scmp.lt.s32.totalorder %s20, 3
      %p218 = pnand %p216, %p217
      %p219 = pneg %p218
      // Predicated region
      $region9: #{tpu_custom_call.1} parent=5 // pred_check
        _
      $region10: #{tpu_custom_call.1} parent=5 // pred_check_branch
        %221 = sbr.rel (%p218) target = $region12
      $region11: #{tpu_custom_call.1} parent=5 // pred_region
        %s222 = ssub.s32 %s20, 1
        // Predicated region
        $region13: #{tpu_custom_call.1} parent=11 // pred_check
          %p223 = pneg %p67
        $region14: #{tpu_custom_call.1} parent=11 // pred_check_branch
          %225 = sbr.rel (%p223) target = $region16
        $region15: #{tpu_custom_call.1} parent=11 // pred_region
          _
        $region16: #{tpu_custom_call.1} parent=11 // pred_fallthru
          _
        // Predicated region
        $region17: #{tpu_custom_call.1} parent=11 // pred_check
          %p226 = pneg %p88
        $region18: #{tpu_custom_call.1} parent=11 // pred_check_branch
          %228 = sbr.rel (%p226) target = $region20
        $region19: #{tpu_custom_call.1} parent=11 // pred_region
          _
        $region20: #{tpu_custom_call.1} parent=11 // pred_fallthru
          _
        // Predicated region
        $region21: #{tpu_custom_call.1} parent=11 // pred_check
          %p229 = pneg %p109
        $region22: #{tpu_custom_call.1} parent=11 // pred_check_branch
          %231 = sbr.rel (%p229) target = $region24
        $region23: #{tpu_custom_call.1} parent=11 // pred_region
          _
        $region24: #{tpu_custom_call.1} parent=11 // pred_fallthru
          _
        // Predicated region
        $region25: #{tpu_custom_call.1} parent=11 // pred_check
          %p232 = pneg %p130
        $region26: #{tpu_custom_call.1} parent=11 // pred_check_branch
          %234 = sbr.rel (%p232) target = $region28
        $region27: #{tpu_custom_call.1} parent=11 // pred_region
          _
        $region28: #{tpu_custom_call.1} parent=11 // pred_fallthru
          _
      $region12: #{tpu_custom_call.1} parent=5 // pred_fallthru
        _
      %p235 = scmp.lt.s32.totalorder %s20, 2
      // Predicated region
      $region29: #{tpu_custom_call.1} parent=5 // pred_check
        %p236 = pneg %p235
      $region30: #{tpu_custom_call.1} parent=5 // pred_check_branch
        %238 = sbr.rel (%p236) target = $region32
      $region31: #{tpu_custom_call.1} parent=5 // pred_region
        // Predicated region
        $region33: #{tpu_custom_call.1} parent=31 // pred_check
          %p239 = pneg %p40
        $region34: #{tpu_custom_call.1} parent=31 // pred_check_branch
          %241 = sbr.rel (%p239) target = $region36
        $region35: #{tpu_custom_call.1} parent=31 // pred_region
          %s242 = smul.u32 104, %s20
          %p243 = scmp.lt.s32.totalorder %s242, 207
          %s244 = scalar_select %p243, %s242, 207
          %s245 = smul.addr %s244, 4
          %s246 = scalar_lea.vmem %s0, %s245
          %s247 = smul.u32 104, %s20
        $region36: #{tpu_custom_call.1} parent=31 // pred_fallthru
          _
        // Predicated region
        $region37: #{tpu_custom_call.1} parent=31 // pred_check
          %p248 = pneg %p150
        $region38: #{tpu_custom_call.1} parent=31 // pred_check_branch
          %250 = sbr.rel (%p248) target = $region40
        $region39: #{tpu_custom_call.1} parent=31 // pred_region
          %s251 = smul.u32 104, %s20
          %p252 = scmp.lt.s32.totalorder %s251, 207
          %s253 = scalar_select %p252, %s251, 207
          %s254 = smul.addr %s253, 8
          %s255 = scalar_lea.vmem %s5, %s254
          %s256 = smul.u32 104, %s20
        $region40: #{tpu_custom_call.1} parent=31 // pred_fallthru
          _
      $region32: #{tpu_custom_call.1} parent=5 // pred_fallthru
        _
      %p257 = scmp.le.s32.totalorder 1, %s20
      %p258 = scmp.lt.s32.totalorder %s20, 3
      %p259 = pnand %p257, %p258
      %p260 = pneg %p259
      // Predicated region
      $region41: #{tpu_custom_call.1} parent=5 // pred_check
        _
      $region42: #{tpu_custom_call.1} parent=5 // pred_check_branch
        %262 = sbr.rel (%p259) target = $region44
      $region43: #{tpu_custom_call.1} parent=5 // pred_region
        %s263 = ssub.s32 %s20, 1
        %s264 = smul.u32 104, %s25
        %p265 = scmp.lt.s32.totalorder %s264, 207
        %s266 = scalar_select %p265, %s264, 207
        %s267 = smul.addr %s266, 4
        %s268 = scalar_lea.vmem %s0, %s267
        %p269 = pneg %p46
        %p270 = pneg %p43
        %p271 = pneg %p67
        %p272 = pneg %p64
        %p273 = pneg %p88
        %p274 = pneg %p85
        %p275 = pneg %p109
        %p276 = pneg %p106
        %p277 = pneg %p130
        %p278 = pneg %p127
        %s279 = smul.u32 104, %s25
        %p280 = scmp.lt.s32.totalorder %s279, 207
        %s281 = scalar_select %p280, %s279, 207
        %s282 = smul.addr %s281, 8
        %s283 = scalar_lea.vmem %s5, %s282
        %p284 = pneg %p156
        %p285 = pneg %p153
        %p286 = pneg %p182
        %p287 = pneg %p179
        %s288 = sand.u32 %s169, 1
        %s289 = scalar_lea.sflag [#allocation3], %s288
        %s290 = sand.u32 %s169, 1
        %s291 = smul.addr %s290, 416
        %s292 = scalar_lea.vmem [#allocation2], %s291
        %p293 = pneg %p208
        %p294 = pneg %p205
        %s295 = sand.u32 %s195, 1
        %s296 = scalar_lea.sflag [#allocation5], %s295
        %s297 = sand.u32 %s195, 1
        %s298 = smul.addr %s297, 8
        %s299 = scalar_lea.vmem [#allocation4], %s298
        %s300 = smul.u32 104, %s25
        %p301 = scmp.lt.s32.totalorder %s300, 207
        %s302 = scalar_select %p301, %s300, 207
        %s303 = smul.addr %s302, 4
        %s304 = scalar_lea.vmem %s0, %s303
        %s305 = smul.u32 104, %s25
        %s306 = smul.u32 104, %s25
        %p307 = scmp.lt.s32.totalorder %s306, 207
        %s308 = scalar_select %p307, %s306, 207
        %s309 = smul.addr %s308, 8
        %s310 = scalar_lea.vmem %s5, %s309
        %s311 = smul.u32 104, %s25
        %s312 = smul.u32 104, %s25
        %v314 = vld [vmem:[%s310 + $0x18] sm:$0xff]
        %v315 = vld [vmem:[%s310 + $0x20] sm:$0xff]
        %v316 = vld [vmem:[%s310 + $0x28] sm:$0xff]
        %v317 = vld [vmem:[%s310 + $0x30] sm:$0xff]
        %v318 = vld [vmem:[%s310 + $0x38] sm:$0xff]
        %v319 = vld [vmem:[%s310 + $0x40] sm:$0xff]
        %v320 = vld [vmem:[%s310 + $0x48] sm:$0xff]
        %v321 = vld [vmem:[%s310 + $0x50] sm:$0xff]
        %v322 = vld [vmem:[%s310 + $0x58] sm:$0xff]
        %v323 = vld [vmem:[%s310 + $0x60] sm:$0xff]
        %v324 = vld [vmem:[%s310 + $0x68] sm:$0xff]
        %v325 = vld [vmem:[%s310 + $0x70] sm:$0xff]
        %v326 = vld [vmem:[%s310 + $0x78] sm:$0xff]
        %v327 = vld [vmem:[%s310 + $0x80] sm:$0xff]
        %v328 = vld [vmem:[%s310 + $0x88] sm:$0xff]
        %v329 = vld [vmem:[%s310 + $0x90] sm:$0xff]
        %v330 = vld [vmem:[%s310 + $0x98] sm:$0xff]
        %v331 = vld [vmem:[%s310 + $0xa0] sm:$0xff]
        %v332 = vld [vmem:[%s310 + $0xa8] sm:$0xff]
        %v333 = vld [vmem:[%s310 + $0xb0] sm:$0xff]
        %v334 = vld [vmem:[%s310 + $0xb8] sm:$0xff]
        %v335 = vld [vmem:[%s310 + $0xc0] sm:$0xff]
        %v336 = vld [vmem:[%s310 + $0xc8] sm:$0xff]
        %v337 = vld [vmem:[%s310 + $0xd0] sm:$0xff]
        %v338 = vld [vmem:[%s310 + $0xd8] sm:$0xff]
        %v339 = vld [vmem:[%s310 + $0xe0] sm:$0xff]
        %v340 = vld [vmem:[%s310 + $0xe8] sm:$0xff]
        %v341 = vld [vmem:[%s310 + $0xf0] sm:$0xff]
        %v342 = vld [vmem:[%s310 + $0xf8] sm:$0xff]
        %v343 = vld [vmem:[%s310 + $0x100] sm:$0xff]
        %v344 = vld [vmem:[%s310 + $0x108] sm:$0xff]
        %v345 = vld [vmem:[%s310 + $0x110] sm:$0xff]
        %v346 = vld [vmem:[%s310 + $0x118] sm:$0xff]
        %v347 = vld [vmem:[%s310 + $0x120] sm:$0xff]
        %v348 = vld [vmem:[%s310 + $0x128] sm:$0xff]
        %v349 = vld [vmem:[%s310 + $0x130] sm:$0xff]
        %v350 = vld [vmem:[%s310 + $0x138] sm:$0xff]
        %v351 = vld [vmem:[%s310 + $0x140] sm:$0xff]
        %v352 = vld [vmem:[%s310 + $0x148] sm:$0xff]
        %v353 = vld [vmem:[%s310 + $0x150] sm:$0xff]
        %v354 = vld [vmem:[%s310 + $0x158] sm:$0xff]
        %v355 = vld [vmem:[%s310 + $0x160] sm:$0xff]
        %v356 = vld [vmem:[%s310 + $0x168] sm:$0xff]
        %v357 = vld [vmem:[%s310 + $0x170] sm:$0xff]
        %v358 = vld [vmem:[%s310 + $0x178] sm:$0xff]
        %v359 = vld [vmem:[%s310 + $0x180] sm:$0xff]
        %v360 = vld [vmem:[%s310 + $0x188] sm:$0xff]
        %v361 = vld [vmem:[%s310 + $0x190] sm:$0xff]
        %v362 = vld [vmem:[%s310 + $0x198] sm:$0xff]
        %v363 = vld [vmem:[%s310 + $0x1a0] sm:$0xff]
        %v364 = vld [vmem:[%s310 + $0x1a8] sm:$0xff]
        %v365 = vld [vmem:[%s310 + $0x1b0] sm:$0xff]
        %v366 = vld [vmem:[%s310 + $0x1b8] sm:$0xff]
        %v367 = vld [vmem:[%s310 + $0x1c0] sm:$0xff]
        %v368 = vld [vmem:[%s310 + $0x1c8] sm:$0xff]
        %v369 = vld [vmem:[%s310 + $0x1d0] sm:$0xff]
        %v370 = vld [vmem:[%s310 + $0x1d8] sm:$0xff]
        %v371 = vld [vmem:[%s310 + $0x1e0] sm:$0xff]
        %v372 = vld [vmem:[%s310 + $0x1e8] sm:$0xff]
        %v373 = vld [vmem:[%s310 + $0x1f0] sm:$0xff]
        %v374 = vld [vmem:[%s310 + $0x1f8] sm:$0xff]
        %v375 = vld [vmem:[%s310 + $0x200] sm:$0xff]
        %v376 = vld [vmem:[%s310 + $0x208] sm:$0xff]
        %v377 = vld [vmem:[%s310 + $0x210] sm:$0xff]
        %v378 = vld [vmem:[%s310 + $0x218] sm:$0xff]
        %v379 = vld [vmem:[%s310 + $0x220] sm:$0xff]
        %v380 = vld [vmem:[%s310 + $0x228] sm:$0xff]
        %v381 = vld [vmem:[%s310 + $0x230] sm:$0xff]
        %v382 = vld [vmem:[%s310 + $0x238] sm:$0xff]
        %v383 = vld [vmem:[%s310 + $0x240] sm:$0xff]
        %v384 = vld [vmem:[%s310 + $0x248] sm:$0xff]
        %v385 = vld [vmem:[%s310 + $0x250] sm:$0xff]
        %v386 = vld [vmem:[%s310 + $0x258] sm:$0xff]
        %v387 = vld [vmem:[%s310 + $0x260] sm:$0xff]
        %v388 = vld [vmem:[%s310 + $0x268] sm:$0xff]
        %v389 = vld [vmem:[%s310 + $0x270] sm:$0xff]
        %v390 = vld [vmem:[%s310 + $0x278] sm:$0xff]
        %v391 = vld [vmem:[%s310 + $0x280] sm:$0xff]
        %v392 = vld [vmem:[%s310 + $0x288] sm:$0xff]
        %v393 = vld [vmem:[%s310 + $0x290] sm:$0xff]
        %v394 = vld [vmem:[%s310 + $0x298] sm:$0xff]
        %v395 = vld [vmem:[%s310 + $0x2a0] sm:$0xff]
        %v396 = vld [vmem:[%s310 + $0x2a8] sm:$0xff]
        %v397 = vld [vmem:[%s310 + $0x2b0] sm:$0xff]
        %v398 = vld [vmem:[%s310 + $0x2b8] sm:$0xff]
        %v399 = vld [vmem:[%s310 + $0x2c0] sm:$0xff]
        %v400 = vld [vmem:[%s310 + $0x2c8] sm:$0xff]
        %v401 = vld [vmem:[%s310 + $0x2d0] sm:$0xff]
        %v402 = vld [vmem:[%s310 + $0x2d8] sm:$0xff]
        %v403 = vld [vmem:[%s310 + $0x2e0] sm:$0xff]
        %v404 = vld [vmem:[%s310 + $0x2e8] sm:$0xff]
        %v405 = vld [vmem:[%s310 + $0x2f0] sm:$0xff]
        %v406 = vld [vmem:[%s310 + $0x2f8] sm:$0xff]
        %v407 = vld [vmem:[%s310 + $0x300] sm:$0xff]
        %v408 = vld [vmem:[%s310 + $0x308] sm:$0xff]
        %v409 = vld [vmem:[%s310 + $0x310] sm:$0xff]
        %v410 = vld [vmem:[%s310 + $0x318] sm:$0xff]
        %v411 = vld [vmem:[%s310 + $0x320] sm:$0xff]
        %vm412 = vcmp.gt.f32.partialorder %v314, 0.0
        %vm413 = vcmp.gt.f32.partialorder %v315, 0.0
        %vm414 = vcmp.gt.f32.partialorder %v316, 0.0
        %vm415 = vcmp.gt.f32.partialorder %v317, 0.0
        %vm416 = vcmp.gt.f32.partialorder %v318, 0.0
        %vm417 = vcmp.gt.f32.partialorder %v319, 0.0
        %vm418 = vcmp.gt.f32.partialorder %v320, 0.0
        %vm419 = vcmp.gt.f32.partialorder %v321, 0.0
        %vm420 = vcmp.gt.f32.partialorder %v322, 0.0
        %vm421 = vcmp.gt.f32.partialorder %v323, 0.0
        %vm422 = vcmp.gt.f32.partialorder %v324, 0.0
        %vm423 = vcmp.gt.f32.partialorder %v325, 0.0
        %vm424 = vcmp.gt.f32.partialorder %v326, 0.0
        %vm425 = vcmp.gt.f32.partialorder %v327, 0.0
        %vm426 = vcmp.gt.f32.partialorder %v328, 0.0
        %vm427 = vcmp.gt.f32.partialorder %v329, 0.0
        %vm428 = vcmp.gt.f32.partialorder %v330, 0.0
        %vm429 = vcmp.gt.f32.partialorder %v331, 0.0
        %vm430 = vcmp.gt.f32.partialorder %v332, 0.0
        %vm431 = vcmp.gt.f32.partialorder %v333, 0.0
        %vm432 = vcmp.gt.f32.partialorder %v334, 0.0
        %vm433 = vcmp.gt.f32.partialorder %v335, 0.0
        %vm434 = vcmp.gt.f32.partialorder %v336, 0.0
        %vm435 = vcmp.gt.f32.partialorder %v337, 0.0
        %vm436 = vcmp.gt.f32.partialorder %v338, 0.0
        %vm437 = vcmp.gt.f32.partialorder %v339, 0.0
        %vm438 = vcmp.gt.f32.partialorder %v340, 0.0
        %vm439 = vcmp.gt.f32.partialorder %v341, 0.0
        %vm440 = vcmp.gt.f32.partialorder %v342, 0.0
        %vm441 = vcmp.gt.f32.partialorder %v343, 0.0
        %vm442 = vcmp.gt.f32.partialorder %v344, 0.0
        %vm443 = vcmp.gt.f32.partialorder %v345, 0.0
        %vm444 = vcmp.gt.f32.partialorder %v346, 0.0
        %vm445 = vcmp.gt.f32.partialorder %v347, 0.0
        %vm446 = vcmp.gt.f32.partialorder %v348, 0.0
        %vm447 = vcmp.gt.f32.partialorder %v349, 0.0
        %vm448 = vcmp.gt.f32.partialorder %v350, 0.0
        %vm449 = vcmp.gt.f32.partialorder %v351, 0.0
        %vm450 = vcmp.gt.f32.partialorder %v352, 0.0
        %vm451 = vcmp.gt.f32.partialorder %v353, 0.0
        %vm452 = vcmp.gt.f32.partialorder %v354, 0.0
        %vm453 = vcmp.gt.f32.partialorder %v355, 0.0
        %vm454 = vcmp.gt.f32.partialorder %v356, 0.0
        %vm455 = vcmp.gt.f32.partialorder %v357, 0.0
        %vm456 = vcmp.gt.f32.partialorder %v358, 0.0
        %vm457 = vcmp.gt.f32.partialorder %v359, 0.0
        %vm458 = vcmp.gt.f32.partialorder %v360, 0.0
        %vm459 = vcmp.gt.f32.partialorder %v361, 0.0
        %vm460 = vcmp.gt.f32.partialorder %v362, 0.0
        %vm461 = vcmp.gt.f32.partialorder %v363, 0.0
        %vm462 = vcmp.gt.f32.partialorder %v364, 0.0
        %vm463 = vcmp.gt.f32.partialorder %v365, 0.0
        %vm464 = vcmp.gt.f32.partialorder %v366, 0.0
        %vm465 = vcmp.gt.f32.partialorder %v367, 0.0
        %vm466 = vcmp.gt.f32.partialorder %v368, 0.0
        %vm467 = vcmp.gt.f32.partialorder %v369, 0.0
        %vm468 = vcmp.gt.f32.partialorder %v370, 0.0
        %vm469 = vcmp.gt.f32.partialorder %v371, 0.0
        %vm470 = vcmp.gt.f32.partialorder %v372, 0.0
        %vm471 = vcmp.gt.f32.partialorder %v373, 0.0
        %vm472 = vcmp.gt.f32.partialorder %v374, 0.0
        %vm473 = vcmp.gt.f32.partialorder %v375, 0.0
        %vm474 = vcmp.gt.f32.partialorder %v376, 0.0
        %vm475 = vcmp.gt.f32.partialorder %v377, 0.0
        %vm476 = vcmp.gt.f32.partialorder %v378, 0.0
        %vm477 = vcmp.gt.f32.partialorder %v379, 0.0
        %vm478 = vcmp.gt.f32.partialorder %v380, 0.0
        %vm479 = vcmp.gt.f32.partialorder %v381, 0.0
        %vm480 = vcmp.gt.f32.partialorder %v382, 0.0
        %vm481 = vcmp.gt.f32.partialorder %v383, 0.0
        %vm482 = vcmp.gt.f32.partialorder %v384, 0.0
        %vm483 = vcmp.gt.f32.partialorder %v385, 0.0
        %vm484 = vcmp.gt.f32.partialorder %v386, 0.0
        %vm485 = vcmp.gt.f32.partialorder %v387, 0.0
        %vm486 = vcmp.gt.f32.partialorder %v388, 0.0
        %vm487 = vcmp.gt.f32.partialorder %v389, 0.0
        %vm488 = vcmp.gt.f32.partialorder %v390, 0.0
        %vm489 = vcmp.gt.f32.partialorder %v391, 0.0
        %vm490 = vcmp.gt.f32.partialorder %v392, 0.0
        %vm491 = vcmp.gt.f32.partialorder %v393, 0.0
        %vm492 = vcmp.gt.f32.partialorder %v394, 0.0
        %vm493 = vcmp.gt.f32.partialorder %v395, 0.0
        %vm494 = vcmp.gt.f32.partialorder %v396, 0.0
        %vm495 = vcmp.gt.f32.partialorder %v397, 0.0
        %vm496 = vcmp.gt.f32.partialorder %v398, 0.0
        %vm497 = vcmp.gt.f32.partialorder %v399, 0.0
        %vm498 = vcmp.gt.f32.partialorder %v400, 0.0
        %vm499 = vcmp.gt.f32.partialorder %v401, 0.0
        %vm500 = vcmp.gt.f32.partialorder %v402, 0.0
        %vm501 = vcmp.gt.f32.partialorder %v403, 0.0
        %vm502 = vcmp.gt.f32.partialorder %v404, 0.0
        %vm503 = vcmp.gt.f32.partialorder %v405, 0.0
        %vm504 = vcmp.gt.f32.partialorder %v406, 0.0
        %vm505 = vcmp.gt.f32.partialorder %v407, 0.0
        %vm506 = vcmp.gt.f32.partialorder %v408, 0.0
        %vm507 = vcmp.gt.f32.partialorder %v409, 0.0
        %vm508 = vcmp.gt.f32.partialorder %v410, 0.0
        %vm509 = vcmp.gt.f32.partialorder %v411, 0.0
        %v510 = vld [vmem:[%s304 + $0xc] sm:$0xf]
        %v511 = vld [vmem:[%s304 + $0x10] sm:$0xf]
        %v512 = vld [vmem:[%s304 + $0x14] sm:$0xf]
        %v513 = vld [vmem:[%s304 + $0x18] sm:$0xf]
        %v514 = vld [vmem:[%s304 + $0x1c] sm:$0xf]
        %v515 = vld [vmem:[%s304 + $0x20] sm:$0xf]
        %v516 = vld [vmem:[%s304 + $0x24] sm:$0xf]
        %v517 = vld [vmem:[%s304 + $0x28] sm:$0xf]
        %v518 = vld [vmem:[%s304 + $0x2c] sm:$0xf]
        %v519 = vld [vmem:[%s304 + $0x30] sm:$0xf]
        %v520 = vld [vmem:[%s304 + $0x34] sm:$0xf]
        %v521 = vld [vmem:[%s304 + $0x38] sm:$0xf]
        %v522 = vld [vmem:[%s304 + $0x3c] sm:$0xf]
        %v523 = vld [vmem:[%s304 + $0x40] sm:$0xf]
        %v524 = vld [vmem:[%s304 + $0x44] sm:$0xf]
        %v525 = vld [vmem:[%s304 + $0x48] sm:$0xf]
        %v526 = vld [vmem:[%s304 + $0x4c] sm:$0xf]
        %v527 = vld [vmem:[%s304 + $0x50] sm:$0xf]
        %v528 = vld [vmem:[%s304 + $0x54] sm:$0xf]
        %v529 = vld [vmem:[%s304 + $0x58] sm:$0xf]
        %v530 = vld [vmem:[%s304 + $0x5c] sm:$0xf]
        %v531 = vld [vmem:[%s304 + $0x60] sm:$0xf]
        %v532 = vld [vmem:[%s304 + $0x64] sm:$0xf]
        %v533 = vld [vmem:[%s304 + $0x68] sm:$0xf]
        %v534 = vld [vmem:[%s304 + $0x6c] sm:$0xf]
        %v535 = vld [vmem:[%s304 + $0x70] sm:$0xf]
        %v536 = vld [vmem:[%s304 + $0x74] sm:$0xf]
        %v537 = vld [vmem:[%s304 + $0x78] sm:$0xf]
        %v538 = vld [vmem:[%s304 + $0x7c] sm:$0xf]
        %v539 = vld [vmem:[%s304 + $0x80] sm:$0xf]
        %v540 = vld [vmem:[%s304 + $0x84] sm:$0xf]
        %v541 = vld [vmem:[%s304 + $0x88] sm:$0xf]
        %v542 = vld [vmem:[%s304 + $0x8c] sm:$0xf]
        %v543 = vld [vmem:[%s304 + $0x90] sm:$0xf]
        %v544 = vld [vmem:[%s304 + $0x94] sm:$0xf]
        %v545 = vld [vmem:[%s304 + $0x98] sm:$0xf]
        %v546 = vld [vmem:[%s304 + $0x9c] sm:$0xf]
        %v547 = vld [vmem:[%s304 + $0xa0] sm:$0xf]
        %v548 = vld [vmem:[%s304 + $0xa4] sm:$0xf]
        %v549 = vld [vmem:[%s304 + $0xa8] sm:$0xf]
        %v550 = vld [vmem:[%s304 + $0xac] sm:$0xf]
        %v551 = vld [vmem:[%s304 + $0xb0] sm:$0xf]
        %v552 = vld [vmem:[%s304 + $0xb4] sm:$0xf]
        %v553 = vld [vmem:[%s304 + $0xb8] sm:$0xf]
        %v554 = vld [vmem:[%s304 + $0xbc] sm:$0xf]
        %v555 = vld [vmem:[%s304 + $0xc0] sm:$0xf]
        %v556 = vld [vmem:[%s304 + $0xc4] sm:$0xf]
        %v557 = vld [vmem:[%s304 + $0xc8] sm:$0xf]
        %v558 = vld [vmem:[%s304 + $0xcc] sm:$0xf]
        %v559 = vld [vmem:[%s304 + $0xd0] sm:$0xf]
        %v560 = vld [vmem:[%s304 + $0xd4] sm:$0xf]
        %v561 = vld [vmem:[%s304 + $0xd8] sm:$0xf]
        %v562 = vld [vmem:[%s304 + $0xdc] sm:$0xf]
        %v563 = vld [vmem:[%s304 + $0xe0] sm:$0xf]
        %v564 = vld [vmem:[%s304 + $0xe4] sm:$0xf]
        %v565 = vld [vmem:[%s304 + $0xe8] sm:$0xf]
        %v566 = vld [vmem:[%s304 + $0xec] sm:$0xf]
        %v567 = vld [vmem:[%s304 + $0xf0] sm:$0xf]
        %v568 = vld [vmem:[%s304 + $0xf4] sm:$0xf]
        %v569 = vld [vmem:[%s304 + $0xf8] sm:$0xf]
        %v570 = vld [vmem:[%s304 + $0xfc] sm:$0xf]
        %v571 = vld [vmem:[%s304 + $0x100] sm:$0xf]
        %v572 = vld [vmem:[%s304 + $0x104] sm:$0xf]
        %v573 = vld [vmem:[%s304 + $0x108] sm:$0xf]
        %v574 = vld [vmem:[%s304 + $0x10c] sm:$0xf]
        %v575 = vld [vmem:[%s304 + $0x110] sm:$0xf]
        %v576 = vld [vmem:[%s304 + $0x114] sm:$0xf]
        %v577 = vld [vmem:[%s304 + $0x118] sm:$0xf]
        %v578 = vld [vmem:[%s304 + $0x11c] sm:$0xf]
        %v579 = vld [vmem:[%s304 + $0x120] sm:$0xf]
        %v580 = vld [vmem:[%s304 + $0x124] sm:$0xf]
        %v581 = vld [vmem:[%s304 + $0x128] sm:$0xf]
        %v582 = vld [vmem:[%s304 + $0x12c] sm:$0xf]
        %v583 = vld [vmem:[%s304 + $0x130] sm:$0xf]
        %v584 = vld [vmem:[%s304 + $0x134] sm:$0xf]
        %v585 = vld [vmem:[%s304 + $0x138] sm:$0xf]
        %v586 = vld [vmem:[%s304 + $0x13c] sm:$0xf]
        %v587 = vld [vmem:[%s304 + $0x140] sm:$0xf]
        %v588 = vld [vmem:[%s304 + $0x144] sm:$0xf]
        %v589 = vld [vmem:[%s304 + $0x148] sm:$0xf]
        %v590 = vld [vmem:[%s304 + $0x14c] sm:$0xf]
        %v591 = vld [vmem:[%s304 + $0x150] sm:$0xf]
        %v592 = vld [vmem:[%s304 + $0x154] sm:$0xf]
        %v593 = vld [vmem:[%s304 + $0x158] sm:$0xf]
        %v594 = vld [vmem:[%s304 + $0x15c] sm:$0xf]
        %v595 = vld [vmem:[%s304 + $0x160] sm:$0xf]
        %v596 = vld [vmem:[%s304 + $0x164] sm:$0xf]
        %v597 = vld [vmem:[%s304 + $0x168] sm:$0xf]
        %v598 = vld [vmem:[%s304 + $0x16c] sm:$0xf]
        %v599 = vld [vmem:[%s304 + $0x170] sm:$0xf]
        %v600 = vld [vmem:[%s304 + $0x174] sm:$0xf]
        %v601 = vld [vmem:[%s304 + $0x178] sm:$0xf]
        %v602 = vld [vmem:[%s304 + $0x17c] sm:$0xf]
        %v603 = vld [vmem:[%s304 + $0x180] sm:$0xf]
        %v604 = vld [vmem:[%s304 + $0x184] sm:$0xf]
        %v605 = vld [vmem:[%s304 + $0x188] sm:$0xf]
        %v606 = vld [vmem:[%s304 + $0x18c] sm:$0xf]
        %v607 = vld [vmem:[%s304 + $0x190] sm:$0xf]
        %v608 = vld [vmem:[%s1] sm:$0xf]
        %v609 = vld [vmem:[%s1 + $0x4] sm:$0xf]
        %v610 = vld [vmem:[%s1 + $0x8] sm:$0xf]
        %v611 = vld [vmem:[%s1 + $0xc] sm:$0xf]
        %v612 = vld [vmem:[%s1 + $0x10] sm:$0xf]
        %v613 = vld [vmem:[%s1 + $0x14] sm:$0xf]
        %v614 = vld [vmem:[%s2] sm:$0x1]
        %v616 = vlaneseq
        %v617 = vshrl.u32 %v616, 7
        %v618 = vsub.s32 0, %v617
        %v619 = vrot.slane %v614, %v618
        %v719 = vunpack.c.l.b16 %v510
        %v720 = vunpack.c.l.b16 %v511
        %v721 = vunpack.c.l.b16 %v512
        %v722 = vunpack.c.l.b16 %v513
        %v723 = vunpack.c.l.b16 %v514
        %v724 = vunpack.c.l.b16 %v515
        %v725 = vunpack.c.l.b16 %v516
        %v726 = vunpack.c.l.b16 %v517
        %v727 = vunpack.c.l.b16 %v518
        %v728 = vunpack.c.l.b16 %v519
        %v729 = vunpack.c.l.b16 %v520
        %v730 = vunpack.c.l.b16 %v521
        %v731 = vunpack.c.l.b16 %v522
        %v732 = vunpack.c.l.b16 %v523
        %v733 = vunpack.c.l.b16 %v524
        %v734 = vunpack.c.l.b16 %v525
        %v735 = vunpack.c.l.b16 %v526
        %v736 = vunpack.c.l.b16 %v527
        %v737 = vunpack.c.l.b16 %v528
        %v738 = vunpack.c.l.b16 %v529
        %v739 = vunpack.c.l.b16 %v530
        %v740 = vunpack.c.l.b16 %v531
        %v741 = vunpack.c.l.b16 %v532
        %v742 = vunpack.c.l.b16 %v533
        %v743 = vunpack.c.l.b16 %v534
        %v744 = vunpack.c.l.b16 %v535
        %v745 = vunpack.c.l.b16 %v536
        %v746 = vunpack.c.l.b16 %v537
        %v747 = vunpack.c.l.b16 %v538
        %v748 = vunpack.c.l.b16 %v539
        %v749 = vunpack.c.l.b16 %v540
        %v750 = vunpack.c.l.b16 %v541
        %v751 = vunpack.c.l.b16 %v542
        %v752 = vunpack.c.l.b16 %v543
        %v753 = vunpack.c.l.b16 %v544
        %v754 = vunpack.c.l.b16 %v545
        %v755 = vunpack.c.l.b16 %v546
        %v756 = vunpack.c.l.b16 %v547
        %v757 = vunpack.c.l.b16 %v548
        %v758 = vunpack.c.l.b16 %v549
        %v759 = vunpack.c.l.b16 %v550
        %v760 = vunpack.c.l.b16 %v551
        %v761 = vunpack.c.l.b16 %v552
        %v762 = vunpack.c.l.b16 %v553
        %v763 = vunpack.c.l.b16 %v554
        %v764 = vunpack.c.l.b16 %v555
        %v765 = vunpack.c.l.b16 %v556
        %v766 = vunpack.c.l.b16 %v557
        %v767 = vunpack.c.l.b16 %v558
        %v768 = vunpack.c.l.b16 %v559
        %v769 = vunpack.c.l.b16 %v560
        %v770 = vunpack.c.l.b16 %v561
        %v771 = vunpack.c.l.b16 %v562
        %v772 = vunpack.c.l.b16 %v563
        %v773 = vunpack.c.l.b16 %v564
        %v774 = vunpack.c.l.b16 %v565
        %v775 = vunpack.c.l.b16 %v566
        %v776 = vunpack.c.l.b16 %v567
        %v777 = vunpack.c.l.b16 %v568
        %v778 = vunpack.c.l.b16 %v569
        %v779 = vunpack.c.l.b16 %v570
        %v780 = vunpack.c.l.b16 %v571
        %v781 = vunpack.c.l.b16 %v572
        %v782 = vunpack.c.l.b16 %v573
        %v783 = vunpack.c.l.b16 %v574
        %v784 = vunpack.c.l.b16 %v575
        %v785 = vunpack.c.l.b16 %v576
        %v786 = vunpack.c.l.b16 %v577
        %v787 = vunpack.c.l.b16 %v578
        %v788 = vunpack.c.l.b16 %v579
        %v789 = vunpack.c.l.b16 %v580
        %v790 = vunpack.c.l.b16 %v581
        %v791 = vunpack.c.l.b16 %v582
        %v792 = vunpack.c.l.b16 %v583
        %v793 = vunpack.c.l.b16 %v584
        %v794 = vunpack.c.l.b16 %v585
        %v795 = vunpack.c.l.b16 %v586
        %v796 = vunpack.c.l.b16 %v587
        %v797 = vunpack.c.l.b16 %v588
        %v798 = vunpack.c.l.b16 %v589
        %v799 = vunpack.c.l.b16 %v590
        %v800 = vunpack.c.l.b16 %v591
        %v801 = vunpack.c.l.b16 %v592
        %v802 = vunpack.c.l.b16 %v593
        %v803 = vunpack.c.l.b16 %v594
        %v804 = vunpack.c.l.b16 %v595
        %v805 = vunpack.c.l.b16 %v596
        %v806 = vunpack.c.l.b16 %v597
        %v807 = vunpack.c.l.b16 %v598
        %v808 = vunpack.c.l.b16 %v599
        %v809 = vunpack.c.l.b16 %v600
        %v810 = vunpack.c.l.b16 %v601
        %v811 = vunpack.c.l.b16 %v602
        %v812 = vunpack.c.l.b16 %v603
        %v813 = vunpack.c.l.b16 %v604
        %v814 = vunpack.c.l.b16 %v605
        %v815 = vunpack.c.l.b16 %v606
        %v816 = vunpack.c.l.b16 %v607
        %v817 = vpack.c.b16 %v720, %v719
        %v818 = vpack.c.b16 %v722, %v721
        %v819 = vpack.c.b16 %v724, %v723
        %v820 = vpack.c.b16 %v726, %v725
        %v821 = vpack.c.b16 %v728, %v727
        %v822 = vpack.c.b16 %v730, %v729
        %v823 = vpack.c.b16 %v732, %v731
        %v824 = vpack.c.b16 %v734, %v733
        %v825 = vpack.c.b16 %v736, %v735
        %v826 = vpack.c.b16 %v738, %v737
        %v827 = vpack.c.b16 %v740, %v739
        %v828 = vpack.c.b16 %v742, %v741
        %v829 = vpack.c.b16 %v744, %v743
        %v830 = vpack.c.b16 %v746, %v745
        %v831 = vpack.c.b16 %v748, %v747
        %v832 = vpack.c.b16 %v750, %v749
        %v833 = vpack.c.b16 %v752, %v751
        %v834 = vpack.c.b16 %v754, %v753
        %v835 = vpack.c.b16 %v756, %v755
        %v836 = vpack.c.b16 %v758, %v757
        %v837 = vpack.c.b16 %v760, %v759
        %v838 = vpack.c.b16 %v762, %v761
        %v839 = vpack.c.b16 %v764, %v763
        %v840 = vpack.c.b16 %v766, %v765
        %v841 = vpack.c.b16 %v768, %v767
        %v842 = vpack.c.b16 %v770, %v769
        %v843 = vpack.c.b16 %v772, %v771
        %v844 = vpack.c.b16 %v774, %v773
        %v845 = vpack.c.b16 %v776, %v775
        %v846 = vpack.c.b16 %v778, %v777
        %v847 = vpack.c.b16 %v780, %v779
        %v848 = vpack.c.b16 %v782, %v781
        %v849 = vpack.c.b16 %v784, %v783
        %v850 = vpack.c.b16 %v786, %v785
        %v851 = vpack.c.b16 %v788, %v787
        %v852 = vpack.c.b16 %v790, %v789
        %v853 = vpack.c.b16 %v792, %v791
        %v854 = vpack.c.b16 %v794, %v793
        %v855 = vpack.c.b16 %v796, %v795
        %v856 = vpack.c.b16 %v798, %v797
        %v857 = vpack.c.b16 %v800, %v799
        %v858 = vpack.c.b16 %v802, %v801
        %v859 = vpack.c.b16 %v804, %v803
        %v860 = vpack.c.b16 %v806, %v805
        %v861 = vpack.c.b16 %v808, %v807
        %v862 = vpack.c.b16 %v810, %v809
        %v863 = vpack.c.b16 %v812, %v811
        %v864 = vpack.c.b16 %v814, %v813
        %v865 = vpack.c.b16 %v816, %v815
        %v872 = vunpack.c.l.b16 %v608
        %v873 = vunpack.c.l.b16 %v609
        %v874 = vunpack.c.l.b16 %v610
        %v875 = vunpack.c.l.b16 %v611
        %v876 = vunpack.c.l.b16 %v612
        %v877 = vunpack.c.l.b16 %v613
        %v878 = vpack.c.b16 %v873, %v872
        %v879 = vpack.c.b16 %v875, %v874
        %v880 = vpack.c.b16 %v877, %v876
        %vm884 = vcmask 392192
        %v886 = vsel %vm884, %v817, 0
        %v889 = vsel %vm884, %v818, 0
        %v892 = vsel %vm884, %v819, 0
        %v895 = vsel %vm884, %v820, 0
        %v898 = vsel %vm884, %v821, 0
        %v901 = vsel %vm884, %v822, 0
        %v904 = vsel %vm884, %v823, 0
        %v907 = vsel %vm884, %v824, 0
        %v910 = vsel %vm884, %v825, 0
        %v913 = vsel %vm884, %v826, 0
        %v916 = vsel %vm884, %v827, 0
        %v919 = vsel %vm884, %v828, 0
        %v922 = vsel %vm884, %v829, 0
        %v925 = vsel %vm884, %v830, 0
        %v928 = vsel %vm884, %v831, 0
        %v931 = vsel %vm884, %v832, 0
        %v934 = vsel %vm884, %v833, 0
        %v937 = vsel %vm884, %v834, 0
        %v940 = vsel %vm884, %v835, 0
        %v943 = vsel %vm884, %v836, 0
        %v946 = vsel %vm884, %v837, 0
        %v949 = vsel %vm884, %v838, 0
        %v952 = vsel %vm884, %v839, 0
        %v955 = vsel %vm884, %v840, 0
        %v958 = vsel %vm884, %v841, 0
        %v961 = vsel %vm884, %v842, 0
        %v964 = vsel %vm884, %v843, 0
        %v967 = vsel %vm884, %v844, 0
        %v970 = vsel %vm884, %v845, 0
        %v973 = vsel %vm884, %v846, 0
        %v976 = vsel %vm884, %v847, 0
        %v979 = vsel %vm884, %v848, 0
        %v982 = vsel %vm884, %v849, 0
        %v985 = vsel %vm884, %v850, 0
        %v988 = vsel %vm884, %v851, 0
        %v991 = vsel %vm884, %v852, 0
        %v994 = vsel %vm884, %v853, 0
        %v997 = vsel %vm884, %v854, 0
        %v1000 = vsel %vm884, %v855, 0
        %v1003 = vsel %vm884, %v856, 0
        %v1006 = vsel %vm884, %v857, 0
        %v1009 = vsel %vm884, %v858, 0
        %v1012 = vsel %vm884, %v859, 0
        %v1015 = vsel %vm884, %v860, 0
        %v1018 = vsel %vm884, %v861, 0
        %v1021 = vsel %vm884, %v862, 0
        %v1024 = vsel %vm884, %v863, 0
        %v1027 = vsel %vm884, %v864, 0
        %v1030 = vsel %vm884, %v865, 0
        %1032 = vmatprep.subr.bf16.mxu0 0
        %1033 = vmatpush1.bf16.msra.mxu0 0
        %1034 = vmatprep.subr.bf16.mxu0 0
        %1035 = vmatpush1.bf16.msra.mxu0 0
        %1036 = vmatprep.subr.bf16.mxu0 0
        %1037 = vmatpush1.bf16.msra.mxu0 0
        %1038 = vmatprep.subr.bf16.mxu0 0
        %1039 = vmatpush1.bf16.msra.mxu0 0
        %1040 = vmatprep.subr.bf16.mxu0 0
        %1041 = vmatpush1.bf16.msra.mxu0 0
        %1042 = vmatprep.subr.bf16.mxu0 0
        %1043 = vmatpush1.bf16.msra.mxu0 %v880
        %1044 = vmatprep.subr.bf16.mxu0 0
        %1045 = vmatpush1.bf16.msra.mxu0 %v879
        %1046 = vmatprep.subr.bf16.mxu0 0
        %1047 = vmatpush1.bf16.msra.mxu0 %v878
        %1048 = vmatprep.subr.bf16.mxu0 0
        %1049 = vmatpush2.bf16.msra.mxu0 0
        %1050 = vmatprep.subr.bf16.mxu0 0
        %1051 = vmatpush2.bf16.msra.mxu0 0
        %1052 = vmatprep.subr.bf16.mxu0 0
        %1053 = vmatpush2.bf16.msra.mxu0 0
        %1054 = vmatprep.subr.bf16.mxu0 0
        %1055 = vmatpush2.bf16.msra.mxu0 0
        %1056 = vmatprep.subr.bf16.mxu0 0
        %1057 = vmatpush2.bf16.msra.mxu0 0
        %1058 = vmatprep.subr.bf16.mxu0 0
        %1059 = vmatpush2.bf16.msra.mxu0 0
        %1060 = vmatprep.subr.bf16.mxu0 0
        %1061 = vmatpush2.bf16.msra.mxu0 0
        %1062 = vmatprep.subr.bf16.mxu0 0
        %1063 = vmatpush2.bf16.msra.mxu0 0
        %1064 = vmatprep.mubr.bf16.mxu0 0
        %1065 = vmatmul.mubr.bf16.gmra.mxu0 %v886
        %v1066 = vpop.f32.mrf.mxu0
        %v1067 = vadd.f32 %v619, %v1066
        %v1068 = vpop.f32.mrf.mxu0
        %v1069 = vpop.f32.mrf.mxu0
        %v1070 = vadd.f32 %v619, %v1069
        %v1071 = vpop.f32.mrf.mxu0
        %1072 = vmatprep.mubr.bf16.mxu0 0
        %1073 = vmatmul.mubr.bf16.gmra.mxu0 %v889
        %v1074 = vpop.f32.mrf.mxu0
        %v1075 = vadd.f32 %v619, %v1074
        %v1076 = vpop.f32.mrf.mxu0
        %v1077 = vpop.f32.mrf.mxu0
        %v1078 = vadd.f32 %v619, %v1077
        %v1079 = vpop.f32.mrf.mxu0
        %1080 = vmatprep.mubr.bf16.mxu0 0
        %1081 = vmatmul.mubr.bf16.gmra.mxu0 %v892
        %v1082 = vpop.f32.mrf.mxu0
        %v1083 = vadd.f32 %v619, %v1082
        %v1084 = vpop.f32.mrf.mxu0
        %v1085 = vpop.f32.mrf.mxu0
        %v1086 = vadd.f32 %v619, %v1085
        %v1087 = vpop.f32.mrf.mxu0
        %1088 = vmatprep.mubr.bf16.mxu0 0
        %1089 = vmatmul.mubr.bf16.gmra.mxu0 %v895
        %v1090 = vpop.f32.mrf.mxu0
        %v1091 = vadd.f32 %v619, %v1090
        %v1092 = vpop.f32.mrf.mxu0
        %v1093 = vpop.f32.mrf.mxu0
        %v1094 = vadd.f32 %v619, %v1093
        %v1095 = vpop.f32.mrf.mxu0
        %1096 = vmatprep.mubr.bf16.mxu0 0
        %1097 = vmatmul.mubr.bf16.gmra.mxu0 %v898
        %v1098 = vpop.f32.mrf.mxu0
        %v1099 = vadd.f32 %v619, %v1098
        %v1100 = vpop.f32.mrf.mxu0
        %v1101 = vpop.f32.mrf.mxu0
        %v1102 = vadd.f32 %v619, %v1101
        %v1103 = vpop.f32.mrf.mxu0
        %1104 = vmatprep.mubr.bf16.mxu0 0
        %1105 = vmatmul.mubr.bf16.gmra.mxu0 %v901
        %v1106 = vpop.f32.mrf.mxu0
        %v1107 = vadd.f32 %v619, %v1106
        %v1108 = vpop.f32.mrf.mxu0
        %v1109 = vpop.f32.mrf.mxu0
        %v1110 = vadd.f32 %v619, %v1109
        %v1111 = vpop.f32.mrf.mxu0
        %1112 = vmatprep.mubr.bf16.mxu0 0
        %1113 = vmatmul.mubr.bf16.gmra.mxu0 %v904
        %v1114 = vpop.f32.mrf.mxu0
        %v1115 = vadd.f32 %v619, %v1114
        %v1116 = vpop.f32.mrf.mxu0
        %v1117 = vpop.f32.mrf.mxu0
        %v1118 = vadd.f32 %v619, %v1117
        %v1119 = vpop.f32.mrf.mxu0
        %1120 = vmatprep.mubr.bf16.mxu0 0
        %1121 = vmatmul.mubr.bf16.gmra.mxu0 %v907
        %v1122 = vpop.f32.mrf.mxu0
        %v1123 = vadd.f32 %v619, %v1122
        %v1124 = vpop.f32.mrf.mxu0
        %v1125 = vpop.f32.mrf.mxu0
        %v1126 = vadd.f32 %v619, %v1125
        %v1127 = vpop.f32.mrf.mxu0
        %1128 = vmatprep.mubr.bf16.mxu0 0
        %1129 = vmatmul.mubr.bf16.gmra.mxu0 %v910
        %v1130 = vpop.f32.mrf.mxu0
        %v1131 = vadd.f32 %v619, %v1130
        %v1132 = vpop.f32.mrf.mxu0
        %v1133 = vpop.f32.mrf.mxu0
        %v1134 = vadd.f32 %v619, %v1133
        %v1135 = vpop.f32.mrf.mxu0
        %1136 = vmatprep.mubr.bf16.mxu0 0
        %1137 = vmatmul.mubr.bf16.gmra.mxu0 %v913
        %v1138 = vpop.f32.mrf.mxu0
        %v1139 = vadd.f32 %v619, %v1138
        %v1140 = vpop.f32.mrf.mxu0
        %v1141 = vpop.f32.mrf.mxu0
        %v1142 = vadd.f32 %v619, %v1141
        %v1143 = vpop.f32.mrf.mxu0
        %1144 = vmatprep.mubr.bf16.mxu0 0
        %1145 = vmatmul.mubr.bf16.gmra.mxu0 %v916
        %v1146 = vpop.f32.mrf.mxu0
        %v1147 = vadd.f32 %v619, %v1146
        %v1148 = vpop.f32.mrf.mxu0
        %v1149 = vpop.f32.mrf.mxu0
        %v1150 = vadd.f32 %v619, %v1149
        %v1151 = vpop.f32.mrf.mxu0
        %1152 = vmatprep.mubr.bf16.mxu0 0
        %1153 = vmatmul.mubr.bf16.gmra.mxu0 %v919
        %v1154 = vpop.f32.mrf.mxu0
        %v1155 = vadd.f32 %v619, %v1154
        %v1156 = vpop.f32.mrf.mxu0
        %v1157 = vpop.f32.mrf.mxu0
        %v1158 = vadd.f32 %v619, %v1157
        %v1159 = vpop.f32.mrf.mxu0
        %1160 = vmatprep.mubr.bf16.mxu0 0
        %1161 = vmatmul.mubr.bf16.gmra.mxu0 %v922
        %v1162 = vpop.f32.mrf.mxu0
        %v1163 = vadd.f32 %v619, %v1162
        %v1164 = vpop.f32.mrf.mxu0
        %v1165 = vpop.f32.mrf.mxu0
        %v1166 = vadd.f32 %v619, %v1165
        %v1167 = vpop.f32.mrf.mxu0
        %1168 = vmatprep.mubr.bf16.mxu0 0
        %1169 = vmatmul.mubr.bf16.gmra.mxu0 %v925
        %v1170 = vpop.f32.mrf.mxu0
        %v1171 = vadd.f32 %v619, %v1170
        %v1172 = vpop.f32.mrf.mxu0
        %v1173 = vpop.f32.mrf.mxu0
        %v1174 = vadd.f32 %v619, %v1173
        %v1175 = vpop.f32.mrf.mxu0
        %1176 = vmatprep.mubr.bf16.mxu0 0
        %1177 = vmatmul.mubr.bf16.gmra.mxu0 %v928
        %v1178 = vpop.f32.mrf.mxu0
        %v1179 = vadd.f32 %v619, %v1178
        %v1180 = vpop.f32.mrf.mxu0
        %v1181 = vpop.f32.mrf.mxu0
        %v1182 = vadd.f32 %v619, %v1181
        %v1183 = vpop.f32.mrf.mxu0
        %1184 = vmatprep.mubr.bf16.mxu0 0
        %1185 = vmatmul.mubr.bf16.gmra.mxu0 %v931
        %v1186 = vpop.f32.mrf.mxu0
        %v1187 = vadd.f32 %v619, %v1186
        %v1188 = vpop.f32.mrf.mxu0
        %v1189 = vpop.f32.mrf.mxu0
        %v1190 = vadd.f32 %v619, %v1189
        %v1191 = vpop.f32.mrf.mxu0
        %1192 = vmatprep.mubr.bf16.mxu0 0
        %1193 = vmatmul.mubr.bf16.gmra.mxu0 %v934
        %v1194 = vpop.f32.mrf.mxu0
        %v1195 = vadd.f32 %v619, %v1194
        %v1196 = vpop.f32.mrf.mxu0
        %v1197 = vpop.f32.mrf.mxu0
        %v1198 = vadd.f32 %v619, %v1197
        %v1199 = vpop.f32.mrf.mxu0
        %1200 = vmatprep.mubr.bf16.mxu0 0
        %1201 = vmatmul.mubr.bf16.gmra.mxu0 %v937
        %v1202 = vpop.f32.mrf.mxu0
        %v1203 = vadd.f32 %v619, %v1202
        %v1204 = vpop.f32.mrf.mxu0
        %v1205 = vpop.f32.mrf.mxu0
        %v1206 = vadd.f32 %v619, %v1205
        %v1207 = vpop.f32.mrf.mxu0
        %1208 = vmatprep.mubr.bf16.mxu0 0
        %1209 = vmatmul.mubr.bf16.gmra.mxu0 %v940
        %v1210 = vpop.f32.mrf.mxu0
        %v1211 = vadd.f32 %v619, %v1210
        %v1212 = vpop.f32.mrf.mxu0
        %v1213 = vpop.f32.mrf.mxu0
        %v1214 = vadd.f32 %v619, %v1213
        %v1215 = vpop.f32.mrf.mxu0
        %1216 = vmatprep.mubr.bf16.mxu0 0
        %1217 = vmatmul.mubr.bf16.gmra.mxu0 %v943
        %v1218 = vpop.f32.mrf.mxu0
        %v1219 = vadd.f32 %v619, %v1218
        %v1220 = vpop.f32.mrf.mxu0
        %v1221 = vpop.f32.mrf.mxu0
        %v1222 = vadd.f32 %v619, %v1221
        %v1223 = vpop.f32.mrf.mxu0
        %1224 = vmatprep.mubr.bf16.mxu0 0
        %1225 = vmatmul.mubr.bf16.gmra.mxu0 %v946
        %v1226 = vpop.f32.mrf.mxu0
        %v1227 = vadd.f32 %v619, %v1226
        %v1228 = vpop.f32.mrf.mxu0
        %v1229 = vpop.f32.mrf.mxu0
        %v1230 = vadd.f32 %v619, %v1229
        %v1231 = vpop.f32.mrf.mxu0
        %1232 = vmatprep.mubr.bf16.mxu0 0
        %1233 = vmatmul.mubr.bf16.gmra.mxu0 %v949
        %v1234 = vpop.f32.mrf.mxu0
        %v1235 = vadd.f32 %v619, %v1234
        %v1236 = vpop.f32.mrf.mxu0
        %v1237 = vpop.f32.mrf.mxu0
        %v1238 = vadd.f32 %v619, %v1237
        %v1239 = vpop.f32.mrf.mxu0
        %1240 = vmatprep.mubr.bf16.mxu0 0
        %1241 = vmatmul.mubr.bf16.gmra.mxu0 %v952
        %v1242 = vpop.f32.mrf.mxu0
        %v1243 = vadd.f32 %v619, %v1242
        %v1244 = vpop.f32.mrf.mxu0
        %v1245 = vpop.f32.mrf.mxu0
        %v1246 = vadd.f32 %v619, %v1245
        %v1247 = vpop.f32.mrf.mxu0
        %1248 = vmatprep.mubr.bf16.mxu0 0
        %1249 = vmatmul.mubr.bf16.gmra.mxu0 %v955
        %v1250 = vpop.f32.mrf.mxu0
        %v1251 = vadd.f32 %v619, %v1250
        %v1252 = vpop.f32.mrf.mxu0
        %v1253 = vpop.f32.mrf.mxu0
        %v1254 = vadd.f32 %v619, %v1253
        %v1255 = vpop.f32.mrf.mxu0
        %1256 = vmatprep.mubr.bf16.mxu0 0
        %1257 = vmatmul.mubr.bf16.gmra.mxu0 %v958
        %v1258 = vpop.f32.mrf.mxu0
        %v1259 = vadd.f32 %v619, %v1258
        %v1260 = vpop.f32.mrf.mxu0
        %v1261 = vpop.f32.mrf.mxu0
        %v1262 = vadd.f32 %v619, %v1261
        %v1263 = vpop.f32.mrf.mxu0
        %1264 = vmatprep.mubr.bf16.mxu0 0
        %1265 = vmatmul.mubr.bf16.gmra.mxu0 %v961
        %v1266 = vpop.f32.mrf.mxu0
        %v1267 = vadd.f32 %v619, %v1266
        %v1268 = vpop.f32.mrf.mxu0
        %v1269 = vpop.f32.mrf.mxu0
        %v1270 = vadd.f32 %v619, %v1269
        %v1271 = vpop.f32.mrf.mxu0
        %1272 = vmatprep.mubr.bf16.mxu0 0
        %1273 = vmatmul.mubr.bf16.gmra.mxu0 %v964
        %v1274 = vpop.f32.mrf.mxu0
        %v1275 = vadd.f32 %v619, %v1274
        %v1276 = vpop.f32.mrf.mxu0
        %v1277 = vpop.f32.mrf.mxu0
        %v1278 = vadd.f32 %v619, %v1277
        %v1279 = vpop.f32.mrf.mxu0
        %1280 = vmatprep.mubr.bf16.mxu0 0
        %1281 = vmatmul.mubr.bf16.gmra.mxu0 %v967
        %v1282 = vpop.f32.mrf.mxu0
        %v1283 = vadd.f32 %v619, %v1282
        %v1284 = vpop.f32.mrf.mxu0
        %v1285 = vpop.f32.mrf.mxu0
        %v1286 = vadd.f32 %v619, %v1285
        %v1287 = vpop.f32.mrf.mxu0
        %1288 = vmatprep.mubr.bf16.mxu0 0
        %1289 = vmatmul.mubr.bf16.gmra.mxu0 %v970
        %v1290 = vpop.f32.mrf.mxu0
        %v1291 = vadd.f32 %v619, %v1290
        %v1292 = vpop.f32.mrf.mxu0
        %v1293 = vpop.f32.mrf.mxu0
        %v1294 = vadd.f32 %v619, %v1293
        %v1295 = vpop.f32.mrf.mxu0
        %1296 = vmatprep.mubr.bf16.mxu0 0
        %1297 = vmatmul.mubr.bf16.gmra.mxu0 %v973
        %v1298 = vpop.f32.mrf.mxu0
        %v1299 = vadd.f32 %v619, %v1298
        %v1300 = vpop.f32.mrf.mxu0
        %v1301 = vpop.f32.mrf.mxu0
        %v1302 = vadd.f32 %v619, %v1301
        %v1303 = vpop.f32.mrf.mxu0
        %1304 = vmatprep.mubr.bf16.mxu0 0
        %1305 = vmatmul.mubr.bf16.gmra.mxu0 %v976
        %v1306 = vpop.f32.mrf.mxu0
        %v1307 = vadd.f32 %v619, %v1306
        %v1308 = vpop.f32.mrf.mxu0
        %v1309 = vpop.f32.mrf.mxu0
        %v1310 = vadd.f32 %v619, %v1309
        %v1311 = vpop.f32.mrf.mxu0
        %1312 = vmatprep.mubr.bf16.mxu0 0
        %1313 = vmatmul.mubr.bf16.gmra.mxu0 %v979
        %v1314 = vpop.f32.mrf.mxu0
        %v1315 = vadd.f32 %v619, %v1314
        %v1316 = vpop.f32.mrf.mxu0
        %v1317 = vpop.f32.mrf.mxu0
        %v1318 = vadd.f32 %v619, %v1317
        %v1319 = vpop.f32.mrf.mxu0
        %1320 = vmatprep.mubr.bf16.mxu0 0
        %1321 = vmatmul.mubr.bf16.gmra.mxu0 %v982
        %v1322 = vpop.f32.mrf.mxu0
        %v1323 = vadd.f32 %v619, %v1322
        %v1324 = vpop.f32.mrf.mxu0
        %v1325 = vpop.f32.mrf.mxu0
        %v1326 = vadd.f32 %v619, %v1325
        %v1327 = vpop.f32.mrf.mxu0
        %1328 = vmatprep.mubr.bf16.mxu0 0
        %1329 = vmatmul.mubr.bf16.gmra.mxu0 %v985
        %v1330 = vpop.f32.mrf.mxu0
        %v1331 = vadd.f32 %v619, %v1330
        %v1332 = vpop.f32.mrf.mxu0
        %v1333 = vpop.f32.mrf.mxu0
        %v1334 = vadd.f32 %v619, %v1333
        %v1335 = vpop.f32.mrf.mxu0
        %1336 = vmatprep.mubr.bf16.mxu0 0
        %1337 = vmatmul.mubr.bf16.gmra.mxu0 %v988
        %v1338 = vpop.f32.mrf.mxu0
        %v1339 = vadd.f32 %v619, %v1338
        %v1340 = vpop.f32.mrf.mxu0
        %v1341 = vpop.f32.mrf.mxu0
        %v1342 = vadd.f32 %v619, %v1341
        %v1343 = vpop.f32.mrf.mxu0
        %1344 = vmatprep.mubr.bf16.mxu0 0
        %1345 = vmatmul.mubr.bf16.gmra.mxu0 %v991
        %v1346 = vpop.f32.mrf.mxu0
        %v1347 = vadd.f32 %v619, %v1346
        %v1348 = vpop.f32.mrf.mxu0
        %v1349 = vpop.f32.mrf.mxu0
        %v1350 = vadd.f32 %v619, %v1349
        %v1351 = vpop.f32.mrf.mxu0
        %1352 = vmatprep.mubr.bf16.mxu0 0
        %1353 = vmatmul.mubr.bf16.gmra.mxu0 %v994
        %v1354 = vpop.f32.mrf.mxu0
        %v1355 = vadd.f32 %v619, %v1354
        %v1356 = vpop.f32.mrf.mxu0
        %v1357 = vpop.f32.mrf.mxu0
        %v1358 = vadd.f32 %v619, %v1357
        %v1359 = vpop.f32.mrf.mxu0
        %1360 = vmatprep.mubr.bf16.mxu0 0
        %1361 = vmatmul.mubr.bf16.gmra.mxu0 %v997
        %v1362 = vpop.f32.mrf.mxu0
        %v1363 = vadd.f32 %v619, %v1362
        %v1364 = vpop.f32.mrf.mxu0
        %v1365 = vpop.f32.mrf.mxu0
        %v1366 = vadd.f32 %v619, %v1365
        %v1367 = vpop.f32.mrf.mxu0
        %1368 = vmatprep.mubr.bf16.mxu0 0
        %1369 = vmatmul.mubr.bf16.gmra.mxu0 %v1000
        %v1370 = vpop.f32.mrf.mxu0
        %v1371 = vadd.f32 %v619, %v1370
        %v1372 = vpop.f32.mrf.mxu0
        %v1373 = vpop.f32.mrf.mxu0
        %v1374 = vadd.f32 %v619, %v1373
        %v1375 = vpop.f32.mrf.mxu0
        %1376 = vmatprep.mubr.bf16.mxu0 0
        %1377 = vmatmul.mubr.bf16.gmra.mxu0 %v1003
        %v1378 = vpop.f32.mrf.mxu0
        %v1379 = vadd.f32 %v619, %v1378
        %v1380 = vpop.f32.mrf.mxu0
        %v1381 = vpop.f32.mrf.mxu0
        %v1382 = vadd.f32 %v619, %v1381
        %v1383 = vpop.f32.mrf.mxu0
        %1384 = vmatprep.mubr.bf16.mxu0 0
        %1385 = vmatmul.mubr.bf16.gmra.mxu0 %v1006
        %v1386 = vpop.f32.mrf.mxu0
        %v1387 = vadd.f32 %v619, %v1386
        %v1388 = vpop.f32.mrf.mxu0
        %v1389 = vpop.f32.mrf.mxu0
        %v1390 = vadd.f32 %v619, %v1389
        %v1391 = vpop.f32.mrf.mxu0
        %1392 = vmatprep.mubr.bf16.mxu0 0
        %1393 = vmatmul.mubr.bf16.gmra.mxu0 %v1009
        %v1394 = vpop.f32.mrf.mxu0
        %v1395 = vadd.f32 %v619, %v1394
        %v1396 = vpop.f32.mrf.mxu0
        %v1397 = vpop.f32.mrf.mxu0
        %v1398 = vadd.f32 %v619, %v1397
        %v1399 = vpop.f32.mrf.mxu0
        %1400 = vmatprep.mubr.bf16.mxu0 0
        %1401 = vmatmul.mubr.bf16.gmra.mxu0 %v1012
        %v1402 = vpop.f32.mrf.mxu0
        %v1403 = vadd.f32 %v619, %v1402
        %v1404 = vpop.f32.mrf.mxu0
        %v1405 = vpop.f32.mrf.mxu0
        %v1406 = vadd.f32 %v619, %v1405
        %v1407 = vpop.f32.mrf.mxu0
        %1408 = vmatprep.mubr.bf16.mxu0 0
        %1409 = vmatmul.mubr.bf16.gmra.mxu0 %v1015
        %v1410 = vpop.f32.mrf.mxu0
        %v1411 = vadd.f32 %v619, %v1410
        %v1412 = vpop.f32.mrf.mxu0
        %v1413 = vpop.f32.mrf.mxu0
        %v1414 = vadd.f32 %v619, %v1413
        %v1415 = vpop.f32.mrf.mxu0
        %1416 = vmatprep.mubr.bf16.mxu0 0
        %1417 = vmatmul.mubr.bf16.gmra.mxu0 %v1018
        %v1418 = vpop.f32.mrf.mxu0
        %v1419 = vadd.f32 %v619, %v1418
        %v1420 = vpop.f32.mrf.mxu0
        %v1421 = vpop.f32.mrf.mxu0
        %v1422 = vadd.f32 %v619, %v1421
        %v1423 = vpop.f32.mrf.mxu0
        %1424 = vmatprep.mubr.bf16.mxu0 0
        %1425 = vmatmul.mubr.bf16.gmra.mxu0 %v1021
        %v1426 = vpop.f32.mrf.mxu0
        %v1427 = vadd.f32 %v619, %v1426
        %v1428 = vpop.f32.mrf.mxu0
        %v1429 = vpop.f32.mrf.mxu0
        %v1430 = vadd.f32 %v619, %v1429
        %v1431 = vpop.f32.mrf.mxu0
        %1432 = vmatprep.mubr.bf16.mxu0 0
        %1433 = vmatmul.mubr.bf16.gmra.mxu0 %v1024
        %v1434 = vpop.f32.mrf.mxu0
        %v1435 = vadd.f32 %v619, %v1434
        %v1436 = vpop.f32.mrf.mxu0
        %v1437 = vpop.f32.mrf.mxu0
        %v1438 = vadd.f32 %v619, %v1437
        %v1439 = vpop.f32.mrf.mxu0
        %1440 = vmatprep.mubr.bf16.mxu0 0
        %1441 = vmatmul.mubr.bf16.gmra.mxu0 %v1027
        %v1442 = vpop.f32.mrf.mxu0
        %v1443 = vadd.f32 %v619, %v1442
        %v1444 = vpop.f32.mrf.mxu0
        %v1445 = vpop.f32.mrf.mxu0
        %v1446 = vadd.f32 %v619, %v1445
        %v1447 = vpop.f32.mrf.mxu0
        %1448 = vmatprep.mubr.bf16.mxu0 0
        %1449 = vmatmul.mubr.bf16.gmra.mxu0 %v1030
        %v1450 = vpop.f32.mrf.mxu0
        %v1451 = vadd.f32 %v619, %v1450
        %v1452 = vpop.f32.mrf.mxu0
        %v1453 = vpop.f32.mrf.mxu0
        %v1454 = vadd.f32 %v619, %v1453
        %v1455 = vpop.f32.mrf.mxu0
        %1456 = vdwg.mxu0
        %v1457 = vsel %vm412, 1, 0
        %v1458 = vsel %vm413, 1, 0
        %v1459 = vsel %vm414, 1, 0
        %v1460 = vsel %vm415, 1, 0
        %v1461 = vsel %vm416, 1, 0
        %v1462 = vsel %vm417, 1, 0
        %v1463 = vsel %vm418, 1, 0
        %v1464 = vsel %vm419, 1, 0
        %v1465 = vsel %vm420, 1, 0
        %v1466 = vsel %vm421, 1, 0
        %v1467 = vsel %vm422, 1, 0
        %v1468 = vsel %vm423, 1, 0
        %v1469 = vsel %vm424, 1, 0
        %v1470 = vsel %vm425, 1, 0
        %v1471 = vsel %vm426, 1, 0
        %v1472 = vsel %vm427, 1, 0
        %v1473 = vsel %vm428, 1, 0
        %v1474 = vsel %vm429, 1, 0
        %v1475 = vsel %vm430, 1, 0
        %v1476 = vsel %vm431, 1, 0
        %v1477 = vsel %vm432, 1, 0
        %v1478 = vsel %vm433, 1, 0
        %v1479 = vsel %vm434, 1, 0
        %v1480 = vsel %vm435, 1, 0
        %v1481 = vsel %vm436, 1, 0
        %v1482 = vsel %vm437, 1, 0
        %v1483 = vsel %vm438, 1, 0
        %v1484 = vsel %vm439, 1, 0
        %v1485 = vsel %vm440, 1, 0
        %v1486 = vsel %vm441, 1, 0
        %v1487 = vsel %vm442, 1, 0
        %v1488 = vsel %vm443, 1, 0
        %v1489 = vsel %vm444, 1, 0
        %v1490 = vsel %vm445, 1, 0
        %v1491 = vsel %vm446, 1, 0
        %v1492 = vsel %vm447, 1, 0
        %v1493 = vsel %vm448, 1, 0
        %v1494 = vsel %vm449, 1, 0
        %v1495 = vsel %vm450, 1, 0
        %v1496 = vsel %vm451, 1, 0
        %v1497 = vsel %vm452, 1, 0
        %v1498 = vsel %vm453, 1, 0
        %v1499 = vsel %vm454, 1, 0
        %v1500 = vsel %vm455, 1, 0
        %v1501 = vsel %vm456, 1, 0
        %v1502 = vsel %vm457, 1, 0
        %v1503 = vsel %vm458, 1, 0
        %v1504 = vsel %vm459, 1, 0
        %v1505 = vsel %vm460, 1, 0
        %v1506 = vsel %vm461, 1, 0
        %v1507 = vsel %vm462, 1, 0
        %v1508 = vsel %vm463, 1, 0
        %v1509 = vsel %vm464, 1, 0
        %v1510 = vsel %vm465, 1, 0
        %v1511 = vsel %vm466, 1, 0
        %v1512 = vsel %vm467, 1, 0
        %v1513 = vsel %vm468, 1, 0
        %v1514 = vsel %vm469, 1, 0
        %v1515 = vsel %vm470, 1, 0
        %v1516 = vsel %vm471, 1, 0
        %v1517 = vsel %vm472, 1, 0
        %v1518 = vsel %vm473, 1, 0
        %v1519 = vsel %vm474, 1, 0
        %v1520 = vsel %vm475, 1, 0
        %v1521 = vsel %vm476, 1, 0
        %v1522 = vsel %vm477, 1, 0
        %v1523 = vsel %vm478, 1, 0
        %v1524 = vsel %vm479, 1, 0
        %v1525 = vsel %vm480, 1, 0
        %v1526 = vsel %vm481, 1, 0
        %v1527 = vsel %vm482, 1, 0
        %v1528 = vsel %vm483, 1, 0
        %v1529 = vsel %vm484, 1, 0
        %v1530 = vsel %vm485, 1, 0
        %v1531 = vsel %vm486, 1, 0
        %v1532 = vsel %vm487, 1, 0
        %v1533 = vsel %vm488, 1, 0
        %v1534 = vsel %vm489, 1, 0
        %v1535 = vsel %vm490, 1, 0
        %v1536 = vsel %vm491, 1, 0
        %v1537 = vsel %vm492, 1, 0
        %v1538 = vsel %vm493, 1, 0
        %v1539 = vsel %vm494, 1, 0
        %v1540 = vsel %vm495, 1, 0
        %v1541 = vsel %vm496, 1, 0
        %v1542 = vsel %vm497, 1, 0
        %v1543 = vsel %vm498, 1, 0
        %v1544 = vsel %vm499, 1, 0
        %v1545 = vsel %vm500, 1, 0
        %v1546 = vsel %vm501, 1, 0
        %v1547 = vsel %vm502, 1, 0
        %v1548 = vsel %vm503, 1, 0
        %v1549 = vsel %vm504, 1, 0
        %v1550 = vsel %vm505, 1, 0
        %v1551 = vsel %vm506, 1, 0
        %v1552 = vsel %vm507, 1, 0
        %v1553 = vsel %vm508, 1, 0
        %v1554 = vsel %vm509, 1, 0
        %1555 = vset.pattern.permute.xlu0 0
        %1556 = vperm.xlu0 %1555, %v1457
        %v1557 = vpop.permute.xlu0 %1556
        %1558 = vset.pattern.permute.xlu0 0
        %1559 = vperm.xlu0 %1558, %v1458
        %v1560 = vpop.permute.xlu0 %1559
        %1561 = vset.pattern.permute.xlu0 0
        %1562 = vperm.xlu0 %1561, %v1459
        %v1563 = vpop.permute.xlu0 %1562
        %1564 = vset.pattern.permute.xlu0 0
        %1565 = vperm.xlu0 %1564, %v1460
        %v1566 = vpop.permute.xlu0 %1565
        %1567 = vset.pattern.permute.xlu0 0
        %1568 = vperm.xlu0 %1567, %v1461
        %v1569 = vpop.permute.xlu0 %1568
        %1570 = vset.pattern.permute.xlu0 0
        %1571 = vperm.xlu0 %1570, %v1462
        %v1572 = vpop.permute.xlu0 %1571
        %1573 = vset.pattern.permute.xlu0 0
        %1574 = vperm.xlu0 %1573, %v1463
        %v1575 = vpop.permute.xlu0 %1574
        %1576 = vset.pattern.permute.xlu0 0
        %1577 = vperm.xlu0 %1576, %v1464
        %v1578 = vpop.permute.xlu0 %1577
        %1579 = vset.pattern.permute.xlu0 0
        %1580 = vperm.xlu0 %1579, %v1465
        %v1581 = vpop.permute.xlu0 %1580
        %1582 = vset.pattern.permute.xlu0 0
        %1583 = vperm.xlu0 %1582, %v1466
        %v1584 = vpop.permute.xlu0 %1583
        %1585 = vset.pattern.permute.xlu0 0
        %1586 = vperm.xlu0 %1585, %v1467
        %v1587 = vpop.permute.xlu0 %1586
        %1588 = vset.pattern.permute.xlu0 0
        %1589 = vperm.xlu0 %1588, %v1468
        %v1590 = vpop.permute.xlu0 %1589
        %1591 = vset.pattern.permute.xlu0 0
        %1592 = vperm.xlu0 %1591, %v1469
        %v1593 = vpop.permute.xlu0 %1592
        %1594 = vset.pattern.permute.xlu0 0
        %1595 = vperm.xlu0 %1594, %v1470
        %v1596 = vpop.permute.xlu0 %1595
        %1597 = vset.pattern.permute.xlu0 0
        %1598 = vperm.xlu0 %1597, %v1471
        %v1599 = vpop.permute.xlu0 %1598
        %1600 = vset.pattern.permute.xlu0 0
        %1601 = vperm.xlu0 %1600, %v1472
        %v1602 = vpop.permute.xlu0 %1601
        %1603 = vset.pattern.permute.xlu0 0
        %1604 = vperm.xlu0 %1603, %v1473
        %v1605 = vpop.permute.xlu0 %1604
        %1606 = vset.pattern.permute.xlu0 0
        %1607 = vperm.xlu0 %1606, %v1474
        %v1608 = vpop.permute.xlu0 %1607
        %1609 = vset.pattern.permute.xlu0 0
        %1610 = vperm.xlu0 %1609, %v1475
        %v1611 = vpop.permute.xlu0 %1610
        %1612 = vset.pattern.permute.xlu0 0
        %1613 = vperm.xlu0 %1612, %v1476
        %v1614 = vpop.permute.xlu0 %1613
        %1615 = vset.pattern.permute.xlu0 0
        %1616 = vperm.xlu0 %1615, %v1477
        %v1617 = vpop.permute.xlu0 %1616
        %1618 = vset.pattern.permute.xlu0 0
        %1619 = vperm.xlu0 %1618, %v1478
        %v1620 = vpop.permute.xlu0 %1619
        %1621 = vset.pattern.permute.xlu0 0
        %1622 = vperm.xlu0 %1621, %v1479
        %v1623 = vpop.permute.xlu0 %1622
        %1624 = vset.pattern.permute.xlu0 0
        %1625 = vperm.xlu0 %1624, %v1480
        %v1626 = vpop.permute.xlu0 %1625
        %1627 = vset.pattern.permute.xlu0 0
        %1628 = vperm.xlu0 %1627, %v1481
        %v1629 = vpop.permute.xlu0 %1628
        %1630 = vset.pattern.permute.xlu0 0
        %1631 = vperm.xlu0 %1630, %v1482
        %v1632 = vpop.permute.xlu0 %1631
        %1633 = vset.pattern.permute.xlu0 0
        %1634 = vperm.xlu0 %1633, %v1483
        %v1635 = vpop.permute.xlu0 %1634
        %1636 = vset.pattern.permute.xlu0 0
        %1637 = vperm.xlu0 %1636, %v1484
        %v1638 = vpop.permute.xlu0 %1637
        %1639 = vset.pattern.permute.xlu0 0
        %1640 = vperm.xlu0 %1639, %v1485
        %v1641 = vpop.permute.xlu0 %1640
        %1642 = vset.pattern.permute.xlu0 0
        %1643 = vperm.xlu0 %1642, %v1486
        %v1644 = vpop.permute.xlu0 %1643
        %1645 = vset.pattern.permute.xlu0 0
        %1646 = vperm.xlu0 %1645, %v1487
        %v1647 = vpop.permute.xlu0 %1646
        %1648 = vset.pattern.permute.xlu0 0
        %1649 = vperm.xlu0 %1648, %v1488
        %v1650 = vpop.permute.xlu0 %1649
        %1651 = vset.pattern.permute.xlu0 0
        %1652 = vperm.xlu0 %1651, %v1489
        %v1653 = vpop.permute.xlu0 %1652
        %1654 = vset.pattern.permute.xlu0 0
        %1655 = vperm.xlu0 %1654, %v1490
        %v1656 = vpop.permute.xlu0 %1655
        %1657 = vset.pattern.permute.xlu0 0
        %1658 = vperm.xlu0 %1657, %v1491
        %v1659 = vpop.permute.xlu0 %1658
        %1660 = vset.pattern.permute.xlu0 0
        %1661 = vperm.xlu0 %1660, %v1492
        %v1662 = vpop.permute.xlu0 %1661
        %1663 = vset.pattern.permute.xlu0 0
        %1664 = vperm.xlu0 %1663, %v1493
        %v1665 = vpop.permute.xlu0 %1664
        %1666 = vset.pattern.permute.xlu0 0
        %1667 = vperm.xlu0 %1666, %v1494
        %v1668 = vpop.permute.xlu0 %1667
        %1669 = vset.pattern.permute.xlu0 0
        %1670 = vperm.xlu0 %1669, %v1495
        %v1671 = vpop.permute.xlu0 %1670
        %1672 = vset.pattern.permute.xlu0 0
        %1673 = vperm.xlu0 %1672, %v1496
        %v1674 = vpop.permute.xlu0 %1673
        %1675 = vset.pattern.permute.xlu0 0
        %1676 = vperm.xlu0 %1675, %v1497
        %v1677 = vpop.permute.xlu0 %1676
        %1678 = vset.pattern.permute.xlu0 0
        %1679 = vperm.xlu0 %1678, %v1498
        %v1680 = vpop.permute.xlu0 %1679
        %1681 = vset.pattern.permute.xlu0 0
        %1682 = vperm.xlu0 %1681, %v1499
        %v1683 = vpop.permute.xlu0 %1682
        %1684 = vset.pattern.permute.xlu0 0
        %1685 = vperm.xlu0 %1684, %v1500
        %v1686 = vpop.permute.xlu0 %1685
        %1687 = vset.pattern.permute.xlu0 0
        %1688 = vperm.xlu0 %1687, %v1501
        %v1689 = vpop.permute.xlu0 %1688
        %1690 = vset.pattern.permute.xlu0 0
        %1691 = vperm.xlu0 %1690, %v1502
        %v1692 = vpop.permute.xlu0 %1691
        %1693 = vset.pattern.permute.xlu0 0
        %1694 = vperm.xlu0 %1693, %v1503
        %v1695 = vpop.permute.xlu0 %1694
        %1696 = vset.pattern.permute.xlu0 0
        %1697 = vperm.xlu0 %1696, %v1504
        %v1698 = vpop.permute.xlu0 %1697
        %1699 = vset.pattern.permute.xlu0 0
        %1700 = vperm.xlu0 %1699, %v1505
        %v1701 = vpop.permute.xlu0 %1700
        %1702 = vset.pattern.permute.xlu0 0
        %1703 = vperm.xlu0 %1702, %v1506
        %v1704 = vpop.permute.xlu0 %1703
        %1705 = vset.pattern.permute.xlu0 0
        %1706 = vperm.xlu0 %1705, %v1507
        %v1707 = vpop.permute.xlu0 %1706
        %1708 = vset.pattern.permute.xlu0 0
        %1709 = vperm.xlu0 %1708, %v1508
        %v1710 = vpop.permute.xlu0 %1709
        %1711 = vset.pattern.permute.xlu0 0
        %1712 = vperm.xlu0 %1711, %v1509
        %v1713 = vpop.permute.xlu0 %1712
        %1714 = vset.pattern.permute.xlu0 0
        %1715 = vperm.xlu0 %1714, %v1510
        %v1716 = vpop.permute.xlu0 %1715
        %1717 = vset.pattern.permute.xlu0 0
        %1718 = vperm.xlu0 %1717, %v1511
        %v1719 = vpop.permute.xlu0 %1718
        %1720 = vset.pattern.permute.xlu0 0
        %1721 = vperm.xlu0 %1720, %v1512
        %v1722 = vpop.permute.xlu0 %1721
        %1723 = vset.pattern.permute.xlu0 0
        %1724 = vperm.xlu0 %1723, %v1513
        %v1725 = vpop.permute.xlu0 %1724
        %1726 = vset.pattern.permute.xlu0 0
        %1727 = vperm.xlu0 %1726, %v1514
        %v1728 = vpop.permute.xlu0 %1727
        %1729 = vset.pattern.permute.xlu0 0
        %1730 = vperm.xlu0 %1729, %v1515
        %v1731 = vpop.permute.xlu0 %1730
        %1732 = vset.pattern.permute.xlu0 0
        %1733 = vperm.xlu0 %1732, %v1516
        %v1734 = vpop.permute.xlu0 %1733
        %1735 = vset.pattern.permute.xlu0 0
        %1736 = vperm.xlu0 %1735, %v1517
        %v1737 = vpop.permute.xlu0 %1736
        %1738 = vset.pattern.permute.xlu0 0
        %1739 = vperm.xlu0 %1738, %v1518
        %v1740 = vpop.permute.xlu0 %1739
        %1741 = vset.pattern.permute.xlu0 0
        %1742 = vperm.xlu0 %1741, %v1519
        %v1743 = vpop.permute.xlu0 %1742
        %1744 = vset.pattern.permute.xlu0 0
        %1745 = vperm.xlu0 %1744, %v1520
        %v1746 = vpop.permute.xlu0 %1745
        %1747 = vset.pattern.permute.xlu0 0
        %1748 = vperm.xlu0 %1747, %v1521
        %v1749 = vpop.permute.xlu0 %1748
        %1750 = vset.pattern.permute.xlu0 0
        %1751 = vperm.xlu0 %1750, %v1522
        %v1752 = vpop.permute.xlu0 %1751
        %1753 = vset.pattern.permute.xlu0 0
        %1754 = vperm.xlu0 %1753, %v1523
        %v1755 = vpop.permute.xlu0 %1754
        %1756 = vset.pattern.permute.xlu0 0
        %1757 = vperm.xlu0 %1756, %v1524
        %v1758 = vpop.permute.xlu0 %1757
        %1759 = vset.pattern.permute.xlu0 0
        %1760 = vperm.xlu0 %1759, %v1525
        %v1761 = vpop.permute.xlu0 %1760
        %1762 = vset.pattern.permute.xlu0 0
        %1763 = vperm.xlu0 %1762, %v1526
        %v1764 = vpop.permute.xlu0 %1763
        %1765 = vset.pattern.permute.xlu0 0
        %1766 = vperm.xlu0 %1765, %v1527
        %v1767 = vpop.permute.xlu0 %1766
        %1768 = vset.pattern.permute.xlu0 0
        %1769 = vperm.xlu0 %1768, %v1528
        %v1770 = vpop.permute.xlu0 %1769
        %1771 = vset.pattern.permute.xlu0 0
        %1772 = vperm.xlu0 %1771, %v1529
        %v1773 = vpop.permute.xlu0 %1772
        %1774 = vset.pattern.permute.xlu0 0
        %1775 = vperm.xlu0 %1774, %v1530
        %v1776 = vpop.permute.xlu0 %1775
        %1777 = vset.pattern.permute.xlu0 0
        %1778 = vperm.xlu0 %1777, %v1531
        %v1779 = vpop.permute.xlu0 %1778
        %1780 = vset.pattern.permute.xlu0 0
        %1781 = vperm.xlu0 %1780, %v1532
        %v1782 = vpop.permute.xlu0 %1781
        %1783 = vset.pattern.permute.xlu0 0
        %1784 = vperm.xlu0 %1783, %v1533
        %v1785 = vpop.permute.xlu0 %1784
        %1786 = vset.pattern.permute.xlu0 0
        %1787 = vperm.xlu0 %1786, %v1534
        %v1788 = vpop.permute.xlu0 %1787
        %1789 = vset.pattern.permute.xlu0 0
        %1790 = vperm.xlu0 %1789, %v1535
        %v1791 = vpop.permute.xlu0 %1790
        %1792 = vset.pattern.permute.xlu0 0
        %1793 = vperm.xlu0 %1792, %v1536
        %v1794 = vpop.permute.xlu0 %1793
        %1795 = vset.pattern.permute.xlu0 0
        %1796 = vperm.xlu0 %1795, %v1537
        %v1797 = vpop.permute.xlu0 %1796
        %1798 = vset.pattern.permute.xlu0 0
        %1799 = vperm.xlu0 %1798, %v1538
        %v1800 = vpop.permute.xlu0 %1799
        %1801 = vset.pattern.permute.xlu0 0
        %1802 = vperm.xlu0 %1801, %v1539
        %v1803 = vpop.permute.xlu0 %1802
        %1804 = vset.pattern.permute.xlu0 0
        %1805 = vperm.xlu0 %1804, %v1540
        %v1806 = vpop.permute.xlu0 %1805
        %1807 = vset.pattern.permute.xlu0 0
        %1808 = vperm.xlu0 %1807, %v1541
        %v1809 = vpop.permute.xlu0 %1808
        %1810 = vset.pattern.permute.xlu0 0
        %1811 = vperm.xlu0 %1810, %v1542
        %v1812 = vpop.permute.xlu0 %1811
        %1813 = vset.pattern.permute.xlu0 0
        %1814 = vperm.xlu0 %1813, %v1543
        %v1815 = vpop.permute.xlu0 %1814
        %1816 = vset.pattern.permute.xlu0 0
        %1817 = vperm.xlu0 %1816, %v1544
        %v1818 = vpop.permute.xlu0 %1817
        %1819 = vset.pattern.permute.xlu0 0
        %1820 = vperm.xlu0 %1819, %v1545
        %v1821 = vpop.permute.xlu0 %1820
        %1822 = vset.pattern.permute.xlu0 0
        %1823 = vperm.xlu0 %1822, %v1546
        %v1824 = vpop.permute.xlu0 %1823
        %1825 = vset.pattern.permute.xlu0 0
        %1826 = vperm.xlu0 %1825, %v1547
        %v1827 = vpop.permute.xlu0 %1826
        %1828 = vset.pattern.permute.xlu0 0
        %1829 = vperm.xlu0 %1828, %v1548
        %v1830 = vpop.permute.xlu0 %1829
        %1831 = vset.pattern.permute.xlu0 0
        %1832 = vperm.xlu0 %1831, %v1549
        %v1833 = vpop.permute.xlu0 %1832
        %1834 = vset.pattern.permute.xlu0 0
        %1835 = vperm.xlu0 %1834, %v1550
        %v1836 = vpop.permute.xlu0 %1835
        %1837 = vset.pattern.permute.xlu0 0
        %1838 = vperm.xlu0 %1837, %v1551
        %v1839 = vpop.permute.xlu0 %1838
        %1840 = vset.pattern.permute.xlu0 0
        %1841 = vperm.xlu0 %1840, %v1552
        %v1842 = vpop.permute.xlu0 %1841
        %1843 = vset.pattern.permute.xlu0 0
        %1844 = vperm.xlu0 %1843, %v1553
        %v1845 = vpop.permute.xlu0 %1844
        %1846 = vset.pattern.permute.xlu0 0
        %1847 = vperm.xlu0 %1846, %v1554
        %v1848 = vpop.permute.xlu0 %1847
        %vm1849 = vcmp.eq.s32.totalorder %v1557, 1
        %vm1850 = vcmp.eq.s32.totalorder %v1560, 1
        %vm1851 = vcmp.eq.s32.totalorder %v1563, 1
        %vm1852 = vcmp.eq.s32.totalorder %v1566, 1
        %vm1853 = vcmp.eq.s32.totalorder %v1569, 1
        %vm1854 = vcmp.eq.s32.totalorder %v1572, 1
        %vm1855 = vcmp.eq.s32.totalorder %v1575, 1
        %vm1856 = vcmp.eq.s32.totalorder %v1578, 1
        %vm1857 = vcmp.eq.s32.totalorder %v1581, 1
        %vm1858 = vcmp.eq.s32.totalorder %v1584, 1
        %vm1859 = vcmp.eq.s32.totalorder %v1587, 1
        %vm1860 = vcmp.eq.s32.totalorder %v1590, 1
        %vm1861 = vcmp.eq.s32.totalorder %v1593, 1
        %vm1862 = vcmp.eq.s32.totalorder %v1596, 1
        %vm1863 = vcmp.eq.s32.totalorder %v1599, 1
        %vm1864 = vcmp.eq.s32.totalorder %v1602, 1
        %vm1865 = vcmp.eq.s32.totalorder %v1605, 1
        %vm1866 = vcmp.eq.s32.totalorder %v1608, 1
        %vm1867 = vcmp.eq.s32.totalorder %v1611, 1
        %vm1868 = vcmp.eq.s32.totalorder %v1614, 1
        %vm1869 = vcmp.eq.s32.totalorder %v1617, 1
        %vm1870 = vcmp.eq.s32.totalorder %v1620, 1
        %vm1871 = vcmp.eq.s32.totalorder %v1623, 1
        %vm1872 = vcmp.eq.s32.totalorder %v1626, 1
        %vm1873 = vcmp.eq.s32.totalorder %v1629, 1
        %vm1874 = vcmp.eq.s32.totalorder %v1632, 1
        %vm1875 = vcmp.eq.s32.totalorder %v1635, 1
        %vm1876 = vcmp.eq.s32.totalorder %v1638, 1
        %vm1877 = vcmp.eq.s32.totalorder %v1641, 1
        %vm1878 = vcmp.eq.s32.totalorder %v1644, 1
        %vm1879 = vcmp.eq.s32.totalorder %v1647, 1
        %vm1880 = vcmp.eq.s32.totalorder %v1650, 1
        %vm1881 = vcmp.eq.s32.totalorder %v1653, 1
        %vm1882 = vcmp.eq.s32.totalorder %v1656, 1
        %vm1883 = vcmp.eq.s32.totalorder %v1659, 1
        %vm1884 = vcmp.eq.s32.totalorder %v1662, 1
        %vm1885 = vcmp.eq.s32.totalorder %v1665, 1
        %vm1886 = vcmp.eq.s32.totalorder %v1668, 1
        %vm1887 = vcmp.eq.s32.totalorder %v1671, 1
        %vm1888 = vcmp.eq.s32.totalorder %v1674, 1
        %vm1889 = vcmp.eq.s32.totalorder %v1677, 1
        %vm1890 = vcmp.eq.s32.totalorder %v1680, 1
        %vm1891 = vcmp.eq.s32.totalorder %v1683, 1
        %vm1892 = vcmp.eq.s32.totalorder %v1686, 1
        %vm1893 = vcmp.eq.s32.totalorder %v1689, 1
        %vm1894 = vcmp.eq.s32.totalorder %v1692, 1
        %vm1895 = vcmp.eq.s32.totalorder %v1695, 1
        %vm1896 = vcmp.eq.s32.totalorder %v1698, 1
        %vm1897 = vcmp.eq.s32.totalorder %v1701, 1
        %vm1898 = vcmp.eq.s32.totalorder %v1704, 1
        %vm1899 = vcmp.eq.s32.totalorder %v1707, 1
        %vm1900 = vcmp.eq.s32.totalorder %v1710, 1
        %vm1901 = vcmp.eq.s32.totalorder %v1713, 1
        %vm1902 = vcmp.eq.s32.totalorder %v1716, 1
        %vm1903 = vcmp.eq.s32.totalorder %v1719, 1
        %vm1904 = vcmp.eq.s32.totalorder %v1722, 1
        %vm1905 = vcmp.eq.s32.totalorder %v1725, 1
        %vm1906 = vcmp.eq.s32.totalorder %v1728, 1
        %vm1907 = vcmp.eq.s32.totalorder %v1731, 1
        %vm1908 = vcmp.eq.s32.totalorder %v1734, 1
        %vm1909 = vcmp.eq.s32.totalorder %v1737, 1
        %vm1910 = vcmp.eq.s32.totalorder %v1740, 1
        %vm1911 = vcmp.eq.s32.totalorder %v1743, 1
        %vm1912 = vcmp.eq.s32.totalorder %v1746, 1
        %vm1913 = vcmp.eq.s32.totalorder %v1749, 1
        %vm1914 = vcmp.eq.s32.totalorder %v1752, 1
        %vm1915 = vcmp.eq.s32.totalorder %v1755, 1
        %vm1916 = vcmp.eq.s32.totalorder %v1758, 1
        %vm1917 = vcmp.eq.s32.totalorder %v1761, 1
        %vm1918 = vcmp.eq.s32.totalorder %v1764, 1
        %vm1919 = vcmp.eq.s32.totalorder %v1767, 1
        %vm1920 = vcmp.eq.s32.totalorder %v1770, 1
        %vm1921 = vcmp.eq.s32.totalorder %v1773, 1
        %vm1922 = vcmp.eq.s32.totalorder %v1776, 1
        %vm1923 = vcmp.eq.s32.totalorder %v1779, 1
        %vm1924 = vcmp.eq.s32.totalorder %v1782, 1
        %vm1925 = vcmp.eq.s32.totalorder %v1785, 1
        %vm1926 = vcmp.eq.s32.totalorder %v1788, 1
        %vm1927 = vcmp.eq.s32.totalorder %v1791, 1
        %vm1928 = vcmp.eq.s32.totalorder %v1794, 1
        %vm1929 = vcmp.eq.s32.totalorder %v1797, 1
        %vm1930 = vcmp.eq.s32.totalorder %v1800, 1
        %vm1931 = vcmp.eq.s32.totalorder %v1803, 1
        %vm1932 = vcmp.eq.s32.totalorder %v1806, 1
        %vm1933 = vcmp.eq.s32.totalorder %v1809, 1
        %vm1934 = vcmp.eq.s32.totalorder %v1812, 1
        %vm1935 = vcmp.eq.s32.totalorder %v1815, 1
        %vm1936 = vcmp.eq.s32.totalorder %v1818, 1
        %vm1937 = vcmp.eq.s32.totalorder %v1821, 1
        %vm1938 = vcmp.eq.s32.totalorder %v1824, 1
        %vm1939 = vcmp.eq.s32.totalorder %v1827, 1
        %vm1940 = vcmp.eq.s32.totalorder %v1830, 1
        %vm1941 = vcmp.eq.s32.totalorder %v1833, 1
        %vm1942 = vcmp.eq.s32.totalorder %v1836, 1
        %vm1943 = vcmp.eq.s32.totalorder %v1839, 1
        %vm1944 = vcmp.eq.s32.totalorder %v1842, 1
        %vm1945 = vcmp.eq.s32.totalorder %v1845, 1
        %vm1946 = vcmp.eq.s32.totalorder %v1848, 1
        %v1947 = vsel %vm1849, %v1067, 0.0
        %v1948 = vsel %vm1850, %v1070, 0.0
        %v1949 = vsel %vm1851, %v1075, 0.0
        %v1950 = vsel %vm1852, %v1078, 0.0
        %v1951 = vsel %vm1853, %v1083, 0.0
        %v1952 = vsel %vm1854, %v1086, 0.0
        %v1953 = vsel %vm1855, %v1091, 0.0
        %v1954 = vsel %vm1856, %v1094, 0.0
        %v1955 = vsel %vm1857, %v1099, 0.0
        %v1956 = vsel %vm1858, %v1102, 0.0
        %v1957 = vsel %vm1859, %v1107, 0.0
        %v1958 = vsel %vm1860, %v1110, 0.0
        %v1959 = vsel %vm1861, %v1115, 0.0
        %v1960 = vsel %vm1862, %v1118, 0.0
        %v1961 = vsel %vm1863, %v1123, 0.0
        %v1962 = vsel %vm1864, %v1126, 0.0
        %v1963 = vsel %vm1865, %v1131, 0.0
        %v1964 = vsel %vm1866, %v1134, 0.0
        %v1965 = vsel %vm1867, %v1139, 0.0
        %v1966 = vsel %vm1868, %v1142, 0.0
        %v1967 = vsel %vm1869, %v1147, 0.0
        %v1968 = vsel %vm1870, %v1150, 0.0
        %v1969 = vsel %vm1871, %v1155, 0.0
        %v1970 = vsel %vm1872, %v1158, 0.0
        %v1971 = vsel %vm1873, %v1163, 0.0
        %v1972 = vsel %vm1874, %v1166, 0.0
        %v1973 = vsel %vm1875, %v1171, 0.0
        %v1974 = vsel %vm1876, %v1174, 0.0
        %v1975 = vsel %vm1877, %v1179, 0.0
        %v1976 = vsel %vm1878, %v1182, 0.0
        %v1977 = vsel %vm1879, %v1187, 0.0
        %v1978 = vsel %vm1880, %v1190, 0.0
        %v1979 = vsel %vm1881, %v1195, 0.0
        %v1980 = vsel %vm1882, %v1198, 0.0
        %v1981 = vsel %vm1883, %v1203, 0.0
        %v1982 = vsel %vm1884, %v1206, 0.0
        %v1983 = vsel %vm1885, %v1211, 0.0
        %v1984 = vsel %vm1886, %v1214, 0.0
        %v1985 = vsel %vm1887, %v1219, 0.0
        %v1986 = vsel %vm1888, %v1222, 0.0
        %v1987 = vsel %vm1889, %v1227, 0.0
        %v1988 = vsel %vm1890, %v1230, 0.0
        %v1989 = vsel %vm1891, %v1235, 0.0
        %v1990 = vsel %vm1892, %v1238, 0.0
        %v1991 = vsel %vm1893, %v1243, 0.0
        %v1992 = vsel %vm1894, %v1246, 0.0
        %v1993 = vsel %vm1895, %v1251, 0.0
        %v1994 = vsel %vm1896, %v1254, 0.0
        %v1995 = vsel %vm1897, %v1259, 0.0
        %v1996 = vsel %vm1898, %v1262, 0.0
        %v1997 = vsel %vm1899, %v1267, 0.0
        %v1998 = vsel %vm1900, %v1270, 0.0
        %v1999 = vsel %vm1901, %v1275, 0.0
        %v2000 = vsel %vm1902, %v1278, 0.0
        %v2001 = vsel %vm1903, %v1283, 0.0
        %v2002 = vsel %vm1904, %v1286, 0.0
        %v2003 = vsel %vm1905, %v1291, 0.0
        %v2004 = vsel %vm1906, %v1294, 0.0
        %v2005 = vsel %vm1907, %v1299, 0.0
        %v2006 = vsel %vm1908, %v1302, 0.0
        %v2007 = vsel %vm1909, %v1307, 0.0
        %v2008 = vsel %vm1910, %v1310, 0.0
        %v2009 = vsel %vm1911, %v1315, 0.0
        %v2010 = vsel %vm1912, %v1318, 0.0
        %v2011 = vsel %vm1913, %v1323, 0.0
        %v2012 = vsel %vm1914, %v1326, 0.0
        %v2013 = vsel %vm1915, %v1331, 0.0
        %v2014 = vsel %vm1916, %v1334, 0.0
        %v2015 = vsel %vm1917, %v1339, 0.0
        %v2016 = vsel %vm1918, %v1342, 0.0
        %v2017 = vsel %vm1919, %v1347, 0.0
        %v2018 = vsel %vm1920, %v1350, 0.0
        %v2019 = vsel %vm1921, %v1355, 0.0
        %v2020 = vsel %vm1922, %v1358, 0.0
        %v2021 = vsel %vm1923, %v1363, 0.0
        %v2022 = vsel %vm1924, %v1366, 0.0
        %v2023 = vsel %vm1925, %v1371, 0.0
        %v2024 = vsel %vm1926, %v1374, 0.0
        %v2025 = vsel %vm1927, %v1379, 0.0
        %v2026 = vsel %vm1928, %v1382, 0.0
        %v2027 = vsel %vm1929, %v1387, 0.0
        %v2028 = vsel %vm1930, %v1390, 0.0
        %v2029 = vsel %vm1931, %v1395, 0.0
        %v2030 = vsel %vm1932, %v1398, 0.0
        %v2031 = vsel %vm1933, %v1403, 0.0
        %v2032 = vsel %vm1934, %v1406, 0.0
        %v2033 = vsel %vm1935, %v1411, 0.0
        %v2034 = vsel %vm1936, %v1414, 0.0
        %v2035 = vsel %vm1937, %v1419, 0.0
        %v2036 = vsel %vm1938, %v1422, 0.0
        %v2037 = vsel %vm1939, %v1427, 0.0
        %v2038 = vsel %vm1940, %v1430, 0.0
        %v2039 = vsel %vm1941, %v1435, 0.0
        %v2040 = vsel %vm1942, %v1438, 0.0
        %v2041 = vsel %vm1943, %v1443, 0.0
        %v2042 = vsel %vm1944, %v1446, 0.0
        %v2043 = vsel %vm1945, %v1451, 0.0
        %v2044 = vsel %vm1946, %v1454, 0.0
        %v2045 = vadd.f32 %v1947, %v1948
        %v2046 = vadd.f32 %v2045, %v1949
        %v2047 = vadd.f32 %v2046, %v1950
        %v2048 = vadd.f32 %v2047, %v1951
        %v2049 = vadd.f32 %v2048, %v1952
        %v2050 = vadd.f32 %v2049, %v1953
        %v2051 = vadd.f32 %v2050, %v1954
        %v2052 = vadd.f32 %v2051, %v1955
        %v2053 = vadd.f32 %v2052, %v1956
        %v2054 = vadd.f32 %v2053, %v1957
        %v2055 = vadd.f32 %v2054, %v1958
        %v2056 = vadd.f32 %v2055, %v1959
        %v2057 = vadd.f32 %v2056, %v1960
        %v2058 = vadd.f32 %v2057, %v1961
        %v2059 = vadd.f32 %v2058, %v1962
        %v2060 = vadd.f32 %v2059, %v1963
        %v2061 = vadd.f32 %v2060, %v1964
        %v2062 = vadd.f32 %v2061, %v1965
        %v2063 = vadd.f32 %v2062, %v1966
        %v2064 = vadd.f32 %v2063, %v1967
        %v2065 = vadd.f32 %v2064, %v1968
        %v2066 = vadd.f32 %v2065, %v1969
        %v2067 = vadd.f32 %v2066, %v1970
        %v2068 = vadd.f32 %v2067, %v1971
        %v2069 = vadd.f32 %v2068, %v1972
        %v2070 = vadd.f32 %v2069, %v1973
        %v2071 = vadd.f32 %v2070, %v1974
        %v2072 = vadd.f32 %v2071, %v1975
        %v2073 = vadd.f32 %v2072, %v1976
        %v2074 = vadd.f32 %v2073, %v1977
        %v2075 = vadd.f32 %v2074, %v1978
        %v2076 = vadd.f32 %v2075, %v1979
        %v2077 = vadd.f32 %v2076, %v1980
        %v2078 = vadd.f32 %v2077, %v1981
        %v2079 = vadd.f32 %v2078, %v1982
        %v2080 = vadd.f32 %v2079, %v1983
        %v2081 = vadd.f32 %v2080, %v1984
        %v2082 = vadd.f32 %v2081, %v1985
        %v2083 = vadd.f32 %v2082, %v1986
        %v2084 = vadd.f32 %v2083, %v1987
        %v2085 = vadd.f32 %v2084, %v1988
        %v2086 = vadd.f32 %v2085, %v1989
        %v2087 = vadd.f32 %v2086, %v1990
        %v2088 = vadd.f32 %v2087, %v1991
        %v2089 = vadd.f32 %v2088, %v1992
        %v2090 = vadd.f32 %v2089, %v1993
        %v2091 = vadd.f32 %v2090, %v1994
        %v2092 = vadd.f32 %v2091, %v1995
        %v2093 = vadd.f32 %v2092, %v1996
        %v2094 = vadd.f32 %v2093, %v1997
        %v2095 = vadd.f32 %v2094, %v1998
        %v2096 = vadd.f32 %v2095, %v1999
        %v2097 = vadd.f32 %v2096, %v2000
        %v2098 = vadd.f32 %v2097, %v2001
        %v2099 = vadd.f32 %v2098, %v2002
        %v2100 = vadd.f32 %v2099, %v2003
        %v2101 = vadd.f32 %v2100, %v2004
        %v2102 = vadd.f32 %v2101, %v2005
        %v2103 = vadd.f32 %v2102, %v2006
        %v2104 = vadd.f32 %v2103, %v2007
        %v2105 = vadd.f32 %v2104, %v2008
        %v2106 = vadd.f32 %v2105, %v2009
        %v2107 = vadd.f32 %v2106, %v2010
        %v2108 = vadd.f32 %v2107, %v2011
        %v2109 = vadd.f32 %v2108, %v2012
        %v2110 = vadd.f32 %v2109, %v2013
        %v2111 = vadd.f32 %v2110, %v2014
        %v2112 = vadd.f32 %v2111, %v2015
        %v2113 = vadd.f32 %v2112, %v2016
        %v2114 = vadd.f32 %v2113, %v2017
        %v2115 = vadd.f32 %v2114, %v2018
        %v2116 = vadd.f32 %v2115, %v2019
        %v2117 = vadd.f32 %v2116, %v2020
        %v2118 = vadd.f32 %v2117, %v2021
        %v2119 = vadd.f32 %v2118, %v2022
        %v2120 = vadd.f32 %v2119, %v2023
        %v2121 = vadd.f32 %v2120, %v2024
        %v2122 = vadd.f32 %v2121, %v2025
        %v2123 = vadd.f32 %v2122, %v2026
        %v2124 = vadd.f32 %v2123, %v2027
        %v2125 = vadd.f32 %v2124, %v2028
        %v2126 = vadd.f32 %v2125, %v2029
        %v2127 = vadd.f32 %v2126, %v2030
        %v2128 = vadd.f32 %v2127, %v2031
        %v2129 = vadd.f32 %v2128, %v2032
        %v2130 = vadd.f32 %v2129, %v2033
        %v2131 = vadd.f32 %v2130, %v2034
        %v2132 = vadd.f32 %v2131, %v2035
        %v2133 = vadd.f32 %v2132, %v2036
        %v2134 = vadd.f32 %v2133, %v2037
        %v2135 = vadd.f32 %v2134, %v2038
        %v2136 = vadd.f32 %v2135, %v2039
        %v2137 = vadd.f32 %v2136, %v2040
        %v2138 = vadd.f32 %v2137, %v2041
        %v2139 = vadd.f32 %v2138, %v2042
        %v2140 = vadd.f32 %v2139, %v2043
        %v2141 = vadd.f32 %v2140, %v2044
        %v2142 = vrot.slane %v2141, 4
        %v2143 = vadd.f32 %v2141, %v2142
        %v2144 = vrot.slane %v2143, 2
        %v2145 = vadd.f32 %v2143, %v2144
        %v2146 = vrot.slane %v2145, 1
        %v2147 = vadd.f32 %v2145, %v2146
        %v2148 = vmul.f32 %v2147, 0.00390625
        %v2149 = vsub.f32 %v1067, %v2148
        %v2150 = vsub.f32 %v1070, %v2148
        %v2151 = vsub.f32 %v1075, %v2148
        %v2152 = vsub.f32 %v1078, %v2148
        %v2153 = vsub.f32 %v1083, %v2148
        %v2154 = vsub.f32 %v1086, %v2148
        %v2155 = vsub.f32 %v1091, %v2148
        %v2156 = vsub.f32 %v1094, %v2148
        %v2157 = vsub.f32 %v1099, %v2148
        %v2158 = vsub.f32 %v1102, %v2148
        %v2159 = vsub.f32 %v1107, %v2148
        %v2160 = vsub.f32 %v1110, %v2148
        %v2161 = vsub.f32 %v1115, %v2148
        %v2162 = vsub.f32 %v1118, %v2148
        %v2163 = vsub.f32 %v1123, %v2148
        %v2164 = vsub.f32 %v1126, %v2148
        %v2165 = vsub.f32 %v1131, %v2148
        %v2166 = vsub.f32 %v1134, %v2148
        %v2167 = vsub.f32 %v1139, %v2148
        %v2168 = vsub.f32 %v1142, %v2148
        %v2169 = vsub.f32 %v1147, %v2148
        %v2170 = vsub.f32 %v1150, %v2148
        %v2171 = vsub.f32 %v1155, %v2148
        %v2172 = vsub.f32 %v1158, %v2148
        %v2173 = vsub.f32 %v1163, %v2148
        %v2174 = vsub.f32 %v1166, %v2148
        %v2175 = vsub.f32 %v1171, %v2148
        %v2176 = vsub.f32 %v1174, %v2148
        %v2177 = vsub.f32 %v1179, %v2148
        %v2178 = vsub.f32 %v1182, %v2148
        %v2179 = vsub.f32 %v1187, %v2148
        %v2180 = vsub.f32 %v1190, %v2148
        %v2181 = vsub.f32 %v1195, %v2148
        %v2182 = vsub.f32 %v1198, %v2148
        %v2183 = vsub.f32 %v1203, %v2148
        %v2184 = vsub.f32 %v1206, %v2148
        %v2185 = vsub.f32 %v1211, %v2148
        %v2186 = vsub.f32 %v1214, %v2148
        %v2187 = vsub.f32 %v1219, %v2148
        %v2188 = vsub.f32 %v1222, %v2148
        %v2189 = vsub.f32 %v1227, %v2148
        %v2190 = vsub.f32 %v1230, %v2148
        %v2191 = vsub.f32 %v1235, %v2148
        %v2192 = vsub.f32 %v1238, %v2148
        %v2193 = vsub.f32 %v1243, %v2148
        %v2194 = vsub.f32 %v1246, %v2148
        %v2195 = vsub.f32 %v1251, %v2148
        %v2196 = vsub.f32 %v1254, %v2148
        %v2197 = vsub.f32 %v1259, %v2148
        %v2198 = vsub.f32 %v1262, %v2148
        %v2199 = vsub.f32 %v1267, %v2148
        %v2200 = vsub.f32 %v1270, %v2148
        %v2201 = vsub.f32 %v1275, %v2148
        %v2202 = vsub.f32 %v1278, %v2148
        %v2203 = vsub.f32 %v1283, %v2148
        %v2204 = vsub.f32 %v1286, %v2148
        %v2205 = vsub.f32 %v1291, %v2148
        %v2206 = vsub.f32 %v1294, %v2148
        %v2207 = vsub.f32 %v1299, %v2148
        %v2208 = vsub.f32 %v1302, %v2148
        %v2209 = vsub.f32 %v1307, %v2148
        %v2210 = vsub.f32 %v1310, %v2148
        %v2211 = vsub.f32 %v1315, %v2148
        %v2212 = vsub.f32 %v1318, %v2148
        %v2213 = vsub.f32 %v1323, %v2148
        %v2214 = vsub.f32 %v1326, %v2148
        %v2215 = vsub.f32 %v1331, %v2148
        %v2216 = vsub.f32 %v1334, %v2148
        %v2217 = vsub.f32 %v1339, %v2148
        %v2218 = vsub.f32 %v1342, %v2148
        %v2219 = vsub.f32 %v1347, %v2148
        %v2220 = vsub.f32 %v1350, %v2148
        %v2221 = vsub.f32 %v1355, %v2148
        %v2222 = vsub.f32 %v1358, %v2148
        %v2223 = vsub.f32 %v1363, %v2148
        %v2224 = vsub.f32 %v1366, %v2148
        %v2225 = vsub.f32 %v1371, %v2148
        %v2226 = vsub.f32 %v1374, %v2148
        %v2227 = vsub.f32 %v1379, %v2148
        %v2228 = vsub.f32 %v1382, %v2148
        %v2229 = vsub.f32 %v1387, %v2148
        %v2230 = vsub.f32 %v1390, %v2148
        %v2231 = vsub.f32 %v1395, %v2148
        %v2232 = vsub.f32 %v1398, %v2148
        %v2233 = vsub.f32 %v1403, %v2148
        %v2234 = vsub.f32 %v1406, %v2148
        %v2235 = vsub.f32 %v1411, %v2148
        %v2236 = vsub.f32 %v1414, %v2148
        %v2237 = vsub.f32 %v1419, %v2148
        %v2238 = vsub.f32 %v1422, %v2148
        %v2239 = vsub.f32 %v1427, %v2148
        %v2240 = vsub.f32 %v1430, %v2148
        %v2241 = vsub.f32 %v1435, %v2148
        %v2242 = vsub.f32 %v1438, %v2148
        %v2243 = vsub.f32 %v1443, %v2148
        %v2244 = vsub.f32 %v1446, %v2148
        %v2245 = vsub.f32 %v1451, %v2148
        %v2246 = vsub.f32 %v1454, %v2148
        %v2247 = vsel %vm1849, %v2149, 0.0
        %v2248 = vsel %vm1850, %v2150, 0.0
        %v2249 = vsel %vm1851, %v2151, 0.0
        %v2250 = vsel %vm1852, %v2152, 0.0
        %v2251 = vsel %vm1853, %v2153, 0.0
        %v2252 = vsel %vm1854, %v2154, 0.0
        %v2253 = vsel %vm1855, %v2155, 0.0
        %v2254 = vsel %vm1856, %v2156, 0.0
        %v2255 = vsel %vm1857, %v2157, 0.0
        %v2256 = vsel %vm1858, %v2158, 0.0
        %v2257 = vsel %vm1859, %v2159, 0.0
        %v2258 = vsel %vm1860, %v2160, 0.0
        %v2259 = vsel %vm1861, %v2161, 0.0
        %v2260 = vsel %vm1862, %v2162, 0.0
        %v2261 = vsel %vm1863, %v2163, 0.0
        %v2262 = vsel %vm1864, %v2164, 0.0
        %v2263 = vsel %vm1865, %v2165, 0.0
        %v2264 = vsel %vm1866, %v2166, 0.0
        %v2265 = vsel %vm1867, %v2167, 0.0
        %v2266 = vsel %vm1868, %v2168, 0.0
        %v2267 = vsel %vm1869, %v2169, 0.0
        %v2268 = vsel %vm1870, %v2170, 0.0
        %v2269 = vsel %vm1871, %v2171, 0.0
        %v2270 = vsel %vm1872, %v2172, 0.0
        %v2271 = vsel %vm1873, %v2173, 0.0
        %v2272 = vsel %vm1874, %v2174, 0.0
        %v2273 = vsel %vm1875, %v2175, 0.0
        %v2274 = vsel %vm1876, %v2176, 0.0
        %v2275 = vsel %vm1877, %v2177, 0.0
        %v2276 = vsel %vm1878, %v2178, 0.0
        %v2277 = vsel %vm1879, %v2179, 0.0
        %v2278 = vsel %vm1880, %v2180, 0.0
        %v2279 = vsel %vm1881, %v2181, 0.0
        %v2280 = vsel %vm1882, %v2182, 0.0
        %v2281 = vsel %vm1883, %v2183, 0.0
        %v2282 = vsel %vm1884, %v2184, 0.0
        %v2283 = vsel %vm1885, %v2185, 0.0
        %v2284 = vsel %vm1886, %v2186, 0.0
        %v2285 = vsel %vm1887, %v2187, 0.0
        %v2286 = vsel %vm1888, %v2188, 0.0
        %v2287 = vsel %vm1889, %v2189, 0.0
        %v2288 = vsel %vm1890, %v2190, 0.0
        %v2289 = vsel %vm1891, %v2191, 0.0
        %v2290 = vsel %vm1892, %v2192, 0.0
        %v2291 = vsel %vm1893, %v2193, 0.0
        %v2292 = vsel %vm1894, %v2194, 0.0
        %v2293 = vsel %vm1895, %v2195, 0.0
        %v2294 = vsel %vm1896, %v2196, 0.0
        %v2295 = vsel %vm1897, %v2197, 0.0
        %v2296 = vsel %vm1898, %v2198, 0.0
        %v2297 = vsel %vm1899, %v2199, 0.0
        %v2298 = vsel %vm1900, %v2200, 0.0
        %v2299 = vsel %vm1901, %v2201, 0.0
        %v2300 = vsel %vm1902, %v2202, 0.0
        %v2301 = vsel %vm1903, %v2203, 0.0
        %v2302 = vsel %vm1904, %v2204, 0.0
        %v2303 = vsel %vm1905, %v2205, 0.0
        %v2304 = vsel %vm1906, %v2206, 0.0
        %v2305 = vsel %vm1907, %v2207, 0.0
        %v2306 = vsel %vm1908, %v2208, 0.0
        %v2307 = vsel %vm1909, %v2209, 0.0
        %v2308 = vsel %vm1910, %v2210, 0.0
        %v2309 = vsel %vm1911, %v2211, 0.0
        %v2310 = vsel %vm1912, %v2212, 0.0
        %v2311 = vsel %vm1913, %v2213, 0.0
        %v2312 = vsel %vm1914, %v2214, 0.0
        %v2313 = vsel %vm1915, %v2215, 0.0
        %v2314 = vsel %vm1916, %v2216, 0.0
        %v2315 = vsel %vm1917, %v2217, 0.0
        %v2316 = vsel %vm1918, %v2218, 0.0
        %v2317 = vsel %vm1919, %v2219, 0.0
        %v2318 = vsel %vm1920, %v2220, 0.0
        %v2319 = vsel %vm1921, %v2221, 0.0
        %v2320 = vsel %vm1922, %v2222, 0.0
        %v2321 = vsel %vm1923, %v2223, 0.0
        %v2322 = vsel %vm1924, %v2224, 0.0
        %v2323 = vsel %vm1925, %v2225, 0.0
        %v2324 = vsel %vm1926, %v2226, 0.0
        %v2325 = vsel %vm1927, %v2227, 0.0
        %v2326 = vsel %vm1928, %v2228, 0.0
        %v2327 = vsel %vm1929, %v2229, 0.0
        %v2328 = vsel %vm1930, %v2230, 0.0
        %v2329 = vsel %vm1931, %v2231, 0.0
        %v2330 = vsel %vm1932, %v2232, 0.0
        %v2331 = vsel %vm1933, %v2233, 0.0
        %v2332 = vsel %vm1934, %v2234, 0.0
        %v2333 = vsel %vm1935, %v2235, 0.0
        %v2334 = vsel %vm1936, %v2236, 0.0
        %v2335 = vsel %vm1937, %v2237, 0.0
        %v2336 = vsel %vm1938, %v2238, 0.0
        %v2337 = vsel %vm1939, %v2239, 0.0
        %v2338 = vsel %vm1940, %v2240, 0.0
        %v2339 = vsel %vm1941, %v2241, 0.0
        %v2340 = vsel %vm1942, %v2242, 0.0
        %v2341 = vsel %vm1943, %v2243, 0.0
        %v2342 = vsel %vm1944, %v2244, 0.0
        %v2343 = vsel %vm1945, %v2245, 0.0
        %v2344 = vsel %vm1946, %v2246, 0.0
        %v2345 = vmul.f32 %v2247, %v2247
        %v2346 = vmul.f32 %v2248, %v2248
        %v2347 = vmul.f32 %v2249, %v2249
        %v2348 = vmul.f32 %v2250, %v2250
        %v2349 = vmul.f32 %v2251, %v2251
        %v2350 = vmul.f32 %v2252, %v2252
        %v2351 = vmul.f32 %v2253, %v2253
        %v2352 = vmul.f32 %v2254, %v2254
        %v2353 = vmul.f32 %v2255, %v2255
        %v2354 = vmul.f32 %v2256, %v2256
        %v2355 = vmul.f32 %v2257, %v2257
        %v2356 = vmul.f32 %v2258, %v2258
        %v2357 = vmul.f32 %v2259, %v2259
        %v2358 = vmul.f32 %v2260, %v2260
        %v2359 = vmul.f32 %v2261, %v2261
        %v2360 = vmul.f32 %v2262, %v2262
        %v2361 = vmul.f32 %v2263, %v2263
        %v2362 = vmul.f32 %v2264, %v2264
        %v2363 = vmul.f32 %v2265, %v2265
        %v2364 = vmul.f32 %v2266, %v2266
        %v2365 = vmul.f32 %v2267, %v2267
        %v2366 = vmul.f32 %v2268, %v2268
        %v2367 = vmul.f32 %v2269, %v2269
        %v2368 = vmul.f32 %v2270, %v2270
        %v2369 = vmul.f32 %v2271, %v2271
        %v2370 = vmul.f32 %v2272, %v2272
        %v2371 = vmul.f32 %v2273, %v2273
        %v2372 = vmul.f32 %v2274, %v2274
        %v2373 = vmul.f32 %v2275, %v2275
        %v2374 = vmul.f32 %v2276, %v2276
        %v2375 = vmul.f32 %v2277, %v2277
        %v2376 = vmul.f32 %v2278, %v2278
        %v2377 = vmul.f32 %v2279, %v2279
        %v2378 = vmul.f32 %v2280, %v2280
        %v2379 = vmul.f32 %v2281, %v2281
        %v2380 = vmul.f32 %v2282, %v2282
        %v2381 = vmul.f32 %v2283, %v2283
        %v2382 = vmul.f32 %v2284, %v2284
        %v2383 = vmul.f32 %v2285, %v2285
        %v2384 = vmul.f32 %v2286, %v2286
        %v2385 = vmul.f32 %v2287, %v2287
        %v2386 = vmul.f32 %v2288, %v2288
        %v2387 = vmul.f32 %v2289, %v2289
        %v2388 = vmul.f32 %v2290, %v2290
        %v2389 = vmul.f32 %v2291, %v2291
        %v2390 = vmul.f32 %v2292, %v2292
        %v2391 = vmul.f32 %v2293, %v2293
        %v2392 = vmul.f32 %v2294, %v2294
        %v2393 = vmul.f32 %v2295, %v2295
        %v2394 = vmul.f32 %v2296, %v2296
        %v2395 = vmul.f32 %v2297, %v2297
        %v2396 = vmul.f32 %v2298, %v2298
        %v2397 = vmul.f32 %v2299, %v2299
        %v2398 = vmul.f32 %v2300, %v2300
        %v2399 = vmul.f32 %v2301, %v2301
        %v2400 = vmul.f32 %v2302, %v2302
        %v2401 = vmul.f32 %v2303, %v2303
        %v2402 = vmul.f32 %v2304, %v2304
        %v2403 = vmul.f32 %v2305, %v2305
        %v2404 = vmul.f32 %v2306, %v2306
        %v2405 = vmul.f32 %v2307, %v2307
        %v2406 = vmul.f32 %v2308, %v2308
        %v2407 = vmul.f32 %v2309, %v2309
        %v2408 = vmul.f32 %v2310, %v2310
        %v2409 = vmul.f32 %v2311, %v2311
        %v2410 = vmul.f32 %v2312, %v2312
        %v2411 = vmul.f32 %v2313, %v2313
        %v2412 = vmul.f32 %v2314, %v2314
        %v2413 = vmul.f32 %v2315, %v2315
        %v2414 = vmul.f32 %v2316, %v2316
        %v2415 = vmul.f32 %v2317, %v2317
        %v2416 = vmul.f32 %v2318, %v2318
        %v2417 = vmul.f32 %v2319, %v2319
        %v2418 = vmul.f32 %v2320, %v2320
        %v2419 = vmul.f32 %v2321, %v2321
        %v2420 = vmul.f32 %v2322, %v2322
        %v2421 = vmul.f32 %v2323, %v2323
        %v2422 = vmul.f32 %v2324, %v2324
        %v2423 = vmul.f32 %v2325, %v2325
        %v2424 = vmul.f32 %v2326, %v2326
        %v2425 = vmul.f32 %v2327, %v2327
        %v2426 = vmul.f32 %v2328, %v2328
        %v2427 = vmul.f32 %v2329, %v2329
        %v2428 = vmul.f32 %v2330, %v2330
        %v2429 = vmul.f32 %v2331, %v2331
        %v2430 = vmul.f32 %v2332, %v2332
        %v2431 = vmul.f32 %v2333, %v2333
        %v2432 = vmul.f32 %v2334, %v2334
        %v2433 = vmul.f32 %v2335, %v2335
        %v2434 = vmul.f32 %v2336, %v2336
        %v2435 = vmul.f32 %v2337, %v2337
        %v2436 = vmul.f32 %v2338, %v2338
        %v2437 = vmul.f32 %v2339, %v2339
        %v2438 = vmul.f32 %v2340, %v2340
        %v2439 = vmul.f32 %v2341, %v2341
        %v2440 = vmul.f32 %v2342, %v2342
        %v2441 = vmul.f32 %v2343, %v2343
        %v2442 = vmul.f32 %v2344, %v2344
        %v2443 = vadd.f32 %v2345, %v2346
        %v2444 = vadd.f32 %v2443, %v2347
        %v2445 = vadd.f32 %v2444, %v2348
        %v2446 = vadd.f32 %v2445, %v2349
        %v2447 = vadd.f32 %v2446, %v2350
        %v2448 = vadd.f32 %v2447, %v2351
        %v2449 = vadd.f32 %v2448, %v2352
        %v2450 = vadd.f32 %v2449, %v2353
        %v2451 = vadd.f32 %v2450, %v2354
        %v2452 = vadd.f32 %v2451, %v2355
        %v2453 = vadd.f32 %v2452, %v2356
        %v2454 = vadd.f32 %v2453, %v2357
        %v2455 = vadd.f32 %v2454, %v2358
        %v2456 = vadd.f32 %v2455, %v2359
        %v2457 = vadd.f32 %v2456, %v2360
        %v2458 = vadd.f32 %v2457, %v2361
        %v2459 = vadd.f32 %v2458, %v2362
        %v2460 = vadd.f32 %v2459, %v2363
        %v2461 = vadd.f32 %v2460, %v2364
        %v2462 = vadd.f32 %v2461, %v2365
        %v2463 = vadd.f32 %v2462, %v2366
        %v2464 = vadd.f32 %v2463, %v2367
        %v2465 = vadd.f32 %v2464, %v2368
        %v2466 = vadd.f32 %v2465, %v2369
        %v2467 = vadd.f32 %v2466, %v2370
        %v2468 = vadd.f32 %v2467, %v2371
        %v2469 = vadd.f32 %v2468, %v2372
        %v2470 = vadd.f32 %v2469, %v2373
        %v2471 = vadd.f32 %v2470, %v2374
        %v2472 = vadd.f32 %v2471, %v2375
        %v2473 = vadd.f32 %v2472, %v2376
        %v2474 = vadd.f32 %v2473, %v2377
        %v2475 = vadd.f32 %v2474, %v2378
        %v2476 = vadd.f32 %v2475, %v2379
        %v2477 = vadd.f32 %v2476, %v2380
        %v2478 = vadd.f32 %v2477, %v2381
        %v2479 = vadd.f32 %v2478, %v2382
        %v2480 = vadd.f32 %v2479, %v2383
        %v2481 = vadd.f32 %v2480, %v2384
        %v2482 = vadd.f32 %v2481, %v2385
        %v2483 = vadd.f32 %v2482, %v2386
        %v2484 = vadd.f32 %v2483, %v2387
        %v2485 = vadd.f32 %v2484, %v2388
        %v2486 = vadd.f32 %v2485, %v2389
        %v2487 = vadd.f32 %v2486, %v2390
        %v2488 = vadd.f32 %v2487, %v2391
        %v2489 = vadd.f32 %v2488, %v2392
        %v2490 = vadd.f32 %v2489, %v2393
        %v2491 = vadd.f32 %v2490, %v2394
        %v2492 = vadd.f32 %v2491, %v2395
        %v2493 = vadd.f32 %v2492, %v2396
        %v2494 = vadd.f32 %v2493, %v2397
        %v2495 = vadd.f32 %v2494, %v2398
        %v2496 = vadd.f32 %v2495, %v2399
        %v2497 = vadd.f32 %v2496, %v2400
        %v2498 = vadd.f32 %v2497, %v2401
        %v2499 = vadd.f32 %v2498, %v2402
        %v2500 = vadd.f32 %v2499, %v2403
        %v2501 = vadd.f32 %v2500, %v2404
        %v2502 = vadd.f32 %v2501, %v2405
        %v2503 = vadd.f32 %v2502, %v2406
        %v2504 = vadd.f32 %v2503, %v2407
        %v2505 = vadd.f32 %v2504, %v2408
        %v2506 = vadd.f32 %v2505, %v2409
        %v2507 = vadd.f32 %v2506, %v2410
        %v2508 = vadd.f32 %v2507, %v2411
        %v2509 = vadd.f32 %v2508, %v2412
        %v2510 = vadd.f32 %v2509, %v2413
        %v2511 = vadd.f32 %v2510, %v2414
        %v2512 = vadd.f32 %v2511, %v2415
        %v2513 = vadd.f32 %v2512, %v2416
        %v2514 = vadd.f32 %v2513, %v2417
        %v2515 = vadd.f32 %v2514, %v2418
        %v2516 = vadd.f32 %v2515, %v2419
        %v2517 = vadd.f32 %v2516, %v2420
        %v2518 = vadd.f32 %v2517, %v2421
        %v2519 = vadd.f32 %v2518, %v2422
        %v2520 = vadd.f32 %v2519, %v2423
        %v2521 = vadd.f32 %v2520, %v2424
        %v2522 = vadd.f32 %v2521, %v2425
        %v2523 = vadd.f32 %v2522, %v2426
        %v2524 = vadd.f32 %v2523, %v2427
        %v2525 = vadd.f32 %v2524, %v2428
        %v2526 = vadd.f32 %v2525, %v2429
        %v2527 = vadd.f32 %v2526, %v2430
        %v2528 = vadd.f32 %v2527, %v2431
        %v2529 = vadd.f32 %v2528, %v2432
        %v2530 = vadd.f32 %v2529, %v2433
        %v2531 = vadd.f32 %v2530, %v2434
        %v2532 = vadd.f32 %v2531, %v2435
        %v2533 = vadd.f32 %v2532, %v2436
        %v2534 = vadd.f32 %v2533, %v2437
        %v2535 = vadd.f32 %v2534, %v2438
        %v2536 = vadd.f32 %v2535, %v2439
        %v2537 = vadd.f32 %v2536, %v2440
        %v2538 = vadd.f32 %v2537, %v2441
        %v2539 = vadd.f32 %v2538, %v2442
        %v2540 = vrot.slane %v2539, 4
        %v2541 = vadd.f32 %v2539, %v2540
        %v2542 = vrot.slane %v2541, 2
        %v2543 = vadd.f32 %v2541, %v2542
        %v2544 = vrot.slane %v2543, 1
        %v2545 = vadd.f32 %v2543, %v2544
        %vm2546 = vcmask 1040384
        %v2547 = vsel %vm2546, %v2147, %v2545
        %vm2548 = vcmask 1041408
        %v2549 = vsel %vm2548, %v2547, 0.0
        %2550 = vst [vmem:[%s299] sm:$0xff] %v2549
        %2551 = vst [vmem:[%s292] sm:$0xf] 0
        %2552 = vst [vmem:[%s292 + $0x4] sm:$0xf] 0
        %2553 = vst [vmem:[%s292 + $0x8] sm:$0xf] 0
        %2554 = vst [vmem:[%s292 + $0x194] sm:$0xf] 0
        %2555 = vst [vmem:[%s292 + $0x198] sm:$0xf] 0
        %2556 = vst [vmem:[%s292 + $0x19c] sm:$0xf] 0
        %v2557 = vpack.c.bf16 %v1070, %v1067
        %v2558 = vpack.c.bf16 %v1078, %v1075
        %v2559 = vpack.c.bf16 %v1086, %v1083
        %v2560 = vpack.c.bf16 %v1094, %v1091
        %v2561 = vpack.c.bf16 %v1102, %v1099
        %v2562 = vpack.c.bf16 %v1110, %v1107
        %v2563 = vpack.c.bf16 %v1118, %v1115
        %v2564 = vpack.c.bf16 %v1126, %v1123
        %v2565 = vpack.c.bf16 %v1134, %v1131
        %v2566 = vpack.c.bf16 %v1142, %v1139
        %v2567 = vpack.c.bf16 %v1150, %v1147
        %v2568 = vpack.c.bf16 %v1158, %v1155
        %v2569 = vpack.c.bf16 %v1166, %v1163
        %v2570 = vpack.c.bf16 %v1174, %v1171
        %v2571 = vpack.c.bf16 %v1182, %v1179
        %v2572 = vpack.c.bf16 %v1190, %v1187
        %v2573 = vpack.c.bf16 %v1198, %v1195
        %v2574 = vpack.c.bf16 %v1206, %v1203
        %v2575 = vpack.c.bf16 %v1214, %v1211
        %v2576 = vpack.c.bf16 %v1222, %v1219
        %v2577 = vpack.c.bf16 %v1230, %v1227
        %v2578 = vpack.c.bf16 %v1238, %v1235
        %v2579 = vpack.c.bf16 %v1246, %v1243
        %v2580 = vpack.c.bf16 %v1254, %v1251
        %v2581 = vpack.c.bf16 %v1262, %v1259
        %v2582 = vpack.c.bf16 %v1270, %v1267
        %v2583 = vpack.c.bf16 %v1278, %v1275
        %v2584 = vpack.c.bf16 %v1286, %v1283
        %v2585 = vpack.c.bf16 %v1294, %v1291
        %v2586 = vpack.c.bf16 %v1302, %v1299
        %v2587 = vpack.c.bf16 %v1310, %v1307
        %v2588 = vpack.c.bf16 %v1318, %v1315
        %v2589 = vpack.c.bf16 %v1326, %v1323
        %v2590 = vpack.c.bf16 %v1334, %v1331
        %v2591 = vpack.c.bf16 %v1342, %v1339
        %v2592 = vpack.c.bf16 %v1350, %v1347
        %v2593 = vpack.c.bf16 %v1358, %v1355
        %v2594 = vpack.c.bf16 %v1366, %v1363
        %v2595 = vpack.c.bf16 %v1374, %v1371
        %v2596 = vpack.c.bf16 %v1382, %v1379
        %v2597 = vpack.c.bf16 %v1390, %v1387
        %v2598 = vpack.c.bf16 %v1398, %v1395
        %v2599 = vpack.c.bf16 %v1406, %v1403
        %v2600 = vpack.c.bf16 %v1414, %v1411
        %v2601 = vpack.c.bf16 %v1422, %v1419
        %v2602 = vpack.c.bf16 %v1430, %v1427
        %v2603 = vpack.c.bf16 %v1438, %v1435
        %v2604 = vpack.c.bf16 %v1446, %v1443
        %v2605 = vpack.c.bf16 %v1454, %v1451
        %v2655 = vunpack.c.l.b16 %v2557
        %v2656 = vunpack.c.h.b16 %v2557
        %v2657 = vunpack.c.l.b16 %v2558
        %v2658 = vunpack.c.h.b16 %v2558
        %v2659 = vunpack.c.l.b16 %v2559
        %v2660 = vunpack.c.h.b16 %v2559
        %v2661 = vunpack.c.l.b16 %v2560
        %v2662 = vunpack.c.h.b16 %v2560
        %v2663 = vunpack.c.l.b16 %v2561
        %v2664 = vunpack.c.h.b16 %v2561
        %v2665 = vunpack.c.l.b16 %v2562
        %v2666 = vunpack.c.h.b16 %v2562
        %v2667 = vunpack.c.l.b16 %v2563
        %v2668 = vunpack.c.h.b16 %v2563
        %v2669 = vunpack.c.l.b16 %v2564
        %v2670 = vunpack.c.h.b16 %v2564
        %v2671 = vunpack.c.l.b16 %v2565
        %v2672 = vunpack.c.h.b16 %v2565
        %v2673 = vunpack.c.l.b16 %v2566
        %v2674 = vunpack.c.h.b16 %v2566
        %v2675 = vunpack.c.l.b16 %v2567
        %v2676 = vunpack.c.h.b16 %v2567
        %v2677 = vunpack.c.l.b16 %v2568
        %v2678 = vunpack.c.h.b16 %v2568
        %v2679 = vunpack.c.l.b16 %v2569
        %v2680 = vunpack.c.h.b16 %v2569
        %v2681 = vunpack.c.l.b16 %v2570
        %v2682 = vunpack.c.h.b16 %v2570
        %v2683 = vunpack.c.l.b16 %v2571
        %v2684 = vunpack.c.h.b16 %v2571
        %v2685 = vunpack.c.l.b16 %v2572
        %v2686 = vunpack.c.h.b16 %v2572
        %v2687 = vunpack.c.l.b16 %v2573
        %v2688 = vunpack.c.h.b16 %v2573
        %v2689 = vunpack.c.l.b16 %v2574
        %v2690 = vunpack.c.h.b16 %v2574
        %v2691 = vunpack.c.l.b16 %v2575
        %v2692 = vunpack.c.h.b16 %v2575
        %v2693 = vunpack.c.l.b16 %v2576
        %v2694 = vunpack.c.h.b16 %v2576
        %v2695 = vunpack.c.l.b16 %v2577
        %v2696 = vunpack.c.h.b16 %v2577
        %v2697 = vunpack.c.l.b16 %v2578
        %v2698 = vunpack.c.h.b16 %v2578
        %v2699 = vunpack.c.l.b16 %v2579
        %v2700 = vunpack.c.h.b16 %v2579
        %v2701 = vunpack.c.l.b16 %v2580
        %v2702 = vunpack.c.h.b16 %v2580
        %v2703 = vunpack.c.l.b16 %v2581
        %v2704 = vunpack.c.h.b16 %v2581
        %v2705 = vunpack.c.l.b16 %v2582
        %v2706 = vunpack.c.h.b16 %v2582
        %v2707 = vunpack.c.l.b16 %v2583
        %v2708 = vunpack.c.h.b16 %v2583
        %v2709 = vunpack.c.l.b16 %v2584
        %v2710 = vunpack.c.h.b16 %v2584
        %v2711 = vunpack.c.l.b16 %v2585
        %v2712 = vunpack.c.h.b16 %v2585
        %v2713 = vunpack.c.l.b16 %v2586
        %v2714 = vunpack.c.h.b16 %v2586
        %v2715 = vunpack.c.l.b16 %v2587
        %v2716 = vunpack.c.h.b16 %v2587
        %v2717 = vunpack.c.l.b16 %v2588
        %v2718 = vunpack.c.h.b16 %v2588
        %v2719 = vunpack.c.l.b16 %v2589
        %v2720 = vunpack.c.h.b16 %v2589
        %v2721 = vunpack.c.l.b16 %v2590
        %v2722 = vunpack.c.h.b16 %v2590
        %v2723 = vunpack.c.l.b16 %v2591
        %v2724 = vunpack.c.h.b16 %v2591
        %v2725 = vunpack.c.l.b16 %v2592
        %v2726 = vunpack.c.h.b16 %v2592
        %v2727 = vunpack.c.l.b16 %v2593
        %v2728 = vunpack.c.h.b16 %v2593
        %v2729 = vunpack.c.l.b16 %v2594
        %v2730 = vunpack.c.h.b16 %v2594
        %v2731 = vunpack.c.l.b16 %v2595
        %v2732 = vunpack.c.h.b16 %v2595
        %v2733 = vunpack.c.l.b16 %v2596
        %v2734 = vunpack.c.h.b16 %v2596
        %v2735 = vunpack.c.l.b16 %v2597
        %v2736 = vunpack.c.h.b16 %v2597
        %v2737 = vunpack.c.l.b16 %v2598
        %v2738 = vunpack.c.h.b16 %v2598
        %v2739 = vunpack.c.l.b16 %v2599
        %v2740 = vunpack.c.h.b16 %v2599
        %v2741 = vunpack.c.l.b16 %v2600
        %v2742 = vunpack.c.h.b16 %v2600
        %v2743 = vunpack.c.l.b16 %v2601
        %v2744 = vunpack.c.h.b16 %v2601
        %v2745 = vunpack.c.l.b16 %v2602
        %v2746 = vunpack.c.h.b16 %v2602
        %v2747 = vunpack.c.l.b16 %v2603
        %v2748 = vunpack.c.h.b16 %v2603
        %v2749 = vunpack.c.l.b16 %v2604
        %v2750 = vunpack.c.h.b16 %v2604
        %v2751 = vunpack.c.l.b16 %v2605
        %v2752 = vunpack.c.h.b16 %v2605
        %v2753 = vpack.c.b16 %v2655, %v2655
        %v2754 = vpack.c.b16 %v2656, %v2656
        %v2755 = vpack.c.b16 %v2657, %v2657
        %v2756 = vpack.c.b16 %v2658, %v2658
        %v2757 = vpack.c.b16 %v2659, %v2659
        %v2758 = vpack.c.b16 %v2660, %v2660
        %v2759 = vpack.c.b16 %v2661, %v2661
        %v2760 = vpack.c.b16 %v2662, %v2662
        %v2761 = vpack.c.b16 %v2663, %v2663
        %v2762 = vpack.c.b16 %v2664, %v2664
        %v2763 = vpack.c.b16 %v2665, %v2665
        %v2764 = vpack.c.b16 %v2666, %v2666
        %v2765 = vpack.c.b16 %v2667, %v2667
        %v2766 = vpack.c.b16 %v2668, %v2668
        %v2767 = vpack.c.b16 %v2669, %v2669
        %v2768 = vpack.c.b16 %v2670, %v2670
        %v2769 = vpack.c.b16 %v2671, %v2671
        %v2770 = vpack.c.b16 %v2672, %v2672
        %v2771 = vpack.c.b16 %v2673, %v2673
        %v2772 = vpack.c.b16 %v2674, %v2674
        %v2773 = vpack.c.b16 %v2675, %v2675
        %v2774 = vpack.c.b16 %v2676, %v2676
        %v2775 = vpack.c.b16 %v2677, %v2677
        %v2776 = vpack.c.b16 %v2678, %v2678
        %v2777 = vpack.c.b16 %v2679, %v2679
        %v2778 = vpack.c.b16 %v2680, %v2680
        %v2779 = vpack.c.b16 %v2681, %v2681
        %v2780 = vpack.c.b16 %v2682, %v2682
        %v2781 = vpack.c.b16 %v2683, %v2683
        %v2782 = vpack.c.b16 %v2684, %v2684
        %v2783 = vpack.c.b16 %v2685, %v2685
        %v2784 = vpack.c.b16 %v2686, %v2686
        %v2785 = vpack.c.b16 %v2687, %v2687
        %v2786 = vpack.c.b16 %v2688, %v2688
        %v2787 = vpack.c.b16 %v2689, %v2689
        %v2788 = vpack.c.b16 %v2690, %v2690
        %v2789 = vpack.c.b16 %v2691, %v2691
        %v2790 = vpack.c.b16 %v2692, %v2692
        %v2791 = vpack.c.b16 %v2693, %v2693
        %v2792 = vpack.c.b16 %v2694, %v2694
        %v2793 = vpack.c.b16 %v2695, %v2695
        %v2794 = vpack.c.b16 %v2696, %v2696
        %v2795 = vpack.c.b16 %v2697, %v2697
        %v2796 = vpack.c.b16 %v2698, %v2698
        %v2797 = vpack.c.b16 %v2699, %v2699
        %v2798 = vpack.c.b16 %v2700, %v2700
        %v2799 = vpack.c.b16 %v2701, %v2701
        %v2800 = vpack.c.b16 %v2702, %v2702
        %v2801 = vpack.c.b16 %v2703, %v2703
        %v2802 = vpack.c.b16 %v2704, %v2704
        %v2803 = vpack.c.b16 %v2705, %v2705
        %v2804 = vpack.c.b16 %v2706, %v2706
        %v2805 = vpack.c.b16 %v2707, %v2707
        %v2806 = vpack.c.b16 %v2708, %v2708
        %v2807 = vpack.c.b16 %v2709, %v2709
        %v2808 = vpack.c.b16 %v2710, %v2710
        %v2809 = vpack.c.b16 %v2711, %v2711
        %v2810 = vpack.c.b16 %v2712, %v2712
        %v2811 = vpack.c.b16 %v2713, %v2713
        %v2812 = vpack.c.b16 %v2714, %v2714
        %v2813 = vpack.c.b16 %v2715, %v2715
        %v2814 = vpack.c.b16 %v2716, %v2716
        %v2815 = vpack.c.b16 %v2717, %v2717
        %v2816 = vpack.c.b16 %v2718, %v2718
        %v2817 = vpack.c.b16 %v2719, %v2719
        %v2818 = vpack.c.b16 %v2720, %v2720
        %v2819 = vpack.c.b16 %v2721, %v2721
        %v2820 = vpack.c.b16 %v2722, %v2722
        %v2821 = vpack.c.b16 %v2723, %v2723
        %v2822 = vpack.c.b16 %v2724, %v2724
        %v2823 = vpack.c.b16 %v2725, %v2725
        %v2824 = vpack.c.b16 %v2726, %v2726
        %v2825 = vpack.c.b16 %v2727, %v2727
        %v2826 = vpack.c.b16 %v2728, %v2728
        %v2827 = vpack.c.b16 %v2729, %v2729
        %v2828 = vpack.c.b16 %v2730, %v2730
        %v2829 = vpack.c.b16 %v2731, %v2731
        %v2830 = vpack.c.b16 %v2732, %v2732
        %v2831 = vpack.c.b16 %v2733, %v2733
        %v2832 = vpack.c.b16 %v2734, %v2734
        %v2833 = vpack.c.b16 %v2735, %v2735
        %v2834 = vpack.c.b16 %v2736, %v2736
        %v2835 = vpack.c.b16 %v2737, %v2737
        %v2836 = vpack.c.b16 %v2738, %v2738
        %v2837 = vpack.c.b16 %v2739, %v2739
        %v2838 = vpack.c.b16 %v2740, %v2740
        %v2839 = vpack.c.b16 %v2741, %v2741
        %v2840 = vpack.c.b16 %v2742, %v2742
        %v2841 = vpack.c.b16 %v2743, %v2743
        %v2842 = vpack.c.b16 %v2744, %v2744
        %v2843 = vpack.c.b16 %v2745, %v2745
        %v2844 = vpack.c.b16 %v2746, %v2746
        %v2845 = vpack.c.b16 %v2747, %v2747
        %v2846 = vpack.c.b16 %v2748, %v2748
        %v2847 = vpack.c.b16 %v2749, %v2749
        %v2848 = vpack.c.b16 %v2750, %v2750
        %v2849 = vpack.c.b16 %v2751, %v2751
        %v2850 = vpack.c.b16 %v2752, %v2752
        %2949 = vst [vmem:[%s292 + $0xc] sm:$0xf] %v2753
        %2950 = vst [vmem:[%s292 + $0x10] sm:$0xf] %v2754
        %2951 = vst [vmem:[%s292 + $0x14] sm:$0xf] %v2755
        %2952 = vst [vmem:[%s292 + $0x18] sm:$0xf] %v2756
        %2953 = vst [vmem:[%s292 + $0x1c] sm:$0xf] %v2757
        %2954 = vst [vmem:[%s292 + $0x20] sm:$0xf] %v2758
        %2955 = vst [vmem:[%s292 + $0x24] sm:$0xf] %v2759
        %2956 = vst [vmem:[%s292 + $0x28] sm:$0xf] %v2760
        %2957 = vst [vmem:[%s292 + $0x2c] sm:$0xf] %v2761
        %2958 = vst [vmem:[%s292 + $0x30] sm:$0xf] %v2762
        %2959 = vst [vmem:[%s292 + $0x34] sm:$0xf] %v2763
        %2960 = vst [vmem:[%s292 + $0x38] sm:$0xf] %v2764
        %2961 = vst [vmem:[%s292 + $0x3c] sm:$0xf] %v2765
        %2962 = vst [vmem:[%s292 + $0x40] sm:$0xf] %v2766
        %2963 = vst [vmem:[%s292 + $0x44] sm:$0xf] %v2767
        %2964 = vst [vmem:[%s292 + $0x48] sm:$0xf] %v2768
        %2965 = vst [vmem:[%s292 + $0x4c] sm:$0xf] %v2769
        %2966 = vst [vmem:[%s292 + $0x50] sm:$0xf] %v2770
        %2967 = vst [vmem:[%s292 + $0x54] sm:$0xf] %v2771
        %2968 = vst [vmem:[%s292 + $0x58] sm:$0xf] %v2772
        %2969 = vst [vmem:[%s292 + $0x5c] sm:$0xf] %v2773
        %2970 = vst [vmem:[%s292 + $0x60] sm:$0xf] %v2774
        %2971 = vst [vmem:[%s292 + $0x64] sm:$0xf] %v2775
        %2972 = vst [vmem:[%s292 + $0x68] sm:$0xf] %v2776
        %2973 = vst [vmem:[%s292 + $0x6c] sm:$0xf] %v2777
        %2974 = vst [vmem:[%s292 + $0x70] sm:$0xf] %v2778
        %2975 = vst [vmem:[%s292 + $0x74] sm:$0xf] %v2779
        %2976 = vst [vmem:[%s292 + $0x78] sm:$0xf] %v2780
        %2977 = vst [vmem:[%s292 + $0x7c] sm:$0xf] %v2781
        %2978 = vst [vmem:[%s292 + $0x80] sm:$0xf] %v2782
        %2979 = vst [vmem:[%s292 + $0x84] sm:$0xf] %v2783
        %2980 = vst [vmem:[%s292 + $0x88] sm:$0xf] %v2784
        %2981 = vst [vmem:[%s292 + $0x8c] sm:$0xf] %v2785
        %2982 = vst [vmem:[%s292 + $0x90] sm:$0xf] %v2786
        %2983 = vst [vmem:[%s292 + $0x94] sm:$0xf] %v2787
        %2984 = vst [vmem:[%s292 + $0x98] sm:$0xf] %v2788
        %2985 = vst [vmem:[%s292 + $0x9c] sm:$0xf] %v2789
        %2986 = vst [vmem:[%s292 + $0xa0] sm:$0xf] %v2790
        %2987 = vst [vmem:[%s292 + $0xa4] sm:$0xf] %v2791
        %2988 = vst [vmem:[%s292 + $0xa8] sm:$0xf] %v2792
        %2989 = vst [vmem:[%s292 + $0xac] sm:$0xf] %v2793
        %2990 = vst [vmem:[%s292 + $0xb0] sm:$0xf] %v2794
        %2991 = vst [vmem:[%s292 + $0xb4] sm:$0xf] %v2795
        %2992 = vst [vmem:[%s292 + $0xb8] sm:$0xf] %v2796
        %2993 = vst [vmem:[%s292 + $0xbc] sm:$0xf] %v2797
        %2994 = vst [vmem:[%s292 + $0xc0] sm:$0xf] %v2798
        %2995 = vst [vmem:[%s292 + $0xc4] sm:$0xf] %v2799
        %2996 = vst [vmem:[%s292 + $0xc8] sm:$0xf] %v2800
        %2997 = vst [vmem:[%s292 + $0xcc] sm:$0xf] %v2801
        %2998 = vst [vmem:[%s292 + $0xd0] sm:$0xf] %v2802
        %2999 = vst [vmem:[%s292 + $0xd4] sm:$0xf] %v2803
        %3000 = vst [vmem:[%s292 + $0xd8] sm:$0xf] %v2804
        %3001 = vst [vmem:[%s292 + $0xdc] sm:$0xf] %v2805
        %3002 = vst [vmem:[%s292 + $0xe0] sm:$0xf] %v2806
        %3003 = vst [vmem:[%s292 + $0xe4] sm:$0xf] %v2807
        %3004 = vst [vmem:[%s292 + $0xe8] sm:$0xf] %v2808
        %3005 = vst [vmem:[%s292 + $0xec] sm:$0xf] %v2809
        %3006 = vst [vmem:[%s292 + $0xf0] sm:$0xf] %v2810
        %3007 = vst [vmem:[%s292 + $0xf4] sm:$0xf] %v2811
        %3008 = vst [vmem:[%s292 + $0xf8] sm:$0xf] %v2812
        %3009 = vst [vmem:[%s292 + $0xfc] sm:$0xf] %v2813
        %3010 = vst [vmem:[%s292 + $0x100] sm:$0xf] %v2814
        %3011 = vst [vmem:[%s292 + $0x104] sm:$0xf] %v2815
        %3012 = vst [vmem:[%s292 + $0x108] sm:$0xf] %v2816
        %3013 = vst [vmem:[%s292 + $0x10c] sm:$0xf] %v2817
        %3014 = vst [vmem:[%s292 + $0x110] sm:$0xf] %v2818
        %3015 = vst [vmem:[%s292 + $0x114] sm:$0xf] %v2819
        %3016 = vst [vmem:[%s292 + $0x118] sm:$0xf] %v2820
        %3017 = vst [vmem:[%s292 + $0x11c] sm:$0xf] %v2821
        %3018 = vst [vmem:[%s292 + $0x120] sm:$0xf] %v2822
        %3019 = vst [vmem:[%s292 + $0x124] sm:$0xf] %v2823
        %3020 = vst [vmem:[%s292 + $0x128] sm:$0xf] %v2824
        %3021 = vst [vmem:[%s292 + $0x12c] sm:$0xf] %v2825
        %3022 = vst [vmem:[%s292 + $0x130] sm:$0xf] %v2826
        %3023 = vst [vmem:[%s292 + $0x134] sm:$0xf] %v2827
        %3024 = vst [vmem:[%s292 + $0x138] sm:$0xf] %v2828
        %3025 = vst [vmem:[%s292 + $0x13c] sm:$0xf] %v2829
        %3026 = vst [vmem:[%s292 + $0x140] sm:$0xf] %v2830
        %3027 = vst [vmem:[%s292 + $0x144] sm:$0xf] %v2831
        %3028 = vst [vmem:[%s292 + $0x148] sm:$0xf] %v2832
        %3029 = vst [vmem:[%s292 + $0x14c] sm:$0xf] %v2833
        %3030 = vst [vmem:[%s292 + $0x150] sm:$0xf] %v2834
        %3031 = vst [vmem:[%s292 + $0x154] sm:$0xf] %v2835
        %3032 = vst [vmem:[%s292 + $0x158] sm:$0xf] %v2836
        %3033 = vst [vmem:[%s292 + $0x15c] sm:$0xf] %v2837
        %3034 = vst [vmem:[%s292 + $0x160] sm:$0xf] %v2838
        %3035 = vst [vmem:[%s292 + $0x164] sm:$0xf] %v2839
        %3036 = vst [vmem:[%s292 + $0x168] sm:$0xf] %v2840
        %3037 = vst [vmem:[%s292 + $0x16c] sm:$0xf] %v2841
        %3038 = vst [vmem:[%s292 + $0x170] sm:$0xf] %v2842
        %3039 = vst [vmem:[%s292 + $0x174] sm:$0xf] %v2843
        %3040 = vst [vmem:[%s292 + $0x178] sm:$0xf] %v2844
        %3041 = vst [vmem:[%s292 + $0x17c] sm:$0xf] %v2845
        %3042 = vst [vmem:[%s292 + $0x180] sm:$0xf] %v2846
        %3043 = vst [vmem:[%s292 + $0x184] sm:$0xf] %v2847
        %3044 = vst [vmem:[%s292 + $0x188] sm:$0xf] %v2848
        %3045 = vst [vmem:[%s292 + $0x18c] sm:$0xf] %v2849
        %3046 = vst [vmem:[%s292 + $0x190] sm:$0xf] %v2850
        %s3047 = sand.u32 %s169, 1
        %s3048 = scalar_lea.sflag [#allocation3], %s3047
        %s3049 = sand.u32 %s169, 1
        %s3050 = smul.addr %s3049, 416
        %s3051 = scalar_lea.vmem [#allocation2], %s3050
        %s3052 = sand.u32 %s195, 1
        %s3053 = scalar_lea.sflag [#allocation5], %s3052
        %s3054 = sand.u32 %s195, 1
        %s3055 = smul.addr %s3054, 8
        %s3056 = scalar_lea.vmem [#allocation4], %s3055
        // Predicated region
        $region45: #{tpu_custom_call.1} parent=43 // pred_check
          %p3057 = pneg %p179
        $region46: #{tpu_custom_call.1} parent=43 // pred_check_branch
          %3059 = sbr.rel (%p3057) target = $region48
        $region47: #{tpu_custom_call.1} parent=43 // pred_region
          %s3060 = smul.u32 104, %s25
          %s3062 = ssub.s32 6656, 6656
          %3063 = vsyncadd %s3048, %s3062
          %s3064 = smul.addr %s3060, 64
          %s3065 = scalar_lea.hbm %s6, %s3064
          %s3066 = sshll.u32 %s3051, 4
          %s3067 = int_to_ptr.vmem [resolvable:$true] %s3066
          %3072 = dma.vmem_to_hbm [thread:$0]  %s3067, 6656, %s3065, %s3048, 64, 64, 4
        $region48: #{tpu_custom_call.1} parent=43 // pred_fallthru
          _
        // Predicated region
        $region49: #{tpu_custom_call.1} parent=43 // pred_check
          %p3073 = pneg %p205
        $region50: #{tpu_custom_call.1} parent=43 // pred_check_branch
          %3075 = sbr.rel (%p3073) target = $region52
        $region51: #{tpu_custom_call.1} parent=43 // pred_region
          %s3077 = ssub.s32 128, 128
          %3078 = vsyncadd %s3053, %s3077
          %s3079 = smul.addr %s25, 128
          %s3080 = scalar_lea.hbm %s7, %s3079
          %s3082 = sshll.u32 %s3056, 4
          %s3083 = int_to_ptr.vmem [resolvable:$true] %s3082
          %3085 = dma.vmem_to_hbm [thread:$0]  %s3083, 128, %s3080, %s3053
        $region52: #{tpu_custom_call.1} parent=43 // pred_fallthru
          _
      $region44: #{tpu_custom_call.1} parent=5 // pred_fallthru
        _
      %p3086 = scmp.le.s32.totalorder 2, %s20
      // Predicated region
      $region53: #{tpu_custom_call.1} parent=5 // pred_check
        %p3087 = pneg %p3086
      $region54: #{tpu_custom_call.1} parent=5 // pred_check_branch
        %3089 = sbr.rel (%p3087) target = $region56
      $region55: #{tpu_custom_call.1} parent=5 // pred_region
        %s3090 = ssub.s32 %s20, 2
        // Predicated region
        $region57: #{tpu_custom_call.1} parent=55 // pred_check
          %p3091 = pneg %p185
        $region58: #{tpu_custom_call.1} parent=55 // pred_check_branch
          %3093 = sbr.rel (%p3091) target = $region60
        $region59: #{tpu_custom_call.1} parent=55 // pred_region
          %s3094 = sand.u32 %s170, 1
          %s3095 = scalar_lea.sflag [#allocation3], %s3094
          %s3096 = sand.u32 %s170, 1
          %s3097 = smul.addr %s3096, 416
          %s3098 = scalar_lea.vmem [#allocation2], %s3097
          %3099 = dma.done %s3095, 6656
        $region60: #{tpu_custom_call.1} parent=55 // pred_fallthru
          _
        // Predicated region
        $region61: #{tpu_custom_call.1} parent=55 // pred_check
          %p3100 = pneg %p211
        $region62: #{tpu_custom_call.1} parent=55 // pred_check_branch
          %3102 = sbr.rel (%p3100) target = $region64
        $region63: #{tpu_custom_call.1} parent=55 // pred_region
          %s3103 = sand.u32 %s196, 1
          %s3104 = scalar_lea.sflag [#allocation5], %s3103
          %s3105 = sand.u32 %s196, 1
          %s3106 = smul.addr %s3105, 8
          %s3107 = scalar_lea.vmem [#allocation4], %s3106
          %3108 = dma.done %s3104, 128
        $region64: #{tpu_custom_call.1} parent=55 // pred_fallthru
          _
      $region56: #{tpu_custom_call.1} parent=5 // pred_fallthru
        _
    $region6: #{tpu_custom_call.1} parent=1 // loop_footer
      %s24 = sadd.s32 1, %s20
    $region7: #{tpu_custom_call.1} parent=1 // loop_footer_branch
      %19 = sbr.rel target = $region3
    $region8: #{tpu_custom_call.1} parent=1 // loop_exit
      _
    %3109 = vsyncpa [#allocation3], 1
    %s3110 = scalar_lea.sflag [#allocation3], 1
    %3111 = vsyncpa %s3110, 1
    %3112 = vsyncpa [#allocation5], 1
    %s3113 = scalar_lea.sflag [#allocation5], 1
    %3114 = vsyncpa %s3113, 1

</llo_original>
